<compile_context>
chip_gen: v7x
topology: tpu7x:2x2x1
jax: 0.10.0
libtpu: 0.0.40
codegen_flags: <defaults>
</compile_context>

<pallas_src>
import jax
import jax.numpy as jnp
from jax.experimental import pallas as pl
from jax.experimental.pallas import tpu as pltpu

EPS = 1e-5
PACKED_K = 128      # lane-aligned width for [z | one_hot(label) | pad]
OUT_PAD = 896       # 784 padded up to 7 * 128 lanes


# ----------------------------------------------------------------------------
# Kernel helpers
# ----------------------------------------------------------------------------
def _mm_q(x_bf16, w_q_ref_or_buf):
    """int8 weight -> bf16 convert, MXU matmul with f32 accumulation."""
    w = w_q_ref_or_buf[...].astype(jnp.bfloat16)
    return jnp.dot(x_bf16, w, preferred_element_type=jnp.float32)


def _bn_relu(y, s_ref, g_ref, be_ref):
    """BatchNorm1d (training mode) + ReLU on an UNSCALED int8-matmul output.

    y = x @ w_q (kernel space); the true pre-BN activation is y * s per
    column.  The per-column quant scale is folded into the BN affine so eps
    is applied at the original scale — exact original semantics, and only
    (1, N)-vector extra work.  2-pass form: one stats sweep, one apply sweep.
    """
    mean = jnp.mean(y, axis=0, keepdims=True)
    ex2 = jnp.mean(y * y, axis=0, keepdims=True)
    var = jnp.maximum(ex2 - mean * mean, 0.0)
    s = s_ref[...]
    a = g_ref[...] * s * jax.lax.rsqrt(var * (s * s) + EPS)
    c = be_ref[...] - mean * a
    return jnp.maximum(y * a + c, 0.0)


def generator_kernel(
    x_ref,                                   # (B, 128) bf16 packed [z|label|0]
    w1_ref, s1_ref, g1_ref, be1_ref,         # fused fc1_1/fc1_2 + fused BN
    w2_ref, s2_ref, g2_ref, be2_ref,         # fc2 + BN
    w3_hbm, s3_ref, g3_ref, be3_ref,         # fc3 (weight left in HBM) + BN
    w4_hbm, s4_ref, b4_ref,                  # fc4 (weight left in HBM, padded)
    out_ref,                                 # (B, 896) bf16
    w3_vmem, w4_vmem, dma_sem,               # scratch: VMEM buffers + DMA sems
):
    # Kick off the big weight DMAs immediately; they overlap fc1/fc2 compute.
    cp3 = pltpu.make_async_copy(w3_hbm, w3_vmem, dma_sem.at[0])
    cp4 = pltpu.make_async_copy(w4_hbm, w4_vmem, dma_sem.at[1])
    cp3.start()
    cp4.start()

    # h = [relu(bn(fc1_1(z))) | relu(bn(fc1_2(label)))]  (concat is implicit)
    h = _bn_relu(_mm_q(x_ref[...], w1_ref), s1_ref, g1_ref, be1_ref)     # (B,512)
    # h = relu(bn(fc2(h)))   -- bias dropped (cancelled by BN mean)
    h = _bn_relu(_mm_q(h.astype(jnp.bfloat16), w2_ref),
                 s2_ref, g2_ref, be2_ref)                                # (B,512)
    # h = relu(bn(fc3(h)))
    cp3.wait()
    h = _bn_relu(_mm_q(h.astype(jnp.bfloat16), w3_vmem),
                 s3_ref, g3_ref, be3_ref)                                # (B,1024)
    # out = tanh(fc4(h))     -- per-column dequant scale fused into epilogue
    cp4.wait()
    y = _mm_q(h.astype(jnp.bfloat16), w4_vmem) * s4_ref[...] + b4_ref[...]
    out_ref[...] = jnp.tanh(y).astype(out_ref.dtype)                     # (B,896)


# ----------------------------------------------------------------------------
# Parameter construction (matches generator.__init__ shapes; y = x @ W + b
# with W stored as (in_features, out_features)).
# ----------------------------------------------------------------------------
def make_generator_params(latent_size, key, std=0.02):
    ks = jax.random.split(key, 10)

    def lin(kw, kb, d_in, d_out):
        w = std * jax.random.normal(kw, (d_in, d_out), jnp.float32)
        b = 0.01 * jax.random.normal(kb, (1, d_out), jnp.float32)
        return w, b

    def bn(d):
        return jnp.ones((1, d), jnp.float32), jnp.zeros((1, d), jnp.float32)

    w11, b11 = lin(ks[0], ks[1], latent_size, 256)
    w12, b12 = lin(ks[2], ks[3], 10, 256)
    w2, b2 = lin(ks[4], ks[5], 512, 512)
    w3, b3 = lin(ks[6], ks[7], 512, 1024)
    w4, b4 = lin(ks[8], ks[9], 1024, 784)
    g11, be11 = bn(256)
    g12, be12 = bn(256)
    g2, be2 = bn(512)
    g3, be3 = bn(1024)
    return (w11, b11, g11, be11,
            w12, b12, g12, be12,
            w2, b2, g2, be2,
            w3, b3, g3, be3,
            w4, b4)


def _quantize_per_col(w):
    """Symmetric per-output-column int8 quantization. Returns (int8 w, f32 scale)."""
    amax = jnp.max(jnp.abs(w), axis=0, keepdims=True)            # (1, N)
    scale = jnp.where(amax > 0.0, amax / 127.0, 1.0)
    w_q = jnp.clip(jnp.round(w / scale), -127.0, 127.0).astype(jnp.int8)
    return w_q, scale.astype(jnp.float32)


def fuse_generator_params(params, latent_size):
    """Kernel-ready params: block-diag fused fc1, padded fc4, int8 weights.

    Biases feeding BatchNorm (b1_1, b1_2, b2, b3) are dropped: they are exactly
    cancelled by the batch-mean subtraction inside BN.
    """
    (w11, _b11, g11, be11,
     w12, _b12, g12, be12,
     w2, _b2, g2, be2,
     w3, _b3, g3, be3,
     w4, b4) = params

    # Block-diagonal fused first layer: rows [0, L) -> fc1_1, [L, L+10) -> fc1_2.
    w1 = jnp.zeros((PACKED_K, 512), jnp.float32)
    w1 = w1.at[:latent_size, :256].set(w11)
    w1 = w1.at[latent_size:latent_size + 10, 256:].set(w12)
    g1 = jnp.concatenate([g11, g12], axis=1)
    be1 = jnp.concatenate([be11, be12], axis=1)

    # Lane-dense fc4: pad 784 -> 896 output columns with zeros.
    w4p = jnp.zeros((1024, OUT_PAD), jnp.float32).at[:, :784].set(w4)
    b4p = jnp.zeros((1, OUT_PAD), jnp.float32).at[:, :784].set(b4)

    w1q, s1 = _quantize_per_col(w1)
    w2q, s2 = _quantize_per_col(w2)
    w3q, s3 = _quantize_per_col(w3)
    w4q, s4 = _quantize_per_col(w4p)

    return (w1q, s1, g1, be1,
            w2q, s2, g2, be2,
            w3q, s3, g3, be3,
            w4q, s4, b4p)


# ----------------------------------------------------------------------------
# Wrapper
# ----------------------------------------------------------------------------
@jax.jit
def generator_forward(z, label, fused_params):
    batch, latent = z.shape
    # Pack [z | one_hot(label) | 0] into one lane-aligned bf16 (B, 128) input.
    # (Prefer batch a multiple of 16: bf16 LHS vregs hold 16 sublanes.)
    packed = jnp.zeros((batch, PACKED_K), jnp.bfloat16)
    packed = packed.at[:, :latent].set(z.astype(jnp.bfloat16))
    packed = packed.at[:, latent:latent + label.shape[1]].set(
        label.astype(jnp.bfloat16))

    n_in = 1 + len(fused_params)                     # 16 inputs total
    vmem = pl.BlockSpec(memory_space=pltpu.MemorySpace.VMEM)
    in_specs = [vmem] * n_in
    in_specs[9] = pl.BlockSpec(memory_space=pl.ANY)   # w3 int8 stays in HBM
    in_specs[13] = pl.BlockSpec(memory_space=pl.ANY)  # w4 int8 stays in HBM

    flops = 2 * batch * (PACKED_K * 512 + 512 * 512 + 512 * 1024 + 1024 * OUT_PAD)
    weight_bytes = sum(int(p.size) * p.dtype.itemsize for p in fused_params)
    cost = pl.CostEstimate(
        flops=flops,
        transcendentals=batch * OUT_PAD,
        bytes_accessed=weight_bytes + batch * (PACKED_K + OUT_PAD) * 2,
    )

    out = pl.pallas_call(
        generator_kernel,
        out_shape=jax.ShapeDtypeStruct((batch, OUT_PAD), jnp.bfloat16),
        in_specs=in_specs,
        out_specs=pl.BlockSpec(memory_space=pltpu.MemorySpace.VMEM),
        scratch_shapes=[
            pltpu.VMEM((512, 1024), jnp.int8),       # w3 landing buffer
            pltpu.VMEM((1024, OUT_PAD), jnp.int8),   # w4 landing buffer
            pltpu.SemaphoreType.DMA((2,)),
        ],
        compiler_params=pltpu.CompilerParams(vmem_limit_bytes=32 << 20),
        cost_estimate=cost,
    )(packed, *fused_params)
    return out[:, :784]


# ----------------------------------------------------------------------------
# Pure-JAX reference: original module structure (separate fc1_1/fc1_2, concat,
# per-layer BN in training mode, biases kept) with the SAME weight-only int8
# quantization and bf16 matmul inputs, so it mirrors the quantized model the
# kernel implements.
# ----------------------------------------------------------------------------
def generator_reference(z, label, params):
    (w11, b11, g11, be11,
     w12, b12, g12, be12,
     w2, b2, g2, be2,
     w3, b3, g3, be3,
     w4, b4) = params
    bf = jnp.bfloat16

    def qlin(x, w, b):
        wq, s = _quantize_per_col(w)
        y = jnp.dot(x.astype(bf), wq.astype(bf),
                    preferred_element_type=jnp.float32)
        return y * s + b

    def bn_relu(x, g, be):
        m = jnp.mean(x, axis=0, keepdims=True)
        v = jnp.mean(jnp.square(x - m), axis=0, keepdims=True)
        return jnp.maximum((x - m) * jax.lax.rsqrt(v + EPS) * g + be, 0.0)

    x = bn_relu(qlin(z, w11, b11), g11, be11)
    y = bn_relu(qlin(label, w12, b12), g12, be12)
    h = jnp.concatenate([x, y], axis=1)
    h = bn_relu(qlin(h, w2, b2), g2, be2)
    h = bn_relu(qlin(h, w3, b3), g3, be3)
    return jnp.tanh(qlin(h, w4, b4))


if __name__ == "__main__":
    LATENT = 32
    BATCH = 16          # multiple of 16: fills bf16 sublane tiles

    key = jax.random.PRNGKey(0)
    k_z, k_lbl, k_p = jax.random.split(key, 3)

    z = jax.random.normal(k_z, (BATCH, LATENT), jnp.float32)
    lbl_idx = jax.random.randint(k_lbl, (BATCH,), 0, 10)
    label = jax.nn.one_hot(lbl_idx, 10, dtype=jnp.float32)

    params = make_generator_params(LATENT, k_p)
    fused = fuse_generator_params(params, LATENT)

    out = generator_forward(z, label, fused)
    jax.block_until_ready(out)

    ref = generator_reference(z, label, params)
    assert out.shape == (BATCH, 784), out.shape
    err = float(jnp.max(jnp.abs(out.astype(jnp.float32) - ref)))
    assert jnp.allclose(out.astype(jnp.float32), ref, atol=1e-2, rtol=1e-2), err

    print("KERNEL_OK")
</pallas_src>

<mosaic_0001>
module attributes {stable_mosaic.version = 11 : i64} {
  func.func @generator_kernel(%arg0: memref<16x128xbf16, #tpu.memory_space<vmem>>, %arg1: memref<128x512xi8, #tpu.memory_space<vmem>>, %arg2: memref<1x512xf32, #tpu.memory_space<vmem>>, %arg3: memref<1x512xf32, #tpu.memory_space<vmem>>, %arg4: memref<1x512xf32, #tpu.memory_space<vmem>>, %arg5: memref<512x512xi8, #tpu.memory_space<vmem>>, %arg6: memref<1x512xf32, #tpu.memory_space<vmem>>, %arg7: memref<1x512xf32, #tpu.memory_space<vmem>>, %arg8: memref<1x512xf32, #tpu.memory_space<vmem>>, %arg9: memref<512x1024xi8, #tpu.memory_space<any>>, %arg10: memref<1x1024xf32, #tpu.memory_space<vmem>>, %arg11: memref<1x1024xf32, #tpu.memory_space<vmem>>, %arg12: memref<1x1024xf32, #tpu.memory_space<vmem>>, %arg13: memref<1024x896xi8, #tpu.memory_space<any>>, %arg14: memref<1x896xf32, #tpu.memory_space<vmem>>, %arg15: memref<1x896xf32, #tpu.memory_space<vmem>>, %arg16: memref<16x896xbf16, #tpu.memory_space<vmem>>, %arg17: memref<512x1024xi8, #tpu.memory_space<vmem>>, %arg18: memref<1024x896xi8, #tpu.memory_space<vmem>>, %arg19: memref<2x!tpu.dma_semaphore, #tpu.memory_space<semaphore_mem>>) attributes {dimension_semantics = [], scalar_prefetch = 0 : i64, scratch_operands = 3 : i64, tpu.core_type = #tpu.core_type<tc>} {
    %c0_i32 = arith.constant 0 : i32
    %0 = tpu.memref_slice %arg19[%c0_i32] : memref<2x!tpu.dma_semaphore, #tpu.memory_space<semaphore_mem>> -> memref<1x!tpu.dma_semaphore, #tpu.memory_space<semaphore_mem>>
    %1 = tpu.memref_squeeze %0 : memref<1x!tpu.dma_semaphore, #tpu.memory_space<semaphore_mem>> -> memref<!tpu.dma_semaphore, #tpu.memory_space<semaphore_mem>>
    tpu.enqueue_dma source(%arg9 : memref<512x1024xi8, #tpu.memory_space<any>>) target(%arg17 : memref<512x1024xi8, #tpu.memory_space<vmem>>) target_semaphore(%1 : memref<!tpu.dma_semaphore, #tpu.memory_space<semaphore_mem>>)
    %c1_i32 = arith.constant 1 : i32
    %2 = tpu.memref_slice %arg19[%c1_i32] : memref<2x!tpu.dma_semaphore, #tpu.memory_space<semaphore_mem>> -> memref<1x!tpu.dma_semaphore, #tpu.memory_space<semaphore_mem>>
    %3 = tpu.memref_squeeze %2 : memref<1x!tpu.dma_semaphore, #tpu.memory_space<semaphore_mem>> -> memref<!tpu.dma_semaphore, #tpu.memory_space<semaphore_mem>>
    tpu.enqueue_dma source(%arg13 : memref<1024x896xi8, #tpu.memory_space<any>>) target(%arg18 : memref<1024x896xi8, #tpu.memory_space<vmem>>) target_semaphore(%3 : memref<!tpu.dma_semaphore, #tpu.memory_space<semaphore_mem>>)
    %c0 = arith.constant 0 : index
    %c0_0 = arith.constant 0 : index
    %4 = vector.load %arg0[%c0, %c0_0] : memref<16x128xbf16, #tpu.memory_space<vmem>>, vector<16x128xbf16>
    %c0_1 = arith.constant 0 : index
    %c0_2 = arith.constant 0 : index
    %5 = vector.load %arg1[%c0_1, %c0_2] : memref<128x512xi8, #tpu.memory_space<vmem>>, vector<128x512xi8>
    %6 = arith.sitofp %5 : vector<128x512xi8> to vector<128x512xbf16>
    %cst = arith.constant dense<0.000000e+00> : vector<16x512xf32>
    %7 = tpu.matmul %4, %6, %cst {dimension_numbers = #tpu.dot_dimension_numbers<[1], [0], [0], [1], [0, 0, 1, 1], [], []>} : vector<16x128xbf16>, vector<128x512xbf16>, vector<16x512xf32> -> vector<16x512xf32>
    %cst_3 = arith.constant dense<0.000000e+00> : vector<512xf32>
    %8 = vector.multi_reduction <add>, %7, %cst_3 [0] : vector<16x512xf32> to vector<512xf32>
    %9 = vector.shape_cast %8 : vector<512xf32> to vector<1x512xf32>
    %cst_4 = arith.constant 1.600000e+01 : f32
    %10 = vector.broadcast %cst_4 : f32 to vector<1x512xf32>
    %11 = arith.divf %9, %10 : vector<1x512xf32>
    %12 = arith.mulf %7, %7 : vector<16x512xf32>
    %cst_5 = arith.constant dense<0.000000e+00> : vector<512xf32>
    %13 = vector.multi_reduction <add>, %12, %cst_5 [0] : vector<16x512xf32> to vector<512xf32>
    %14 = vector.shape_cast %13 : vector<512xf32> to vector<1x512xf32>
    %cst_6 = arith.constant 1.600000e+01 : f32
    %15 = vector.broadcast %cst_6 : f32 to vector<1x512xf32>
    %16 = arith.divf %14, %15 : vector<1x512xf32>
    %17 = arith.mulf %11, %11 : vector<1x512xf32>
    %18 = arith.subf %16, %17 : vector<1x512xf32>
    %cst_7 = arith.constant 0.000000e+00 : f32
    %19 = vector.broadcast %cst_7 : f32 to vector<1x512xf32>
    %20 = arith.maximumf %18, %19 : vector<1x512xf32>
    %c0_8 = arith.constant 0 : index
    %c0_9 = arith.constant 0 : index
    %21 = vector.load %arg2[%c0_8, %c0_9] : memref<1x512xf32, #tpu.memory_space<vmem>>, vector<1x512xf32>
    %c0_10 = arith.constant 0 : index
    %c0_11 = arith.constant 0 : index
    %22 = vector.load %arg3[%c0_10, %c0_11] : memref<1x512xf32, #tpu.memory_space<vmem>>, vector<1x512xf32>
    %23 = arith.mulf %22, %21 : vector<1x512xf32>
    %24 = arith.mulf %21, %21 : vector<1x512xf32>
    %25 = arith.mulf %20, %24 : vector<1x512xf32>
    %cst_12 = arith.constant 9.99999974E-6 : f32
    %26 = vector.broadcast %cst_12 : f32 to vector<1x512xf32>
    %27 = arith.addf %25, %26 : vector<1x512xf32>
    %28 = math.rsqrt %27 : vector<1x512xf32>
    %29 = arith.mulf %23, %28 : vector<1x512xf32>
    %c0_13 = arith.constant 0 : index
    %c0_14 = arith.constant 0 : index
    %30 = vector.load %arg4[%c0_13, %c0_14] : memref<1x512xf32, #tpu.memory_space<vmem>>, vector<1x512xf32>
    %31 = arith.mulf %11, %29 : vector<1x512xf32>
    %32 = arith.subf %30, %31 : vector<1x512xf32>
    %33 = vector.broadcast %29 : vector<1x512xf32> to vector<16x512xf32>
    %34 = arith.mulf %7, %33 : vector<16x512xf32>
    %35 = vector.broadcast %32 : vector<1x512xf32> to vector<16x512xf32>
    %36 = arith.addf %34, %35 : vector<16x512xf32>
    %cst_15 = arith.constant 0.000000e+00 : f32
    %37 = vector.broadcast %cst_15 : f32 to vector<16x512xf32>
    %38 = arith.maximumf %36, %37 : vector<16x512xf32>
    %39 = arith.truncf %38 : vector<16x512xf32> to vector<16x512xbf16>
    %c0_16 = arith.constant 0 : index
    %c0_17 = arith.constant 0 : index
    %40 = vector.load %arg5[%c0_16, %c0_17] : memref<512x512xi8, #tpu.memory_space<vmem>>, vector<512x512xi8>
    %41 = arith.sitofp %40 : vector<512x512xi8> to vector<512x512xbf16>
    %cst_18 = arith.constant dense<0.000000e+00> : vector<16x512xf32>
    %42 = tpu.matmul %39, %41, %cst_18 {dimension_numbers = #tpu.dot_dimension_numbers<[1], [0], [0], [1], [0, 0, 1, 1], [], []>} : vector<16x512xbf16>, vector<512x512xbf16>, vector<16x512xf32> -> vector<16x512xf32>
    %cst_19 = arith.constant dense<0.000000e+00> : vector<512xf32>
    %43 = vector.multi_reduction <add>, %42, %cst_19 [0] : vector<16x512xf32> to vector<512xf32>
    %44 = vector.shape_cast %43 : vector<512xf32> to vector<1x512xf32>
    %cst_20 = arith.constant 1.600000e+01 : f32
    %45 = vector.broadcast %cst_20 : f32 to vector<1x512xf32>
    %46 = arith.divf %44, %45 : vector<1x512xf32>
    %47 = arith.mulf %42, %42 : vector<16x512xf32>
    %cst_21 = arith.constant dense<0.000000e+00> : vector<512xf32>
    %48 = vector.multi_reduction <add>, %47, %cst_21 [0] : vector<16x512xf32> to vector<512xf32>
    %49 = vector.shape_cast %48 : vector<512xf32> to vector<1x512xf32>
    %cst_22 = arith.constant 1.600000e+01 : f32
    %50 = vector.broadcast %cst_22 : f32 to vector<1x512xf32>
    %51 = arith.divf %49, %50 : vector<1x512xf32>
    %52 = arith.mulf %46, %46 : vector<1x512xf32>
    %53 = arith.subf %51, %52 : vector<1x512xf32>
    %cst_23 = arith.constant 0.000000e+00 : f32
    %54 = vector.broadcast %cst_23 : f32 to vector<1x512xf32>
    %55 = arith.maximumf %53, %54 : vector<1x512xf32>
    %c0_24 = arith.constant 0 : index
    %c0_25 = arith.constant 0 : index
    %56 = vector.load %arg6[%c0_24, %c0_25] : memref<1x512xf32, #tpu.memory_space<vmem>>, vector<1x512xf32>
    %c0_26 = arith.constant 0 : index
    %c0_27 = arith.constant 0 : index
    %57 = vector.load %arg7[%c0_26, %c0_27] : memref<1x512xf32, #tpu.memory_space<vmem>>, vector<1x512xf32>
    %58 = arith.mulf %57, %56 : vector<1x512xf32>
    %59 = arith.mulf %56, %56 : vector<1x512xf32>
    %60 = arith.mulf %55, %59 : vector<1x512xf32>
    %cst_28 = arith.constant 9.99999974E-6 : f32
    %61 = vector.broadcast %cst_28 : f32 to vector<1x512xf32>
    %62 = arith.addf %60, %61 : vector<1x512xf32>
    %63 = math.rsqrt %62 : vector<1x512xf32>
    %64 = arith.mulf %58, %63 : vector<1x512xf32>
    %c0_29 = arith.constant 0 : index
    %c0_30 = arith.constant 0 : index
    %65 = vector.load %arg8[%c0_29, %c0_30] : memref<1x512xf32, #tpu.memory_space<vmem>>, vector<1x512xf32>
    %66 = arith.mulf %46, %64 : vector<1x512xf32>
    %67 = arith.subf %65, %66 : vector<1x512xf32>
    %68 = vector.broadcast %64 : vector<1x512xf32> to vector<16x512xf32>
    %69 = arith.mulf %42, %68 : vector<16x512xf32>
    %70 = vector.broadcast %67 : vector<1x512xf32> to vector<16x512xf32>
    %71 = arith.addf %69, %70 : vector<16x512xf32>
    %cst_31 = arith.constant 0.000000e+00 : f32
    %72 = vector.broadcast %cst_31 : f32 to vector<16x512xf32>
    %73 = arith.maximumf %71, %72 : vector<16x512xf32>
    %c0_i32_32 = arith.constant 0 : i32
    %74 = tpu.memref_slice %arg19[%c0_i32_32] : memref<2x!tpu.dma_semaphore, #tpu.memory_space<semaphore_mem>> -> memref<1x!tpu.dma_semaphore, #tpu.memory_space<semaphore_mem>>
    %75 = tpu.memref_squeeze %74 : memref<1x!tpu.dma_semaphore, #tpu.memory_space<semaphore_mem>> -> memref<!tpu.dma_semaphore, #tpu.memory_space<semaphore_mem>>
    tpu.wait_dma2 semaphore(%75 : memref<!tpu.dma_semaphore, #tpu.memory_space<semaphore_mem>>) src(%arg9 : memref<512x1024xi8, #tpu.memory_space<any>>) dst(%arg17 : memref<512x1024xi8, #tpu.memory_space<vmem>>)
    %76 = arith.truncf %73 : vector<16x512xf32> to vector<16x512xbf16>
    %c0_33 = arith.constant 0 : index
    %c0_34 = arith.constant 0 : index
    %77 = vector.load %arg17[%c0_33, %c0_34] : memref<512x1024xi8, #tpu.memory_space<vmem>>, vector<512x1024xi8>
    %78 = arith.sitofp %77 : vector<512x1024xi8> to vector<512x1024xbf16>
    %cst_35 = arith.constant dense<0.000000e+00> : vector<16x1024xf32>
    %79 = tpu.matmul %76, %78, %cst_35 {dimension_numbers = #tpu.dot_dimension_numbers<[1], [0], [0], [1], [0, 0, 1, 1], [], []>} : vector<16x512xbf16>, vector<512x1024xbf16>, vector<16x1024xf32> -> vector<16x1024xf32>
    %cst_36 = arith.constant dense<0.000000e+00> : vector<1024xf32>
    %80 = vector.multi_reduction <add>, %79, %cst_36 [0] : vector<16x1024xf32> to vector<1024xf32>
    %81 = vector.shape_cast %80 : vector<1024xf32> to vector<1x1024xf32>
    %cst_37 = arith.constant 1.600000e+01 : f32
    %82 = vector.broadcast %cst_37 : f32 to vector<1x1024xf32>
    %83 = arith.divf %81, %82 : vector<1x1024xf32>
    %84 = arith.mulf %79, %79 : vector<16x1024xf32>
    %cst_38 = arith.constant dense<0.000000e+00> : vector<1024xf32>
    %85 = vector.multi_reduction <add>, %84, %cst_38 [0] : vector<16x1024xf32> to vector<1024xf32>
    %86 = vector.shape_cast %85 : vector<1024xf32> to vector<1x1024xf32>
    %cst_39 = arith.constant 1.600000e+01 : f32
    %87 = vector.broadcast %cst_39 : f32 to vector<1x1024xf32>
    %88 = arith.divf %86, %87 : vector<1x1024xf32>
    %89 = arith.mulf %83, %83 : vector<1x1024xf32>
    %90 = arith.subf %88, %89 : vector<1x1024xf32>
    %cst_40 = arith.constant 0.000000e+00 : f32
    %91 = vector.broadcast %cst_40 : f32 to vector<1x1024xf32>
    %92 = arith.maximumf %90, %91 : vector<1x1024xf32>
    %c0_41 = arith.constant 0 : index
    %c0_42 = arith.constant 0 : index
    %93 = vector.load %arg10[%c0_41, %c0_42] : memref<1x1024xf32, #tpu.memory_space<vmem>>, vector<1x1024xf32>
    %c0_43 = arith.constant 0 : index
    %c0_44 = arith.constant 0 : index
    %94 = vector.load %arg11[%c0_43, %c0_44] : memref<1x1024xf32, #tpu.memory_space<vmem>>, vector<1x1024xf32>
    %95 = arith.mulf %94, %93 : vector<1x1024xf32>
    %96 = arith.mulf %93, %93 : vector<1x1024xf32>
    %97 = arith.mulf %92, %96 : vector<1x1024xf32>
    %cst_45 = arith.constant 9.99999974E-6 : f32
    %98 = vector.broadcast %cst_45 : f32 to vector<1x1024xf32>
    %99 = arith.addf %97, %98 : vector<1x1024xf32>
    %100 = math.rsqrt %99 : vector<1x1024xf32>
    %101 = arith.mulf %95, %100 : vector<1x1024xf32>
    %c0_46 = arith.constant 0 : index
    %c0_47 = arith.constant 0 : index
    %102 = vector.load %arg12[%c0_46, %c0_47] : memref<1x1024xf32, #tpu.memory_space<vmem>>, vector<1x1024xf32>
    %103 = arith.mulf %83, %101 : vector<1x1024xf32>
    %104 = arith.subf %102, %103 : vector<1x1024xf32>
    %105 = vector.broadcast %101 : vector<1x1024xf32> to vector<16x1024xf32>
    %106 = arith.mulf %79, %105 : vector<16x1024xf32>
    %107 = vector.broadcast %104 : vector<1x1024xf32> to vector<16x1024xf32>
    %108 = arith.addf %106, %107 : vector<16x1024xf32>
    %cst_48 = arith.constant 0.000000e+00 : f32
    %109 = vector.broadcast %cst_48 : f32 to vector<16x1024xf32>
    %110 = arith.maximumf %108, %109 : vector<16x1024xf32>
    %c1_i32_49 = arith.constant 1 : i32
    %111 = tpu.memref_slice %arg19[%c1_i32_49] : memref<2x!tpu.dma_semaphore, #tpu.memory_space<semaphore_mem>> -> memref<1x!tpu.dma_semaphore, #tpu.memory_space<semaphore_mem>>
    %112 = tpu.memref_squeeze %111 : memref<1x!tpu.dma_semaphore, #tpu.memory_space<semaphore_mem>> -> memref<!tpu.dma_semaphore, #tpu.memory_space<semaphore_mem>>
    tpu.wait_dma2 semaphore(%112 : memref<!tpu.dma_semaphore, #tpu.memory_space<semaphore_mem>>) src(%arg13 : memref<1024x896xi8, #tpu.memory_space<any>>) dst(%arg18 : memref<1024x896xi8, #tpu.memory_space<vmem>>)
    %113 = arith.truncf %110 : vector<16x1024xf32> to vector<16x1024xbf16>
    %c0_50 = arith.constant 0 : index
    %c0_51 = arith.constant 0 : index
    %114 = vector.load %arg18[%c0_50, %c0_51] : memref<1024x896xi8, #tpu.memory_space<vmem>>, vector<1024x896xi8>
    %115 = arith.sitofp %114 : vector<1024x896xi8> to vector<1024x896xbf16>
    %cst_52 = arith.constant dense<0.000000e+00> : vector<16x896xf32>
    %116 = tpu.matmul %113, %115, %cst_52 {dimension_numbers = #tpu.dot_dimension_numbers<[1], [0], [0], [1], [0, 0, 1, 1], [], []>} : vector<16x1024xbf16>, vector<1024x896xbf16>, vector<16x896xf32> -> vector<16x896xf32>
    %c0_53 = arith.constant 0 : index
    %c0_54 = arith.constant 0 : index
    %117 = vector.load %arg14[%c0_53, %c0_54] : memref<1x896xf32, #tpu.memory_space<vmem>>, vector<1x896xf32>
    %118 = vector.broadcast %117 : vector<1x896xf32> to vector<16x896xf32>
    %119 = arith.mulf %116, %118 : vector<16x896xf32>
    %c0_55 = arith.constant 0 : index
    %c0_56 = arith.constant 0 : index
    %120 = vector.load %arg15[%c0_55, %c0_56] : memref<1x896xf32, #tpu.memory_space<vmem>>, vector<1x896xf32>
    %121 = vector.broadcast %120 : vector<1x896xf32> to vector<16x896xf32>
    %122 = arith.addf %119, %121 : vector<16x896xf32>
    %123 = math.tanh %122 : vector<16x896xf32>
    %124 = arith.truncf %123 : vector<16x896xf32> to vector<16x896xbf16>
    %c0_57 = arith.constant 0 : index
    %c0_58 = arith.constant 0 : index
    %125 = vector.load %arg16[%c0_57, %c0_58] : memref<16x896xbf16, #tpu.memory_space<vmem>>, vector<16x896xbf16>
    tpu.vector_store %arg16[%c0_57, %c0_58], %124 {strides = array<i32>} : memref<16x896xbf16, #tpu.memory_space<vmem>>, vector<16x896xbf16>,
    return
  }
}

</mosaic_0001>

<llo_original>
// kernel: generator_forward.1
$region0: #{generator_forward.1}
  #allocation0 [shape = 'u32[]', space=smem, size = 0x4, offset = 0x4, fixed_abs, tag = 'smem constant byte address 0x4 - core index']
  #allocation1 [shape = 'u32[144,128]{1,0:T(1,128)}', space=vmem, size = 0x12000, scoped, tag = 'internal scratch']
  #allocation2 [shape = 's8[512,1024]{1,0:T(32,128)(4,1)}', space=vmem, size = 0x80000, scoped, tag = 'scratch operand']
  #allocation3 [shape = 's8[1024,896]{1,0:T(32,128)(4,1)}', space=vmem, size = 0xe0000, scoped, tag = 'scratch operand']
  #allocation4 [shape = 's32[2]{0}', space=sflag, size = 0x8, scoped, tag = 'scratch operand']
  #allocation11 [shape = 's32[]', space=sflag, size = 0x4, offset = 0, fixed_abs, tag = 'sflag constant byte address 0x0 - dummy sync flag']
  #allocation12 [shape = 's32[]', space=sflag, size = 0x4, offset = 0, fixed_abs, tag = 'sflag constant byte address 0x0 - dummy sync flag']
  #allocation13 [shape = 'u32[]', space=smem, size = 0x4, offset = 0x44, fixed_abs, tag = 'smem constant byte address 0x44 - assertion arg 0']
  #allocation14 [shape = 'u32[]', space=smem, size = 0x4, offset = 0x48, fixed_abs, tag = 'smem constant byte address 0x48 - assertion arg 1']
  #allocation15 [shape = 's32[]', space=sflag, size = 0x4, offset = 0, fixed_abs, tag = 'sflag constant byte address 0x0 - dummy sync flag']
  #allocation16 [shape = 's32[]', space=sflag, size = 0x4, offset = 0, fixed_abs, tag = 'sflag constant byte address 0x0 - dummy sync flag']
  %s0 = inlined_call_operand.vmem [shape: bf16[16,128], index: 0, kind: input, shape index: {}]
  %s1 = inlined_call_operand.hbm [shape: s8[128,512], index: 1, kind: input, shape index: {}]
  %s2 = inlined_call_operand.vmem [shape: f32[1,512], index: 2, kind: input, shape index: {}]
  %s3 = inlined_call_operand.vmem [shape: f32[1,512], index: 3, kind: input, shape index: {}]
  %s4 = inlined_call_operand.vmem [shape: f32[1,512], index: 4, kind: input, shape index: {}]
  %s5 = inlined_call_operand.hbm [shape: s8[512,512], index: 5, kind: input, shape index: {}]
  %s6 = inlined_call_operand.vmem [shape: f32[1,512], index: 6, kind: input, shape index: {}]
  %s7 = inlined_call_operand.vmem [shape: f32[1,512], index: 7, kind: input, shape index: {}]
  %s8 = inlined_call_operand.vmem [shape: f32[1,512], index: 8, kind: input, shape index: {}]
  %s9 = inlined_call_operand.hbm [shape: s8[512,1024], index: 9, kind: input, shape index: {}]
  %s10 = inlined_call_operand.vmem [shape: f32[1,1024], index: 10, kind: input, shape index: {}]
  %s11 = inlined_call_operand.vmem [shape: f32[1,1024], index: 11, kind: input, shape index: {}]
  %s12 = inlined_call_operand.vmem [shape: f32[1,1024], index: 12, kind: input, shape index: {}]
  %s13 = inlined_call_operand.hbm [shape: s8[1024,896], index: 13, kind: input, shape index: {}]
  %s14 = inlined_call_operand.vmem [shape: f32[1,896], index: 14, kind: input, shape index: {}]
  %s15 = inlined_call_operand.vmem [shape: f32[1,896], index: 15, kind: input, shape index: {}]
  %s16 = inlined_call_operand.hbm [shape: bf16[16,896], index: 16, kind: output, shape index: {}]
  %s17 = sld [smem:[#allocation0]]
  $region82: #{generator_forward.1} parent=0
    _
  %s19 = ssub.s32 1, %s17
  %s20 = scalar_select 0, %s19, %s17
  $region1: #{generator_forward.1} parent=0
    #allocation5 [shape = 'u8[65536]{0}', space=vmem, size = 0x10000, scoped, tag = 'input window, operand 1, single buffered']
    #allocation6 [shape = 's32[1]{0}', space=sflag, size = 0x4, scoped, tag = 'scoped memory for generator_forward.1']
    #allocation7 [shape = 's32[1]{0}', space=sflag, size = 0x4, scoped, tag = 'scoped memory for generator_forward.1']
    #allocation8 [shape = 'u8[262144]{0}', space=vmem, size = 0x40000, scoped, tag = 'input window, operand 5, single buffered']
    #allocation9 [shape = 's32[1]{0}', space=sflag, size = 0x4, scoped, tag = 'scoped memory for generator_forward.1']
    #allocation10 [shape = 'u8[28672]{0}', space=vmem, size = 0x7000, scoped, tag = 'output window, operand 0, single buffered']
    %21 = vsyncpa [#allocation6], 0
    %22 = vsyncpa [#allocation9], 0
    %23 = vsyncpa [#allocation7], 0
    // Predicated region
    $region2: #{generator_forward.1} parent=1 // pred_check
      _
    $region3: #{generator_forward.1} parent=1 // pred_check_branch
      %25 = sbr.rel (0) target = $region5
    $region4: #{generator_forward.1} parent=1 // pred_region
      _
    $region5: #{generator_forward.1} parent=1 // pred_fallthru
      _
    // Predicated region
    $region6: #{generator_forward.1} parent=1 // pred_check
      _
    $region7: #{generator_forward.1} parent=1 // pred_check_branch
      %27 = sbr.rel (0) target = $region9
    $region8: #{generator_forward.1} parent=1 // pred_region
      %s29 = ssub.s32 2048, 2048
      %30 = vsyncadd [#allocation6], %s29
      %s31 = sshll.u32 [#allocation5], 4
      %s32 = int_to_ptr.vmem [resolvable:$true] %s31
      %37 = dma.hbm_to_vmem [thread:$0]  %s1, 2048, %s32, [#allocation6], 512, 512, 32
    $region9: #{generator_forward.1} parent=1 // pred_fallthru
      _
    // Predicated region
    $region10: #{generator_forward.1} parent=1 // pred_check
      _
    $region11: #{generator_forward.1} parent=1 // pred_check_branch
      %39 = sbr.rel (0) target = $region13
    $region12: #{generator_forward.1} parent=1 // pred_region
      _
    $region13: #{generator_forward.1} parent=1 // pred_fallthru
      _
    // Predicated region
    $region14: #{generator_forward.1} parent=1 // pred_check
      _
    $region15: #{generator_forward.1} parent=1 // pred_check_branch
      %41 = sbr.rel (0) target = $region17
    $region16: #{generator_forward.1} parent=1 // pred_region
      _
    $region17: #{generator_forward.1} parent=1 // pred_fallthru
      _
    // Predicated region
    $region18: #{generator_forward.1} parent=1 // pred_check
      _
    $region19: #{generator_forward.1} parent=1 // pred_check_branch
      %43 = sbr.rel (0) target = $region21
    $region20: #{generator_forward.1} parent=1 // pred_region
      _
    $region21: #{generator_forward.1} parent=1 // pred_fallthru
      _
    // Predicated region
    $region22: #{generator_forward.1} parent=1 // pred_check
      _
    $region23: #{generator_forward.1} parent=1 // pred_check_branch
      %45 = sbr.rel (0) target = $region25
    $region24: #{generator_forward.1} parent=1 // pred_region
      %s47 = ssub.s32 8192, 8192
      %48 = vsyncadd [#allocation9], %s47
      %s49 = sshll.u32 [#allocation8], 4
      %s50 = int_to_ptr.vmem [resolvable:$true] %s49
      %55 = dma.hbm_to_vmem [thread:$0]  %s5, 8192, %s50, [#allocation9], 512, 512, 32
    $region25: #{generator_forward.1} parent=1 // pred_fallthru
      _
    // Predicated region
    $region26: #{generator_forward.1} parent=1 // pred_check
      _
    $region27: #{generator_forward.1} parent=1 // pred_check_branch
      %57 = sbr.rel (0) target = $region29
    $region28: #{generator_forward.1} parent=1 // pred_region
      _
    $region29: #{generator_forward.1} parent=1 // pred_fallthru
      _
    // Predicated region
    $region30: #{generator_forward.1} parent=1 // pred_check
      _
    $region31: #{generator_forward.1} parent=1 // pred_check_branch
      %59 = sbr.rel (0) target = $region33
    $region32: #{generator_forward.1} parent=1 // pred_region
      _
    $region33: #{generator_forward.1} parent=1 // pred_fallthru
      _
    // Predicated region
    $region34: #{generator_forward.1} parent=1 // pred_check
      _
    $region35: #{generator_forward.1} parent=1 // pred_check_branch
      %61 = sbr.rel (0) target = $region37
    $region36: #{generator_forward.1} parent=1 // pred_region
      _
    $region37: #{generator_forward.1} parent=1 // pred_fallthru
      _
    // Predicated region
    $region38: #{generator_forward.1} parent=1 // pred_check
      _
    $region39: #{generator_forward.1} parent=1 // pred_check_branch
      %63 = sbr.rel (0) target = $region41
    $region40: #{generator_forward.1} parent=1 // pred_region
      _
    $region41: #{generator_forward.1} parent=1 // pred_fallthru
      _
    // Predicated region
    $region42: #{generator_forward.1} parent=1 // pred_check
      _
    $region43: #{generator_forward.1} parent=1 // pred_check_branch
      %65 = sbr.rel (0) target = $region45
    $region44: #{generator_forward.1} parent=1 // pred_region
      _
    $region45: #{generator_forward.1} parent=1 // pred_fallthru
      _
    // Predicated region
    $region46: #{generator_forward.1} parent=1 // pred_check
      _
    $region47: #{generator_forward.1} parent=1 // pred_check_branch
      %67 = sbr.rel (0) target = $region49
    $region48: #{generator_forward.1} parent=1 // pred_region
      _
    $region49: #{generator_forward.1} parent=1 // pred_fallthru
      _
    // Predicated region
    $region50: #{generator_forward.1} parent=1 // pred_check
      _
    $region51: #{generator_forward.1} parent=1 // pred_check_branch
      %69 = sbr.rel (0) target = $region53
    $region52: #{generator_forward.1} parent=1 // pred_region
      _
    $region53: #{generator_forward.1} parent=1 // pred_fallthru
      _
    // Predicated region
    $region54: #{generator_forward.1} parent=1 // pred_check
      _
    $region55: #{generator_forward.1} parent=1 // pred_check_branch
      %71 = sbr.rel (0) target = $region57
    $region56: #{generator_forward.1} parent=1 // pred_region
      _
    $region57: #{generator_forward.1} parent=1 // pred_fallthru
      _
    // Predicated region
    $region58: #{generator_forward.1} parent=1 // pred_check
      _
    $region59: #{generator_forward.1} parent=1 // pred_check_branch
      %73 = sbr.rel (0) target = $region61
    $region60: #{generator_forward.1} parent=1 // pred_region
      %74 = dma.done [#allocation6], 2048
    $region61: #{generator_forward.1} parent=1 // pred_fallthru
      _
    // Predicated region
    $region62: #{generator_forward.1} parent=1 // pred_check
      _
    $region63: #{generator_forward.1} parent=1 // pred_check_branch
      %76 = sbr.rel (0) target = $region65
    $region64: #{generator_forward.1} parent=1 // pred_region
      %77 = dma.done [#allocation9], 8192
    $region65: #{generator_forward.1} parent=1 // pred_fallthru
      _
    // Predicated region
    $region66: #{generator_forward.1} parent=1 // pred_check
      _
    $region67: #{generator_forward.1} parent=1 // pred_check_branch
      %80 = sbr.rel target = $region69
    $region68: #{generator_forward.1} parent=1 // pred_region
      %81 = sst [smem:[#allocation13]] [#allocation12]
      %82 = sst [smem:[#allocation14]] [#allocation11]
    $region69: #{generator_forward.1} parent=1 // pred_fallthru
      _
    %84 = shalt.err (0)
    %s86 = sshll.u32 [#allocation2], 4
    %s87 = int_to_ptr.vmem [resolvable:$true] %s86
    %89 = dma.hbm_to_vmem [thread:$0]  %s9, 16384, %s87, [#allocation4]
    %s90 = scalar_lea.sflag [#allocation4], 1
    // Predicated region
    $region70: #{generator_forward.1} parent=1 // pred_check
      _
    $region71: #{generator_forward.1} parent=1 // pred_check_branch
      %92 = sbr.rel target = $region73
    $region72: #{generator_forward.1} parent=1 // pred_region
      %93 = sst [smem:[#allocation13]] [#allocation16]
      %94 = sst [smem:[#allocation14]] [#allocation15]
    $region73: #{generator_forward.1} parent=1 // pred_fallthru
      _
    %96 = shalt.err (0)
    %s98 = sshll.u32 [#allocation3], 4
    %s99 = int_to_ptr.vmem [resolvable:$true] %s98
    %101 = dma.hbm_to_vmem [thread:$0]  %s13, 28672, %s99, %s90
    %v102 = vld [vmem:[%s0] sm:$0xf]
    %v103 = vld [vmem:[%s0 + $0x4] sm:$0xf]
    %v104 = vld [vmem:[#allocation5] sm:$0xff]
    %v105 = vld [vmem:[#allocation5 + $0x8] sm:$0xff]
    %v106 = vld [vmem:[#allocation5 + $0x10] sm:$0xff]
    %v107 = vld [vmem:[#allocation5 + $0x18] sm:$0xff]
    %v108 = vld [vmem:[#allocation5 + $0x20] sm:$0xff]
    %v109 = vld [vmem:[#allocation5 + $0x28] sm:$0xff]
    %v110 = vld [vmem:[#allocation5 + $0x30] sm:$0xff]
    %v111 = vld [vmem:[#allocation5 + $0x38] sm:$0xff]
    %v112 = vld [vmem:[#allocation5 + $0x40] sm:$0xff]
    %v113 = vld [vmem:[#allocation5 + $0x48] sm:$0xff]
    %v114 = vld [vmem:[#allocation5 + $0x50] sm:$0xff]
    %v115 = vld [vmem:[#allocation5 + $0x58] sm:$0xff]
    %v116 = vld [vmem:[#allocation5 + $0x60] sm:$0xff]
    %v117 = vld [vmem:[#allocation5 + $0x68] sm:$0xff]
    %v118 = vld [vmem:[#allocation5 + $0x70] sm:$0xff]
    %v119 = vld [vmem:[#allocation5 + $0x78] sm:$0xff]
    %v120 = vunpack.c.l.s8.bf16 %v104
    %v121 = vunpack.c.l.s8.bf16 %v105
    %v122 = vunpack.c.l.s8.bf16 %v106
    %v123 = vunpack.c.l.s8.bf16 %v107
    %v124 = vunpack.c.h.s8.bf16 %v104
    %v125 = vunpack.c.h.s8.bf16 %v105
    %v126 = vunpack.c.h.s8.bf16 %v106
    %v127 = vunpack.c.h.s8.bf16 %v107
    %v128 = vunpack.c.l.s8.bf16 %v108
    %v129 = vunpack.c.l.s8.bf16 %v109
    %v130 = vunpack.c.l.s8.bf16 %v110
    %v131 = vunpack.c.l.s8.bf16 %v111
    %v132 = vunpack.c.h.s8.bf16 %v108
    %v133 = vunpack.c.h.s8.bf16 %v109
    %v134 = vunpack.c.h.s8.bf16 %v110
    %v135 = vunpack.c.h.s8.bf16 %v111
    %v136 = vunpack.c.l.s8.bf16 %v112
    %v137 = vunpack.c.l.s8.bf16 %v113
    %v138 = vunpack.c.l.s8.bf16 %v114
    %v139 = vunpack.c.l.s8.bf16 %v115
    %v140 = vunpack.c.h.s8.bf16 %v112
    %v141 = vunpack.c.h.s8.bf16 %v113
    %v142 = vunpack.c.h.s8.bf16 %v114
    %v143 = vunpack.c.h.s8.bf16 %v115
    %v144 = vunpack.c.l.s8.bf16 %v116
    %v145 = vunpack.c.l.s8.bf16 %v117
    %v146 = vunpack.c.l.s8.bf16 %v118
    %v147 = vunpack.c.l.s8.bf16 %v119
    %v148 = vunpack.c.h.s8.bf16 %v116
    %v149 = vunpack.c.h.s8.bf16 %v117
    %v150 = vunpack.c.h.s8.bf16 %v118
    %v151 = vunpack.c.h.s8.bf16 %v119
    %v154 = vunpack.c.l.b16 %v102
    %v155 = vunpack.c.l.b16 %v103
    %v156 = vpack.c.b16 %v155, %v154
    %158 = vmatprep.subr.bf16.mxu0 %v121
    %159 = vmatpush1.bf16.msra.mxu0 %v120
    %160 = vmatprep.subr.bf16.mxu0 %v125
    %161 = vmatpush1.bf16.msra.mxu0 %v124
    %162 = vmatprep.subr.bf16.mxu0 %v129
    %163 = vmatpush1.bf16.msra.mxu0 %v128
    %164 = vmatprep.subr.bf16.mxu0 %v133
    %165 = vmatpush1.bf16.msra.mxu0 %v132
    %166 = vmatprep.subr.bf16.mxu0 %v137
    %167 = vmatpush1.bf16.msra.mxu0 %v136
    %168 = vmatprep.subr.bf16.mxu0 %v141
    %169 = vmatpush1.bf16.msra.mxu0 %v140
    %170 = vmatprep.subr.bf16.mxu0 %v145
    %171 = vmatpush1.bf16.msra.mxu0 %v144
    %172 = vmatprep.subr.bf16.mxu0 %v149
    %173 = vmatpush1.bf16.msra.mxu0 %v148
    %174 = vmatprep.subr.bf16.mxu0 0
    %175 = vmatpush1.bf16.msra.mxu0 0
    %176 = vmatprep.subr.bf16.mxu0 0
    %177 = vmatpush1.bf16.msra.mxu0 0
    %178 = vmatprep.subr.bf16.mxu0 0
    %179 = vmatpush1.bf16.msra.mxu0 0
    %180 = vmatprep.subr.bf16.mxu0 0
    %181 = vmatpush1.bf16.msra.mxu0 0
    %182 = vmatprep.subr.bf16.mxu0 0
    %183 = vmatpush1.bf16.msra.mxu0 0
    %184 = vmatprep.subr.bf16.mxu0 0
    %185 = vmatpush1.bf16.msra.mxu0 0
    %186 = vmatprep.subr.bf16.mxu0 0
    %187 = vmatpush1.bf16.msra.mxu0 0
    %188 = vmatprep.subr.bf16.mxu0 0
    %189 = vmatpush1.bf16.msra.mxu0 0
    %190 = vmatprep.mubr.bf16.mxu0 0
    %191 = vmatmul.mubr.bf16.gmra.mrb[0].mxu0 %v156
    %v192 = vpop.f32.mrb[0].mxu0
    %v193 = vadd.f32 0.0, %v192
    %v194 = vpop.f32.mrb[0].mxu0
    %v195 = vadd.f32 0.0, %v194
    %v196 = vpop.f32.mrb[0].mxu0
    %v197 = vadd.f32 0.0, %v196
    %v198 = vpop.f32.mrb[0].mxu0
    %v199 = vadd.f32 0.0, %v198
    %200 = vdwg.mxu0
    %201 = vmatprep.subr.bf16.mxu0 %v123
    %202 = vmatpush1.bf16.msra.mxu0 %v122
    %203 = vmatprep.subr.bf16.mxu0 %v127
    %204 = vmatpush1.bf16.msra.mxu0 %v126
    %205 = vmatprep.subr.bf16.mxu0 %v131
    %206 = vmatpush1.bf16.msra.mxu0 %v130
    %207 = vmatprep.subr.bf16.mxu0 %v135
    %208 = vmatpush1.bf16.msra.mxu0 %v134
    %209 = vmatprep.subr.bf16.mxu0 %v139
    %210 = vmatpush1.bf16.msra.mxu0 %v138
    %211 = vmatprep.subr.bf16.mxu0 %v143
    %212 = vmatpush1.bf16.msra.mxu0 %v142
    %213 = vmatprep.subr.bf16.mxu0 %v147
    %214 = vmatpush1.bf16.msra.mxu0 %v146
    %215 = vmatprep.subr.bf16.mxu0 %v151
    %216 = vmatpush1.bf16.msra.mxu0 %v150
    %217 = vmatprep.subr.bf16.mxu0 0
    %218 = vmatpush1.bf16.msra.mxu0 0
    %219 = vmatprep.subr.bf16.mxu0 0
    %220 = vmatpush1.bf16.msra.mxu0 0
    %221 = vmatprep.subr.bf16.mxu0 0
    %222 = vmatpush1.bf16.msra.mxu0 0
    %223 = vmatprep.subr.bf16.mxu0 0
    %224 = vmatpush1.bf16.msra.mxu0 0
    %225 = vmatprep.subr.bf16.mxu0 0
    %226 = vmatpush1.bf16.msra.mxu0 0
    %227 = vmatprep.subr.bf16.mxu0 0
    %228 = vmatpush1.bf16.msra.mxu0 0
    %229 = vmatprep.subr.bf16.mxu0 0
    %230 = vmatpush1.bf16.msra.mxu0 0
    %231 = vmatprep.subr.bf16.mxu0 0
    %232 = vmatpush1.bf16.msra.mxu0 0
    %233 = vmatprep.mubr.bf16.mxu0 0
    %234 = vmatmul.mubr.bf16.gmra.mrb[0].mxu0 %v156
    %v235 = vpop.f32.mrb[0].mxu0
    %v236 = vadd.f32 0.0, %v235
    %v237 = vpop.f32.mrb[0].mxu0
    %v238 = vadd.f32 0.0, %v237
    %v239 = vpop.f32.mrb[0].mxu0
    %v240 = vadd.f32 0.0, %v239
    %v241 = vpop.f32.mrb[0].mxu0
    %v242 = vadd.f32 0.0, %v241
    %243 = vdwg.mxu0
    %v244 = vadd.f32 %v193, %v197
    %v245 = vrot.slane %v244, 4
    %v246 = vadd.f32 %v244, %v245
    %v247 = vrot.slane %v246, 2
    %v248 = vadd.f32 %v246, %v247
    %v249 = vrot.slane %v248, 1
    %v250 = vadd.f32 %v248, %v249
    %v251 = vadd.f32 %v195, %v199
    %v252 = vrot.slane %v251, 4
    %v253 = vadd.f32 %v251, %v252
    %v254 = vrot.slane %v253, 2
    %v255 = vadd.f32 %v253, %v254
    %v256 = vrot.slane %v255, 1
    %v257 = vadd.f32 %v255, %v256
    %v258 = vadd.f32 %v236, %v240
    %v259 = vrot.slane %v258, 4
    %v260 = vadd.f32 %v258, %v259
    %v261 = vrot.slane %v260, 2
    %v262 = vadd.f32 %v260, %v261
    %v263 = vrot.slane %v262, 1
    %v264 = vadd.f32 %v262, %v263
    %v265 = vadd.f32 %v238, %v242
    %v266 = vrot.slane %v265, 4
    %v267 = vadd.f32 %v265, %v266
    %v268 = vrot.slane %v267, 2
    %v269 = vadd.f32 %v267, %v268
    %v270 = vrot.slane %v269, 1
    %v271 = vadd.f32 %v269, %v270
    %v272 = vrcp.pop 16.0
    %v273 = vmul.f32 %v250, %v272
    %v274 = vmul.f32 %v257, %v272
    %v275 = vmul.f32 %v264, %v272
    %v276 = vmul.f32 %v271, %v272
    %v277 = vmul.f32 %v193, %v193
    %v278 = vmul.f32 %v195, %v195
    %v279 = vmul.f32 %v236, %v236
    %v280 = vmul.f32 %v238, %v238
    %v281 = vmul.f32 %v197, %v197
    %v282 = vmul.f32 %v199, %v199
    %v283 = vmul.f32 %v240, %v240
    %v284 = vmul.f32 %v242, %v242
    %v285 = vadd.f32 %v277, %v281
    %v286 = vrot.slane %v285, 4
    %v287 = vadd.f32 %v285, %v286
    %v288 = vrot.slane %v287, 2
    %v289 = vadd.f32 %v287, %v288
    %v290 = vrot.slane %v289, 1
    %v291 = vadd.f32 %v289, %v290
    %v292 = vadd.f32 %v278, %v282
    %v293 = vrot.slane %v292, 4
    %v294 = vadd.f32 %v292, %v293
    %v295 = vrot.slane %v294, 2
    %v296 = vadd.f32 %v294, %v295
    %v297 = vrot.slane %v296, 1
    %v298 = vadd.f32 %v296, %v297
    %v299 = vadd.f32 %v279, %v283
    %v300 = vrot.slane %v299, 4
    %v301 = vadd.f32 %v299, %v300
    %v302 = vrot.slane %v301, 2
    %v303 = vadd.f32 %v301, %v302
    %v304 = vrot.slane %v303, 1
    %v305 = vadd.f32 %v303, %v304
    %v306 = vadd.f32 %v280, %v284
    %v307 = vrot.slane %v306, 4
    %v308 = vadd.f32 %v306, %v307
    %v309 = vrot.slane %v308, 2
    %v310 = vadd.f32 %v308, %v309
    %v311 = vrot.slane %v310, 1
    %v312 = vadd.f32 %v310, %v311
    %v313 = vmul.f32 %v291, %v272
    %v314 = vmul.f32 %v298, %v272
    %v315 = vmul.f32 %v305, %v272
    %v316 = vmul.f32 %v312, %v272
    %v317 = vmul.f32 %v273, %v273
    %v318 = vmul.f32 %v274, %v274
    %v319 = vmul.f32 %v275, %v275
    %v320 = vmul.f32 %v276, %v276
    %v321 = vsub.f32 %v313, %v317
    %v322 = vsub.f32 %v314, %v318
    %v323 = vsub.f32 %v315, %v319
    %v324 = vsub.f32 %v316, %v320
    %v325 = vmax.f32 %v321, 0.0
    %v326 = vmax.f32 %v322, 0.0
    %v327 = vmax.f32 %v323, 0.0
    %v328 = vmax.f32 %v324, 0.0
    %v329 = vld [vmem:[%s2] sm:$0xf]
    %v330 = vld [vmem:[%s3] sm:$0xf]
    %v331 = vmul.f32 %v330, %v329
    %v332 = vmul.f32 %v329, %v329
    %v334 = vlaneseq
    %v335 = vshrl.u32 %v334, 7
    %v336 = vsub.s32 0, %v335
    %v337 = vrot.slane %v332, %v336
    %v338 = vlaneseq
    %v339 = vshrl.u32 %v338, 7
    %v340 = vsub.s32 1, %v339
    %v341 = vrot.slane %v332, %v340
    %v342 = vlaneseq
    %v343 = vshrl.u32 %v342, 7
    %v344 = vsub.s32 2, %v343
    %v345 = vrot.slane %v332, %v344
    %v346 = vlaneseq
    %v347 = vshrl.u32 %v346, 7
    %v348 = vsub.s32 3, %v347
    %v349 = vrot.slane %v332, %v348
    %v354 = vmul.f32 %v325, %v337
    %v355 = vmul.f32 %v326, %v341
    %v356 = vmul.f32 %v327, %v345
    %v357 = vmul.f32 %v328, %v349
    %v358 = vadd.f32 %v354, 1e-05
    %v359 = vadd.f32 %v355, 1e-05
    %v360 = vadd.f32 %v356, 1e-05
    %v361 = vadd.f32 %v357, 1e-05
    %v362 = vrsqrt.pop %v358
    %v363 = vrsqrt.pop %v359
    %v364 = vrsqrt.pop %v360
    %v365 = vrsqrt.pop %v361
    %v370 = vcombine.low %v362, %v363
    %v371 = vcombine.low %v364, %v365
    %v373 = vunpack.c.l.s4 1966171168
    %v374 = vunpack.c.0.s8 %v373
    %v375 = vlaneseq
    %v376 = vshrl.u32 %v375, 7
    %v377 = vsub.s32 %v374, %v376
    %v378 = vrot.slane %v370, %v377
    %v380 = vunpack.c.l.s4 1966171168
    %v381 = vunpack.c.0.s8 %v380
    %v382 = vlaneseq
    %v383 = vshrl.u32 %v382, 7
    %v384 = vsub.s32 %v381, %v383
    %v385 = vrot.slane %v371, %v384
    %v386 = vcombine.low %v378, %v385
    %v388 = vunpack.c.l.s4 1966171168
    %v389 = vunpack.c.0.s8 %v388
    %v390 = vlaneseq
    %v391 = vshrl.u32 %v390, 7
    %v392 = vsub.s32 %v389, %v391
    %v393 = vrot.slane %v386, %v392
    %v395 = vmul.f32 %v331, %v393
    %v396 = vld [vmem:[%s4] sm:$0xf]
    %v398 = vlaneseq
    %v399 = vshrl.u32 %v398, 7
    %v400 = vsub.s32 0, %v399
    %v401 = vrot.slane %v395, %v400
    %v402 = vlaneseq
    %v403 = vshrl.u32 %v402, 7
    %v404 = vsub.s32 1, %v403
    %v405 = vrot.slane %v395, %v404
    %v406 = vlaneseq
    %v407 = vshrl.u32 %v406, 7
    %v408 = vsub.s32 2, %v407
    %v409 = vrot.slane %v395, %v408
    %v410 = vlaneseq
    %v411 = vshrl.u32 %v410, 7
    %v412 = vsub.s32 3, %v411
    %v413 = vrot.slane %v395, %v412
    %v418 = vmul.f32 %v273, %v401
    %v419 = vmul.f32 %v274, %v405
    %v420 = vmul.f32 %v275, %v409
    %v421 = vmul.f32 %v276, %v413
    %v426 = vcombine.low %v418, %v419
    %v427 = vcombine.low %v420, %v421
    %v429 = vunpack.c.l.s4 1966171168
    %v430 = vunpack.c.0.s8 %v429
    %v431 = vlaneseq
    %v432 = vshrl.u32 %v431, 7
    %v433 = vsub.s32 %v430, %v432
    %v434 = vrot.slane %v426, %v433
    %v436 = vunpack.c.l.s4 1966171168
    %v437 = vunpack.c.0.s8 %v436
    %v438 = vlaneseq
    %v439 = vshrl.u32 %v438, 7
    %v440 = vsub.s32 %v437, %v439
    %v441 = vrot.slane %v427, %v440
    %v442 = vcombine.low %v434, %v441
    %v444 = vunpack.c.l.s4 1966171168
    %v445 = vunpack.c.0.s8 %v444
    %v446 = vlaneseq
    %v447 = vshrl.u32 %v446, 7
    %v448 = vsub.s32 %v445, %v447
    %v449 = vrot.slane %v442, %v448
    %v451 = vsub.f32 %v396, %v449
    %v452 = vmul.f32 %v193, %v401
    %v453 = vmul.f32 %v195, %v405
    %v454 = vmul.f32 %v236, %v409
    %v455 = vmul.f32 %v238, %v413
    %v456 = vmul.f32 %v197, %v401
    %v457 = vmul.f32 %v199, %v405
    %v458 = vmul.f32 %v240, %v409
    %v459 = vmul.f32 %v242, %v413
    %v461 = vlaneseq
    %v462 = vshrl.u32 %v461, 7
    %v463 = vsub.s32 0, %v462
    %v464 = vrot.slane %v451, %v463
    %v465 = vlaneseq
    %v466 = vshrl.u32 %v465, 7
    %v467 = vsub.s32 1, %v466
    %v468 = vrot.slane %v451, %v467
    %v469 = vlaneseq
    %v470 = vshrl.u32 %v469, 7
    %v471 = vsub.s32 2, %v470
    %v472 = vrot.slane %v451, %v471
    %v473 = vlaneseq
    %v474 = vshrl.u32 %v473, 7
    %v475 = vsub.s32 3, %v474
    %v476 = vrot.slane %v451, %v475
    %v481 = vadd.f32 %v452, %v464
    %v482 = vadd.f32 %v453, %v468
    %v483 = vadd.f32 %v454, %v472
    %v484 = vadd.f32 %v455, %v476
    %v485 = vadd.f32 %v456, %v464
    %v486 = vadd.f32 %v457, %v468
    %v487 = vadd.f32 %v458, %v472
    %v488 = vadd.f32 %v459, %v476
    %v489 = vmax.f32 %v481, 0.0
    %v490 = vmax.f32 %v482, 0.0
    %v491 = vmax.f32 %v483, 0.0
    %v492 = vmax.f32 %v484, 0.0
    %v493 = vmax.f32 %v485, 0.0
    %v494 = vmax.f32 %v486, 0.0
    %v495 = vmax.f32 %v487, 0.0
    %v496 = vmax.f32 %v488, 0.0
    %v497 = vpack.c.bf16 %v493, %v489
    %v498 = vpack.c.bf16 %v494, %v490
    %v499 = vpack.c.bf16 %v495, %v491
    %v500 = vpack.c.bf16 %v496, %v492
    %v501 = vld [vmem:[#allocation8] sm:$0xff]
    %v502 = vld [vmem:[#allocation8 + $0x8] sm:$0xff]
    %v503 = vld [vmem:[#allocation8 + $0x10] sm:$0xff]
    %v504 = vld [vmem:[#allocation8 + $0x18] sm:$0xff]
    %v505 = vld [vmem:[#allocation8 + $0x20] sm:$0xff]
    %v506 = vld [vmem:[#allocation8 + $0x28] sm:$0xff]
    %v507 = vld [vmem:[#allocation8 + $0x30] sm:$0xff]
    %v508 = vld [vmem:[#allocation8 + $0x38] sm:$0xff]
    %v509 = vld [vmem:[#allocation8 + $0x40] sm:$0xff]
    %v510 = vld [vmem:[#allocation8 + $0x48] sm:$0xff]
    %v511 = vld [vmem:[#allocation8 + $0x50] sm:$0xff]
    %v512 = vld [vmem:[#allocation8 + $0x58] sm:$0xff]
    %v513 = vld [vmem:[#allocation8 + $0x60] sm:$0xff]
    %v514 = vld [vmem:[#allocation8 + $0x68] sm:$0xff]
    %v515 = vld [vmem:[#allocation8 + $0x70] sm:$0xff]
    %v516 = vld [vmem:[#allocation8 + $0x78] sm:$0xff]
    %v517 = vld [vmem:[#allocation8 + $0x80] sm:$0xff]
    %v518 = vld [vmem:[#allocation8 + $0x88] sm:$0xff]
    %v519 = vld [vmem:[#allocation8 + $0x90] sm:$0xff]
    %v520 = vld [vmem:[#allocation8 + $0x98] sm:$0xff]
    %v521 = vld [vmem:[#allocation8 + $0xa0] sm:$0xff]
    %v522 = vld [vmem:[#allocation8 + $0xa8] sm:$0xff]
    %v523 = vld [vmem:[#allocation8 + $0xb0] sm:$0xff]
    %v524 = vld [vmem:[#allocation8 + $0xb8] sm:$0xff]
    %v525 = vld [vmem:[#allocation8 + $0xc0] sm:$0xff]
    %v526 = vld [vmem:[#allocation8 + $0xc8] sm:$0xff]
    %v527 = vld [vmem:[#allocation8 + $0xd0] sm:$0xff]
    %v528 = vld [vmem:[#allocation8 + $0xd8] sm:$0xff]
    %v529 = vld [vmem:[#allocation8 + $0xe0] sm:$0xff]
    %v530 = vld [vmem:[#allocation8 + $0xe8] sm:$0xff]
    %v531 = vld [vmem:[#allocation8 + $0xf0] sm:$0xff]
    %v532 = vld [vmem:[#allocation8 + $0xf8] sm:$0xff]
    %v533 = vld [vmem:[#allocation8 + $0x100] sm:$0xff]
    %v534 = vld [vmem:[#allocation8 + $0x108] sm:$0xff]
    %v535 = vld [vmem:[#allocation8 + $0x110] sm:$0xff]
    %v536 = vld [vmem:[#allocation8 + $0x118] sm:$0xff]
    %v537 = vld [vmem:[#allocation8 + $0x120] sm:$0xff]
    %v538 = vld [vmem:[#allocation8 + $0x128] sm:$0xff]
    %v539 = vld [vmem:[#allocation8 + $0x130] sm:$0xff]
    %v540 = vld [vmem:[#allocation8 + $0x138] sm:$0xff]
    %v541 = vld [vmem:[#allocation8 + $0x140] sm:$0xff]
    %v542 = vld [vmem:[#allocation8 + $0x148] sm:$0xff]
    %v543 = vld [vmem:[#allocation8 + $0x150] sm:$0xff]
    %v544 = vld [vmem:[#allocation8 + $0x158] sm:$0xff]
    %v545 = vld [vmem:[#allocation8 + $0x160] sm:$0xff]
    %v546 = vld [vmem:[#allocation8 + $0x168] sm:$0xff]
    %v547 = vld [vmem:[#allocation8 + $0x170] sm:$0xff]
    %v548 = vld [vmem:[#allocation8 + $0x178] sm:$0xff]
    %v549 = vld [vmem:[#allocation8 + $0x180] sm:$0xff]
    %v550 = vld [vmem:[#allocation8 + $0x188] sm:$0xff]
    %v551 = vld [vmem:[#allocation8 + $0x190] sm:$0xff]
    %v552 = vld [vmem:[#allocation8 + $0x198] sm:$0xff]
    %v553 = vld [vmem:[#allocation8 + $0x1a0] sm:$0xff]
    %v554 = vld [vmem:[#allocation8 + $0x1a8] sm:$0xff]
    %v555 = vld [vmem:[#allocation8 + $0x1b0] sm:$0xff]
    %v556 = vld [vmem:[#allocation8 + $0x1b8] sm:$0xff]
    %v557 = vld [vmem:[#allocation8 + $0x1c0] sm:$0xff]
    %v558 = vld [vmem:[#allocation8 + $0x1c8] sm:$0xff]
    %v559 = vld [vmem:[#allocation8 + $0x1d0] sm:$0xff]
    %v560 = vld [vmem:[#allocation8 + $0x1d8] sm:$0xff]
    %v561 = vld [vmem:[#allocation8 + $0x1e0] sm:$0xff]
    %v562 = vld [vmem:[#allocation8 + $0x1e8] sm:$0xff]
    %v563 = vld [vmem:[#allocation8 + $0x1f0] sm:$0xff]
    %v564 = vld [vmem:[#allocation8 + $0x1f8] sm:$0xff]
    %v565 = vunpack.c.l.s8.bf16 %v501
    %v566 = vunpack.c.l.s8.bf16 %v502
    %v567 = vunpack.c.l.s8.bf16 %v503
    %v568 = vunpack.c.l.s8.bf16 %v504
    %v569 = vunpack.c.h.s8.bf16 %v501
    %v570 = vunpack.c.h.s8.bf16 %v502
    %v571 = vunpack.c.h.s8.bf16 %v503
    %v572 = vunpack.c.h.s8.bf16 %v504
    %v573 = vunpack.c.l.s8.bf16 %v505
    %v574 = vunpack.c.l.s8.bf16 %v506
    %v575 = vunpack.c.l.s8.bf16 %v507
    %v576 = vunpack.c.l.s8.bf16 %v508
    %v577 = vunpack.c.h.s8.bf16 %v505
    %v578 = vunpack.c.h.s8.bf16 %v506
    %v579 = vunpack.c.h.s8.bf16 %v507
    %v580 = vunpack.c.h.s8.bf16 %v508
    %v581 = vunpack.c.l.s8.bf16 %v509
    %v582 = vunpack.c.l.s8.bf16 %v510
    %v583 = vunpack.c.l.s8.bf16 %v511
    %v584 = vunpack.c.l.s8.bf16 %v512
    %v585 = vunpack.c.h.s8.bf16 %v509
    %v586 = vunpack.c.h.s8.bf16 %v510
    %v587 = vunpack.c.h.s8.bf16 %v511
    %v588 = vunpack.c.h.s8.bf16 %v512
    %v589 = vunpack.c.l.s8.bf16 %v513
    %v590 = vunpack.c.l.s8.bf16 %v514
    %v591 = vunpack.c.l.s8.bf16 %v515
    %v592 = vunpack.c.l.s8.bf16 %v516
    %v593 = vunpack.c.h.s8.bf16 %v513
    %v594 = vunpack.c.h.s8.bf16 %v514
    %v595 = vunpack.c.h.s8.bf16 %v515
    %v596 = vunpack.c.h.s8.bf16 %v516
    %v597 = vunpack.c.l.s8.bf16 %v517
    %v598 = vunpack.c.l.s8.bf16 %v518
    %v599 = vunpack.c.l.s8.bf16 %v519
    %v600 = vunpack.c.l.s8.bf16 %v520
    %v601 = vunpack.c.h.s8.bf16 %v517
    %v602 = vunpack.c.h.s8.bf16 %v518
    %v603 = vunpack.c.h.s8.bf16 %v519
    %v604 = vunpack.c.h.s8.bf16 %v520
    %v605 = vunpack.c.l.s8.bf16 %v521
    %v606 = vunpack.c.l.s8.bf16 %v522
    %v607 = vunpack.c.l.s8.bf16 %v523
    %v608 = vunpack.c.l.s8.bf16 %v524
    %v609 = vunpack.c.h.s8.bf16 %v521
    %v610 = vunpack.c.h.s8.bf16 %v522
    %v611 = vunpack.c.h.s8.bf16 %v523
    %v612 = vunpack.c.h.s8.bf16 %v524
    %v613 = vunpack.c.l.s8.bf16 %v525
    %v614 = vunpack.c.l.s8.bf16 %v526
    %v615 = vunpack.c.l.s8.bf16 %v527
    %v616 = vunpack.c.l.s8.bf16 %v528
    %v617 = vunpack.c.h.s8.bf16 %v525
    %v618 = vunpack.c.h.s8.bf16 %v526
    %v619 = vunpack.c.h.s8.bf16 %v527
    %v620 = vunpack.c.h.s8.bf16 %v528
    %v621 = vunpack.c.l.s8.bf16 %v529
    %v622 = vunpack.c.l.s8.bf16 %v530
    %v623 = vunpack.c.l.s8.bf16 %v531
    %v624 = vunpack.c.l.s8.bf16 %v532
    %v625 = vunpack.c.h.s8.bf16 %v529
    %v626 = vunpack.c.h.s8.bf16 %v530
    %v627 = vunpack.c.h.s8.bf16 %v531
    %v628 = vunpack.c.h.s8.bf16 %v532
    %v629 = vunpack.c.l.s8.bf16 %v533
    %v630 = vunpack.c.l.s8.bf16 %v534
    %v631 = vunpack.c.l.s8.bf16 %v535
    %v632 = vunpack.c.l.s8.bf16 %v536
    %v633 = vunpack.c.h.s8.bf16 %v533
    %v634 = vunpack.c.h.s8.bf16 %v534
    %v635 = vunpack.c.h.s8.bf16 %v535
    %v636 = vunpack.c.h.s8.bf16 %v536
    %v637 = vunpack.c.l.s8.bf16 %v537
    %v638 = vunpack.c.l.s8.bf16 %v538
    %v639 = vunpack.c.l.s8.bf16 %v539
    %v640 = vunpack.c.l.s8.bf16 %v540
    %v641 = vunpack.c.h.s8.bf16 %v537
    %v642 = vunpack.c.h.s8.bf16 %v538
    %v643 = vunpack.c.h.s8.bf16 %v539
    %v644 = vunpack.c.h.s8.bf16 %v540
    %v645 = vunpack.c.l.s8.bf16 %v541
    %v646 = vunpack.c.l.s8.bf16 %v542
    %v647 = vunpack.c.l.s8.bf16 %v543
    %v648 = vunpack.c.l.s8.bf16 %v544
    %v649 = vunpack.c.h.s8.bf16 %v541
    %v650 = vunpack.c.h.s8.bf16 %v542
    %v651 = vunpack.c.h.s8.bf16 %v543
    %v652 = vunpack.c.h.s8.bf16 %v544
    %v653 = vunpack.c.l.s8.bf16 %v545
    %v654 = vunpack.c.l.s8.bf16 %v546
    %v655 = vunpack.c.l.s8.bf16 %v547
    %v656 = vunpack.c.l.s8.bf16 %v548
    %v657 = vunpack.c.h.s8.bf16 %v545
    %v658 = vunpack.c.h.s8.bf16 %v546
    %v659 = vunpack.c.h.s8.bf16 %v547
    %v660 = vunpack.c.h.s8.bf16 %v548
    %v661 = vunpack.c.l.s8.bf16 %v549
    %v662 = vunpack.c.l.s8.bf16 %v550
    %v663 = vunpack.c.l.s8.bf16 %v551
    %v664 = vunpack.c.l.s8.bf16 %v552
    %v665 = vunpack.c.h.s8.bf16 %v549
    %v666 = vunpack.c.h.s8.bf16 %v550
    %v667 = vunpack.c.h.s8.bf16 %v551
    %v668 = vunpack.c.h.s8.bf16 %v552
    %v669 = vunpack.c.l.s8.bf16 %v553
    %v670 = vunpack.c.l.s8.bf16 %v554
    %v671 = vunpack.c.l.s8.bf16 %v555
    %v672 = vunpack.c.l.s8.bf16 %v556
    %v673 = vunpack.c.h.s8.bf16 %v553
    %v674 = vunpack.c.h.s8.bf16 %v554
    %v675 = vunpack.c.h.s8.bf16 %v555
    %v676 = vunpack.c.h.s8.bf16 %v556
    %v677 = vunpack.c.l.s8.bf16 %v557
    %v678 = vunpack.c.l.s8.bf16 %v558
    %v679 = vunpack.c.l.s8.bf16 %v559
    %v680 = vunpack.c.l.s8.bf16 %v560
    %v681 = vunpack.c.h.s8.bf16 %v557
    %v682 = vunpack.c.h.s8.bf16 %v558
    %v683 = vunpack.c.h.s8.bf16 %v559
    %v684 = vunpack.c.h.s8.bf16 %v560
    %v685 = vunpack.c.l.s8.bf16 %v561
    %v686 = vunpack.c.l.s8.bf16 %v562
    %v687 = vunpack.c.l.s8.bf16 %v563
    %v688 = vunpack.c.l.s8.bf16 %v564
    %v689 = vunpack.c.h.s8.bf16 %v561
    %v690 = vunpack.c.h.s8.bf16 %v562
    %v691 = vunpack.c.h.s8.bf16 %v563
    %v692 = vunpack.c.h.s8.bf16 %v564
    %693 = vmatprep.subr.bf16.mxu0 %v566
    %694 = vmatpush1.bf16.msra.mxu0 %v565
    %695 = vmatprep.subr.bf16.mxu0 %v570
    %696 = vmatpush1.bf16.msra.mxu0 %v569
    %697 = vmatprep.subr.bf16.mxu0 %v574
    %698 = vmatpush1.bf16.msra.mxu0 %v573
    %699 = vmatprep.subr.bf16.mxu0 %v578
    %700 = vmatpush1.bf16.msra.mxu0 %v577
    %701 = vmatprep.subr.bf16.mxu0 %v582
    %702 = vmatpush1.bf16.msra.mxu0 %v581
    %703 = vmatprep.subr.bf16.mxu0 %v586
    %704 = vmatpush1.bf16.msra.mxu0 %v585
    %705 = vmatprep.subr.bf16.mxu0 %v590
    %706 = vmatpush1.bf16.msra.mxu0 %v589
    %707 = vmatprep.subr.bf16.mxu0 %v594
    %708 = vmatpush1.bf16.msra.mxu0 %v593
    %709 = vmatprep.subr.bf16.mxu0 %v598
    %710 = vmatpush1.bf16.msra.mxu0 %v597
    %711 = vmatprep.subr.bf16.mxu0 %v602
    %712 = vmatpush1.bf16.msra.mxu0 %v601
    %713 = vmatprep.subr.bf16.mxu0 %v606
    %714 = vmatpush1.bf16.msra.mxu0 %v605
    %715 = vmatprep.subr.bf16.mxu0 %v610
    %716 = vmatpush1.bf16.msra.mxu0 %v609
    %717 = vmatprep.subr.bf16.mxu0 %v614
    %718 = vmatpush1.bf16.msra.mxu0 %v613
    %719 = vmatprep.subr.bf16.mxu0 %v618
    %720 = vmatpush1.bf16.msra.mxu0 %v617
    %721 = vmatprep.subr.bf16.mxu0 %v622
    %722 = vmatpush1.bf16.msra.mxu0 %v621
    %723 = vmatprep.subr.bf16.mxu0 %v626
    %724 = vmatpush1.bf16.msra.mxu0 %v625
    %725 = vmatprep.mubr.bf16.mxu0 %v498
    %726 = vmatmul.mubr.bf16.gmra.mrb[0].mxu0 %v497
    %v727 = vpop.f32.mrb[0].mxu0
    %v728 = vadd.f32 0.0, %v727
    %v729 = vpop.f32.mrb[0].mxu0
    %v730 = vadd.f32 0.0, %v729
    %v731 = vpop.f32.mrb[0].mxu0
    %v732 = vadd.f32 0.0, %v731
    %v733 = vpop.f32.mrb[0].mxu0
    %v734 = vadd.f32 0.0, %v733
    %735 = vdwg.mxu0
    %736 = vmatprep.subr.bf16.mxu0 %v630
    %737 = vmatpush1.bf16.msra.mxu0 %v629
    %738 = vmatprep.subr.bf16.mxu0 %v634
    %739 = vmatpush1.bf16.msra.mxu0 %v633
    %740 = vmatprep.subr.bf16.mxu0 %v638
    %741 = vmatpush1.bf16.msra.mxu0 %v637
    %742 = vmatprep.subr.bf16.mxu0 %v642
    %743 = vmatpush1.bf16.msra.mxu0 %v641
    %744 = vmatprep.subr.bf16.mxu0 %v646
    %745 = vmatpush1.bf16.msra.mxu0 %v645
    %746 = vmatprep.subr.bf16.mxu0 %v650
    %747 = vmatpush1.bf16.msra.mxu0 %v649
    %748 = vmatprep.subr.bf16.mxu0 %v654
    %749 = vmatpush1.bf16.msra.mxu0 %v653
    %750 = vmatprep.subr.bf16.mxu0 %v658
    %751 = vmatpush1.bf16.msra.mxu0 %v657
    %752 = vmatprep.subr.bf16.mxu0 %v662
    %753 = vmatpush1.bf16.msra.mxu0 %v661
    %754 = vmatprep.subr.bf16.mxu0 %v666
    %755 = vmatpush1.bf16.msra.mxu0 %v665
    %756 = vmatprep.subr.bf16.mxu0 %v670
    %757 = vmatpush1.bf16.msra.mxu0 %v669
    %758 = vmatprep.subr.bf16.mxu0 %v674
    %759 = vmatpush1.bf16.msra.mxu0 %v673
    %760 = vmatprep.subr.bf16.mxu0 %v678
    %761 = vmatpush1.bf16.msra.mxu0 %v677
    %762 = vmatprep.subr.bf16.mxu0 %v682
    %763 = vmatpush1.bf16.msra.mxu0 %v681
    %764 = vmatprep.subr.bf16.mxu0 %v686
    %765 = vmatpush1.bf16.msra.mxu0 %v685
    %766 = vmatprep.subr.bf16.mxu0 %v690
    %767 = vmatpush1.bf16.msra.mxu0 %v689
    %768 = vmatprep.mubr.bf16.mxu0 %v500
    %769 = vmatmul.mubr.bf16.gmra.mrb[0].mxu0 %v499
    %v770 = vpop.f32.mrb[0].mxu0
    %v771 = vadd.f32 %v728, %v770
    %v772 = vpop.f32.mrb[0].mxu0
    %v773 = vadd.f32 %v730, %v772
    %v774 = vpop.f32.mrb[0].mxu0
    %v775 = vadd.f32 %v732, %v774
    %v776 = vpop.f32.mrb[0].mxu0
    %v777 = vadd.f32 %v734, %v776
    %778 = vdwg.mxu0
    %779 = vmatprep.subr.bf16.mxu0 %v568
    %780 = vmatpush1.bf16.msra.mxu0 %v567
    %781 = vmatprep.subr.bf16.mxu0 %v572
    %782 = vmatpush1.bf16.msra.mxu0 %v571
    %783 = vmatprep.subr.bf16.mxu0 %v576
    %784 = vmatpush1.bf16.msra.mxu0 %v575
    %785 = vmatprep.subr.bf16.mxu0 %v580
    %786 = vmatpush1.bf16.msra.mxu0 %v579
    %787 = vmatprep.subr.bf16.mxu0 %v584
    %788 = vmatpush1.bf16.msra.mxu0 %v583
    %789 = vmatprep.subr.bf16.mxu0 %v588
    %790 = vmatpush1.bf16.msra.mxu0 %v587
    %791 = vmatprep.subr.bf16.mxu0 %v592
    %792 = vmatpush1.bf16.msra.mxu0 %v591
    %793 = vmatprep.subr.bf16.mxu0 %v596
    %794 = vmatpush1.bf16.msra.mxu0 %v595
    %795 = vmatprep.subr.bf16.mxu0 %v600
    %796 = vmatpush1.bf16.msra.mxu0 %v599
    %797 = vmatprep.subr.bf16.mxu0 %v604
    %798 = vmatpush1.bf16.msra.mxu0 %v603
    %799 = vmatprep.subr.bf16.mxu0 %v608
    %800 = vmatpush1.bf16.msra.mxu0 %v607
    %801 = vmatprep.subr.bf16.mxu0 %v612
    %802 = vmatpush1.bf16.msra.mxu0 %v611
    %803 = vmatprep.subr.bf16.mxu0 %v616
    %804 = vmatpush1.bf16.msra.mxu0 %v615
    %805 = vmatprep.subr.bf16.mxu0 %v620
    %806 = vmatpush1.bf16.msra.mxu0 %v619
    %807 = vmatprep.subr.bf16.mxu0 %v624
    %808 = vmatpush1.bf16.msra.mxu0 %v623
    %809 = vmatprep.subr.bf16.mxu0 %v628
    %810 = vmatpush1.bf16.msra.mxu0 %v627
    %811 = vmatprep.mubr.bf16.mxu0 %v498
    %812 = vmatmul.mubr.bf16.gmra.mrb[0].mxu0 %v497
    %v813 = vpop.f32.mrb[0].mxu0
    %v814 = vadd.f32 0.0, %v813
    %v815 = vpop.f32.mrb[0].mxu0
    %v816 = vadd.f32 0.0, %v815
    %v817 = vpop.f32.mrb[0].mxu0
    %v818 = vadd.f32 0.0, %v817
    %v819 = vpop.f32.mrb[0].mxu0
    %v820 = vadd.f32 0.0, %v819
    %821 = vdwg.mxu0
    %822 = vmatprep.subr.bf16.mxu0 %v632
    %823 = vmatpush1.bf16.msra.mxu0 %v631
    %824 = vmatprep.subr.bf16.mxu0 %v636
    %825 = vmatpush1.bf16.msra.mxu0 %v635
    %826 = vmatprep.subr.bf16.mxu0 %v640
    %827 = vmatpush1.bf16.msra.mxu0 %v639
    %828 = vmatprep.subr.bf16.mxu0 %v644
    %829 = vmatpush1.bf16.msra.mxu0 %v643
    %830 = vmatprep.subr.bf16.mxu0 %v648
    %831 = vmatpush1.bf16.msra.mxu0 %v647
    %832 = vmatprep.subr.bf16.mxu0 %v652
    %833 = vmatpush1.bf16.msra.mxu0 %v651
    %834 = vmatprep.subr.bf16.mxu0 %v656
    %835 = vmatpush1.bf16.msra.mxu0 %v655
    %836 = vmatprep.subr.bf16.mxu0 %v660
    %837 = vmatpush1.bf16.msra.mxu0 %v659
    %838 = vmatprep.subr.bf16.mxu0 %v664
    %839 = vmatpush1.bf16.msra.mxu0 %v663
    %840 = vmatprep.subr.bf16.mxu0 %v668
    %841 = vmatpush1.bf16.msra.mxu0 %v667
    %842 = vmatprep.subr.bf16.mxu0 %v672
    %843 = vmatpush1.bf16.msra.mxu0 %v671
    %844 = vmatprep.subr.bf16.mxu0 %v676
    %845 = vmatpush1.bf16.msra.mxu0 %v675
    %846 = vmatprep.subr.bf16.mxu0 %v680
    %847 = vmatpush1.bf16.msra.mxu0 %v679
    %848 = vmatprep.subr.bf16.mxu0 %v684
    %849 = vmatpush1.bf16.msra.mxu0 %v683
    %850 = vmatprep.subr.bf16.mxu0 %v688
    %851 = vmatpush1.bf16.msra.mxu0 %v687
    %852 = vmatprep.subr.bf16.mxu0 %v692
    %853 = vmatpush1.bf16.msra.mxu0 %v691
    %854 = vmatprep.mubr.bf16.mxu0 %v500
    %855 = vmatmul.mubr.bf16.gmra.mrb[0].mxu0 %v499
    %v856 = vpop.f32.mrb[0].mxu0
    %v857 = vadd.f32 %v814, %v856
    %v858 = vpop.f32.mrb[0].mxu0
    %v859 = vadd.f32 %v816, %v858
    %v860 = vpop.f32.mrb[0].mxu0
    %v861 = vadd.f32 %v818, %v860
    %v862 = vpop.f32.mrb[0].mxu0
    %v863 = vadd.f32 %v820, %v862
    %864 = vdwg.mxu0
    %v865 = vadd.f32 %v771, %v775
    %v866 = vrot.slane %v865, 4
    %v867 = vadd.f32 %v865, %v866
    %v868 = vrot.slane %v867, 2
    %v869 = vadd.f32 %v867, %v868
    %v870 = vrot.slane %v869, 1
    %v871 = vadd.f32 %v869, %v870
    %v872 = vadd.f32 %v773, %v777
    %v873 = vrot.slane %v872, 4
    %v874 = vadd.f32 %v872, %v873
    %v875 = vrot.slane %v874, 2
    %v876 = vadd.f32 %v874, %v875
    %v877 = vrot.slane %v876, 1
    %v878 = vadd.f32 %v876, %v877
    %v879 = vadd.f32 %v857, %v861
    %v880 = vrot.slane %v879, 4
    %v881 = vadd.f32 %v879, %v880
    %v882 = vrot.slane %v881, 2
    %v883 = vadd.f32 %v881, %v882
    %v884 = vrot.slane %v883, 1
    %v885 = vadd.f32 %v883, %v884
    %v886 = vadd.f32 %v859, %v863
    %v887 = vrot.slane %v886, 4
    %v888 = vadd.f32 %v886, %v887
    %v889 = vrot.slane %v888, 2
    %v890 = vadd.f32 %v888, %v889
    %v891 = vrot.slane %v890, 1
    %v892 = vadd.f32 %v890, %v891
    %v893 = vmul.f32 %v871, %v272
    %v894 = vmul.f32 %v878, %v272
    %v895 = vmul.f32 %v885, %v272
    %v896 = vmul.f32 %v892, %v272
    %v897 = vmul.f32 %v771, %v771
    %v898 = vmul.f32 %v773, %v773
    %v899 = vmul.f32 %v857, %v857
    %v900 = vmul.f32 %v859, %v859
    %v901 = vmul.f32 %v775, %v775
    %v902 = vmul.f32 %v777, %v777
    %v903 = vmul.f32 %v861, %v861
    %v904 = vmul.f32 %v863, %v863
    %v905 = vadd.f32 %v897, %v901
    %v906 = vrot.slane %v905, 4
    %v907 = vadd.f32 %v905, %v906
    %v908 = vrot.slane %v907, 2
    %v909 = vadd.f32 %v907, %v908
    %v910 = vrot.slane %v909, 1
    %v911 = vadd.f32 %v909, %v910
    %v912 = vadd.f32 %v898, %v902
    %v913 = vrot.slane %v912, 4
    %v914 = vadd.f32 %v912, %v913
    %v915 = vrot.slane %v914, 2
    %v916 = vadd.f32 %v914, %v915
    %v917 = vrot.slane %v916, 1
    %v918 = vadd.f32 %v916, %v917
    %v919 = vadd.f32 %v899, %v903
    %v920 = vrot.slane %v919, 4
    %v921 = vadd.f32 %v919, %v920
    %v922 = vrot.slane %v921, 2
    %v923 = vadd.f32 %v921, %v922
    %v924 = vrot.slane %v923, 1
    %v925 = vadd.f32 %v923, %v924
    %v926 = vadd.f32 %v900, %v904
    %v927 = vrot.slane %v926, 4
    %v928 = vadd.f32 %v926, %v927
    %v929 = vrot.slane %v928, 2
    %v930 = vadd.f32 %v928, %v929
    %v931 = vrot.slane %v930, 1
    %v932 = vadd.f32 %v930, %v931
    %v933 = vmul.f32 %v911, %v272
    %v934 = vmul.f32 %v918, %v272
    %v935 = vmul.f32 %v925, %v272
    %v936 = vmul.f32 %v932, %v272
    %v937 = vmul.f32 %v893, %v893
    %v938 = vmul.f32 %v894, %v894
    %v939 = vmul.f32 %v895, %v895
    %v940 = vmul.f32 %v896, %v896
    %v941 = vsub.f32 %v933, %v937
    %v942 = vsub.f32 %v934, %v938
    %v943 = vsub.f32 %v935, %v939
    %v944 = vsub.f32 %v936, %v940
    %v945 = vmax.f32 %v941, 0.0
    %v946 = vmax.f32 %v942, 0.0
    %v947 = vmax.f32 %v943, 0.0
    %v948 = vmax.f32 %v944, 0.0
    %v949 = vld [vmem:[%s6] sm:$0xf]
    %v950 = vld [vmem:[%s7] sm:$0xf]
    %v951 = vmul.f32 %v950, %v949
    %v952 = vmul.f32 %v949, %v949
    %v954 = vlaneseq
    %v955 = vshrl.u32 %v954, 7
    %v956 = vsub.s32 0, %v955
    %v957 = vrot.slane %v952, %v956
    %v958 = vlaneseq
    %v959 = vshrl.u32 %v958, 7
    %v960 = vsub.s32 1, %v959
    %v961 = vrot.slane %v952, %v960
    %v962 = vlaneseq
    %v963 = vshrl.u32 %v962, 7
    %v964 = vsub.s32 2, %v963
    %v965 = vrot.slane %v952, %v964
    %v966 = vlaneseq
    %v967 = vshrl.u32 %v966, 7
    %v968 = vsub.s32 3, %v967
    %v969 = vrot.slane %v952, %v968
    %v974 = vmul.f32 %v945, %v957
    %v975 = vmul.f32 %v946, %v961
    %v976 = vmul.f32 %v947, %v965
    %v977 = vmul.f32 %v948, %v969
    %v978 = vadd.f32 %v974, 1e-05
    %v979 = vadd.f32 %v975, 1e-05
    %v980 = vadd.f32 %v976, 1e-05
    %v981 = vadd.f32 %v977, 1e-05
    %v982 = vrsqrt.pop %v978
    %v983 = vrsqrt.pop %v979
    %v984 = vrsqrt.pop %v980
    %v985 = vrsqrt.pop %v981
    %v990 = vcombine.low %v982, %v983
    %v991 = vcombine.low %v984, %v985
    %v993 = vunpack.c.l.s4 1966171168
    %v994 = vunpack.c.0.s8 %v993
    %v995 = vlaneseq
    %v996 = vshrl.u32 %v995, 7
    %v997 = vsub.s32 %v994, %v996
    %v998 = vrot.slane %v990, %v997
    %v1000 = vunpack.c.l.s4 1966171168
    %v1001 = vunpack.c.0.s8 %v1000
    %v1002 = vlaneseq
    %v1003 = vshrl.u32 %v1002, 7
    %v1004 = vsub.s32 %v1001, %v1003
    %v1005 = vrot.slane %v991, %v1004
    %v1006 = vcombine.low %v998, %v1005
    %v1008 = vunpack.c.l.s4 1966171168
    %v1009 = vunpack.c.0.s8 %v1008
    %v1010 = vlaneseq
    %v1011 = vshrl.u32 %v1010, 7
    %v1012 = vsub.s32 %v1009, %v1011
    %v1013 = vrot.slane %v1006, %v1012
    %v1015 = vmul.f32 %v951, %v1013
    %v1016 = vld [vmem:[%s8] sm:$0xf]
    %v1018 = vlaneseq
    %v1019 = vshrl.u32 %v1018, 7
    %v1020 = vsub.s32 0, %v1019
    %v1021 = vrot.slane %v1015, %v1020
    %v1022 = vlaneseq
    %v1023 = vshrl.u32 %v1022, 7
    %v1024 = vsub.s32 1, %v1023
    %v1025 = vrot.slane %v1015, %v1024
    %v1026 = vlaneseq
    %v1027 = vshrl.u32 %v1026, 7
    %v1028 = vsub.s32 2, %v1027
    %v1029 = vrot.slane %v1015, %v1028
    %v1030 = vlaneseq
    %v1031 = vshrl.u32 %v1030, 7
    %v1032 = vsub.s32 3, %v1031
    %v1033 = vrot.slane %v1015, %v1032
    %v1038 = vmul.f32 %v893, %v1021
    %v1039 = vmul.f32 %v894, %v1025
    %v1040 = vmul.f32 %v895, %v1029
    %v1041 = vmul.f32 %v896, %v1033
    %v1046 = vcombine.low %v1038, %v1039
    %v1047 = vcombine.low %v1040, %v1041
    %v1049 = vunpack.c.l.s4 1966171168
    %v1050 = vunpack.c.0.s8 %v1049
    %v1051 = vlaneseq
    %v1052 = vshrl.u32 %v1051, 7
    %v1053 = vsub.s32 %v1050, %v1052
    %v1054 = vrot.slane %v1046, %v1053
    %v1056 = vunpack.c.l.s4 1966171168
    %v1057 = vunpack.c.0.s8 %v1056
    %v1058 = vlaneseq
    %v1059 = vshrl.u32 %v1058, 7
    %v1060 = vsub.s32 %v1057, %v1059
    %v1061 = vrot.slane %v1047, %v1060
    %v1062 = vcombine.low %v1054, %v1061
    %v1064 = vunpack.c.l.s4 1966171168
    %v1065 = vunpack.c.0.s8 %v1064
    %v1066 = vlaneseq
    %v1067 = vshrl.u32 %v1066, 7
    %v1068 = vsub.s32 %v1065, %v1067
    %v1069 = vrot.slane %v1062, %v1068
    %v1071 = vsub.f32 %v1016, %v1069
    %v1072 = vmul.f32 %v771, %v1021
    %v1073 = vmul.f32 %v773, %v1025
    %v1074 = vmul.f32 %v857, %v1029
    %v1075 = vmul.f32 %v859, %v1033
    %v1076 = vmul.f32 %v775, %v1021
    %v1077 = vmul.f32 %v777, %v1025
    %v1078 = vmul.f32 %v861, %v1029
    %v1079 = vmul.f32 %v863, %v1033
    %v1081 = vlaneseq
    %v1082 = vshrl.u32 %v1081, 7
    %v1083 = vsub.s32 0, %v1082
    %v1084 = vrot.slane %v1071, %v1083
    %v1085 = vlaneseq
    %v1086 = vshrl.u32 %v1085, 7
    %v1087 = vsub.s32 1, %v1086
    %v1088 = vrot.slane %v1071, %v1087
    %v1089 = vlaneseq
    %v1090 = vshrl.u32 %v1089, 7
    %v1091 = vsub.s32 2, %v1090
    %v1092 = vrot.slane %v1071, %v1091
    %v1093 = vlaneseq
    %v1094 = vshrl.u32 %v1093, 7
    %v1095 = vsub.s32 3, %v1094
    %v1096 = vrot.slane %v1071, %v1095
    %v1101 = vadd.f32 %v1072, %v1084
    %v1102 = vadd.f32 %v1073, %v1088
    %v1103 = vadd.f32 %v1074, %v1092
    %v1104 = vadd.f32 %v1075, %v1096
    %v1105 = vadd.f32 %v1076, %v1084
    %v1106 = vadd.f32 %v1077, %v1088
    %v1107 = vadd.f32 %v1078, %v1092
    %v1108 = vadd.f32 %v1079, %v1096
    %v1109 = vmax.f32 %v1101, 0.0
    %v1110 = vmax.f32 %v1102, 0.0
    %v1111 = vmax.f32 %v1103, 0.0
    %v1112 = vmax.f32 %v1104, 0.0
    %v1113 = vmax.f32 %v1105, 0.0
    %v1114 = vmax.f32 %v1106, 0.0
    %v1115 = vmax.f32 %v1107, 0.0
    %v1116 = vmax.f32 %v1108, 0.0
    %s1117 = smul.u32 2, 64
    %s1118 = smul.u32 %s1117, 8
    %s1119 = sshll.u32 %s1118, 4
    %1120 = dma.done [#allocation4], %s1119
    %v1121 = vpack.c.bf16 %v1113, %v1109
    %v1122 = vpack.c.bf16 %v1114, %v1110
    %v1123 = vpack.c.bf16 %v1115, %v1111
    %v1124 = vpack.c.bf16 %v1116, %v1112
    %v1125 = vld [vmem:[#allocation2] sm:$0xff]
    %v1126 = vld [vmem:[#allocation2 + $0x8] sm:$0xff]
    %v1127 = vld [vmem:[#allocation2 + $0x10] sm:$0xff]
    %v1128 = vld [vmem:[#allocation2 + $0x18] sm:$0xff]
    %v1129 = vld [vmem:[#allocation2 + $0x20] sm:$0xff]
    %v1130 = vld [vmem:[#allocation2 + $0x28] sm:$0xff]
    %v1131 = vld [vmem:[#allocation2 + $0x30] sm:$0xff]
    %v1132 = vld [vmem:[#allocation2 + $0x38] sm:$0xff]
    %v1133 = vld [vmem:[#allocation2 + $0x40] sm:$0xff]
    %v1134 = vld [vmem:[#allocation2 + $0x48] sm:$0xff]
    %v1135 = vld [vmem:[#allocation2 + $0x50] sm:$0xff]
    %v1136 = vld [vmem:[#allocation2 + $0x58] sm:$0xff]
    %v1137 = vld [vmem:[#allocation2 + $0x60] sm:$0xff]
    %v1138 = vld [vmem:[#allocation2 + $0x68] sm:$0xff]
    %v1139 = vld [vmem:[#allocation2 + $0x70] sm:$0xff]
    %v1140 = vld [vmem:[#allocation2 + $0x78] sm:$0xff]
    %v1141 = vld [vmem:[#allocation2 + $0x80] sm:$0xff]
    %v1142 = vld [vmem:[#allocation2 + $0x88] sm:$0xff]
    %v1143 = vld [vmem:[#allocation2 + $0x90] sm:$0xff]
    %v1144 = vld [vmem:[#allocation2 + $0x98] sm:$0xff]
    %v1145 = vld [vmem:[#allocation2 + $0xa0] sm:$0xff]
    %v1146 = vld [vmem:[#allocation2 + $0xa8] sm:$0xff]
    %v1147 = vld [vmem:[#allocation2 + $0xb0] sm:$0xff]
    %v1148 = vld [vmem:[#allocation2 + $0xb8] sm:$0xff]
    %v1149 = vld [vmem:[#allocation2 + $0xc0] sm:$0xff]
    %v1150 = vld [vmem:[#allocation2 + $0xc8] sm:$0xff]
    %v1151 = vld [vmem:[#allocation2 + $0xd0] sm:$0xff]
    %v1152 = vld [vmem:[#allocation2 + $0xd8] sm:$0xff]
    %v1153 = vld [vmem:[#allocation2 + $0xe0] sm:$0xff]
    %v1154 = vld [vmem:[#allocation2 + $0xe8] sm:$0xff]
    %v1155 = vld [vmem:[#allocation2 + $0xf0] sm:$0xff]
    %v1156 = vld [vmem:[#allocation2 + $0xf8] sm:$0xff]
    %v1157 = vld [vmem:[#allocation2 + $0x100] sm:$0xff]
    %v1158 = vld [vmem:[#allocation2 + $0x108] sm:$0xff]
    %v1159 = vld [vmem:[#allocation2 + $0x110] sm:$0xff]
    %v1160 = vld [vmem:[#allocation2 + $0x118] sm:$0xff]
    %v1161 = vld [vmem:[#allocation2 + $0x120] sm:$0xff]
    %v1162 = vld [vmem:[#allocation2 + $0x128] sm:$0xff]
    %v1163 = vld [vmem:[#allocation2 + $0x130] sm:$0xff]
    %v1164 = vld [vmem:[#allocation2 + $0x138] sm:$0xff]
    %v1165 = vld [vmem:[#allocation2 + $0x140] sm:$0xff]
    %v1166 = vld [vmem:[#allocation2 + $0x148] sm:$0xff]
    %v1167 = vld [vmem:[#allocation2 + $0x150] sm:$0xff]
    %v1168 = vld [vmem:[#allocation2 + $0x158] sm:$0xff]
    %v1169 = vld [vmem:[#allocation2 + $0x160] sm:$0xff]
    %v1170 = vld [vmem:[#allocation2 + $0x168] sm:$0xff]
    %v1171 = vld [vmem:[#allocation2 + $0x170] sm:$0xff]
    %v1172 = vld [vmem:[#allocation2 + $0x178] sm:$0xff]
    %v1173 = vld [vmem:[#allocation2 + $0x180] sm:$0xff]
    %v1174 = vld [vmem:[#allocation2 + $0x188] sm:$0xff]
    %v1175 = vld [vmem:[#allocation2 + $0x190] sm:$0xff]
    %v1176 = vld [vmem:[#allocation2 + $0x198] sm:$0xff]
    %v1177 = vld [vmem:[#allocation2 + $0x1a0] sm:$0xff]
    %v1178 = vld [vmem:[#allocation2 + $0x1a8] sm:$0xff]
    %v1179 = vld [vmem:[#allocation2 + $0x1b0] sm:$0xff]
    %v1180 = vld [vmem:[#allocation2 + $0x1b8] sm:$0xff]
    %v1181 = vld [vmem:[#allocation2 + $0x1c0] sm:$0xff]
    %v1182 = vld [vmem:[#allocation2 + $0x1c8] sm:$0xff]
    %v1183 = vld [vmem:[#allocation2 + $0x1d0] sm:$0xff]
    %v1184 = vld [vmem:[#allocation2 + $0x1d8] sm:$0xff]
    %v1185 = vld [vmem:[#allocation2 + $0x1e0] sm:$0xff]
    %v1186 = vld [vmem:[#allocation2 + $0x1e8] sm:$0xff]
    %v1187 = vld [vmem:[#allocation2 + $0x1f0] sm:$0xff]
    %v1188 = vld [vmem:[#allocation2 + $0x1f8] sm:$0xff]
    %v1189 = vld [vmem:[#allocation2 + $0x200] sm:$0xff]
    %v1190 = vld [vmem:[#allocation2 + $0x208] sm:$0xff]
    %v1191 = vld [vmem:[#allocation2 + $0x210] sm:$0xff]
    %v1192 = vld [vmem:[#allocation2 + $0x218] sm:$0xff]
    %v1193 = vld [vmem:[#allocation2 + $0x220] sm:$0xff]
    %v1194 = vld [vmem:[#allocation2 + $0x228] sm:$0xff]
    %v1195 = vld [vmem:[#allocation2 + $0x230] sm:$0xff]
    %v1196 = vld [vmem:[#allocation2 + $0x238] sm:$0xff]
    %v1197 = vld [vmem:[#allocation2 + $0x240] sm:$0xff]
    %v1198 = vld [vmem:[#allocation2 + $0x248] sm:$0xff]
    %v1199 = vld [vmem:[#allocation2 + $0x250] sm:$0xff]
    %v1200 = vld [vmem:[#allocation2 + $0x258] sm:$0xff]
    %v1201 = vld [vmem:[#allocation2 + $0x260] sm:$0xff]
    %v1202 = vld [vmem:[#allocation2 + $0x268] sm:$0xff]
    %v1203 = vld [vmem:[#allocation2 + $0x270] sm:$0xff]
    %v1204 = vld [vmem:[#allocation2 + $0x278] sm:$0xff]
    %v1205 = vld [vmem:[#allocation2 + $0x280] sm:$0xff]
    %v1206 = vld [vmem:[#allocation2 + $0x288] sm:$0xff]
    %v1207 = vld [vmem:[#allocation2 + $0x290] sm:$0xff]
    %v1208 = vld [vmem:[#allocation2 + $0x298] sm:$0xff]
    %v1209 = vld [vmem:[#allocation2 + $0x2a0] sm:$0xff]
    %v1210 = vld [vmem:[#allocation2 + $0x2a8] sm:$0xff]
    %v1211 = vld [vmem:[#allocation2 + $0x2b0] sm:$0xff]
    %v1212 = vld [vmem:[#allocation2 + $0x2b8] sm:$0xff]
    %v1213 = vld [vmem:[#allocation2 + $0x2c0] sm:$0xff]
    %v1214 = vld [vmem:[#allocation2 + $0x2c8] sm:$0xff]
    %v1215 = vld [vmem:[#allocation2 + $0x2d0] sm:$0xff]
    %v1216 = vld [vmem:[#allocation2 + $0x2d8] sm:$0xff]
    %v1217 = vld [vmem:[#allocation2 + $0x2e0] sm:$0xff]
    %v1218 = vld [vmem:[#allocation2 + $0x2e8] sm:$0xff]
    %v1219 = vld [vmem:[#allocation2 + $0x2f0] sm:$0xff]
    %v1220 = vld [vmem:[#allocation2 + $0x2f8] sm:$0xff]
    %v1221 = vld [vmem:[#allocation2 + $0x300] sm:$0xff]
    %v1222 = vld [vmem:[#allocation2 + $0x308] sm:$0xff]
    %v1223 = vld [vmem:[#allocation2 + $0x310] sm:$0xff]
    %v1224 = vld [vmem:[#allocation2 + $0x318] sm:$0xff]
    %v1225 = vld [vmem:[#allocation2 + $0x320] sm:$0xff]
    %v1226 = vld [vmem:[#allocation2 + $0x328] sm:$0xff]
    %v1227 = vld [vmem:[#allocation2 + $0x330] sm:$0xff]
    %v1228 = vld [vmem:[#allocation2 + $0x338] sm:$0xff]
    %v1229 = vld [vmem:[#allocation2 + $0x340] sm:$0xff]
    %v1230 = vld [vmem:[#allocation2 + $0x348] sm:$0xff]
    %v1231 = vld [vmem:[#allocation2 + $0x350] sm:$0xff]
    %v1232 = vld [vmem:[#allocation2 + $0x358] sm:$0xff]
    %v1233 = vld [vmem:[#allocation2 + $0x360] sm:$0xff]
    %v1234 = vld [vmem:[#allocation2 + $0x368] sm:$0xff]
    %v1235 = vld [vmem:[#allocation2 + $0x370] sm:$0xff]
    %v1236 = vld [vmem:[#allocation2 + $0x378] sm:$0xff]
    %v1237 = vld [vmem:[#allocation2 + $0x380] sm:$0xff]
    %v1238 = vld [vmem:[#allocation2 + $0x388] sm:$0xff]
    %v1239 = vld [vmem:[#allocation2 + $0x390] sm:$0xff]
    %v1240 = vld [vmem:[#allocation2 + $0x398] sm:$0xff]
    %v1241 = vld [vmem:[#allocation2 + $0x3a0] sm:$0xff]
    %v1242 = vld [vmem:[#allocation2 + $0x3a8] sm:$0xff]
    %v1243 = vld [vmem:[#allocation2 + $0x3b0] sm:$0xff]
    %v1244 = vld [vmem:[#allocation2 + $0x3b8] sm:$0xff]
    %v1245 = vld [vmem:[#allocation2 + $0x3c0] sm:$0xff]
    %v1246 = vld [vmem:[#allocation2 + $0x3c8] sm:$0xff]
    %v1247 = vld [vmem:[#allocation2 + $0x3d0] sm:$0xff]
    %v1248 = vld [vmem:[#allocation2 + $0x3d8] sm:$0xff]
    %v1249 = vld [vmem:[#allocation2 + $0x3e0] sm:$0xff]
    %v1250 = vld [vmem:[#allocation2 + $0x3e8] sm:$0xff]
    %v1251 = vld [vmem:[#allocation2 + $0x3f0] sm:$0xff]
    %v1252 = vld [vmem:[#allocation2 + $0x3f8] sm:$0xff]
    %v1253 = vunpack.c.l.s8.bf16 %v1125
    %v1254 = vunpack.c.l.s8.bf16 %v1126
    %v1255 = vunpack.c.l.s8.bf16 %v1127
    %v1256 = vunpack.c.l.s8.bf16 %v1128
    %v1257 = vunpack.c.l.s8.bf16 %v1129
    %v1258 = vunpack.c.l.s8.bf16 %v1130
    %v1259 = vunpack.c.l.s8.bf16 %v1131
    %v1260 = vunpack.c.l.s8.bf16 %v1132
    %v1261 = vunpack.c.h.s8.bf16 %v1125
    %v1262 = vunpack.c.h.s8.bf16 %v1126
    %v1263 = vunpack.c.h.s8.bf16 %v1127
    %v1264 = vunpack.c.h.s8.bf16 %v1128
    %v1265 = vunpack.c.h.s8.bf16 %v1129
    %v1266 = vunpack.c.h.s8.bf16 %v1130
    %v1267 = vunpack.c.h.s8.bf16 %v1131
    %v1268 = vunpack.c.h.s8.bf16 %v1132
    %v1269 = vunpack.c.l.s8.bf16 %v1133
    %v1270 = vunpack.c.l.s8.bf16 %v1134
    %v1271 = vunpack.c.l.s8.bf16 %v1135
    %v1272 = vunpack.c.l.s8.bf16 %v1136
    %v1273 = vunpack.c.l.s8.bf16 %v1137
    %v1274 = vunpack.c.l.s8.bf16 %v1138
    %v1275 = vunpack.c.l.s8.bf16 %v1139
    %v1276 = vunpack.c.l.s8.bf16 %v1140
    %v1277 = vunpack.c.h.s8.bf16 %v1133
    %v1278 = vunpack.c.h.s8.bf16 %v1134
    %v1279 = vunpack.c.h.s8.bf16 %v1135
    %v1280 = vunpack.c.h.s8.bf16 %v1136
    %v1281 = vunpack.c.h.s8.bf16 %v1137
    %v1282 = vunpack.c.h.s8.bf16 %v1138
    %v1283 = vunpack.c.h.s8.bf16 %v1139
    %v1284 = vunpack.c.h.s8.bf16 %v1140
    %v1285 = vunpack.c.l.s8.bf16 %v1141
    %v1286 = vunpack.c.l.s8.bf16 %v1142
    %v1287 = vunpack.c.l.s8.bf16 %v1143
    %v1288 = vunpack.c.l.s8.bf16 %v1144
    %v1289 = vunpack.c.l.s8.bf16 %v1145
    %v1290 = vunpack.c.l.s8.bf16 %v1146
    %v1291 = vunpack.c.l.s8.bf16 %v1147
    %v1292 = vunpack.c.l.s8.bf16 %v1148
    %v1293 = vunpack.c.h.s8.bf16 %v1141
    %v1294 = vunpack.c.h.s8.bf16 %v1142
    %v1295 = vunpack.c.h.s8.bf16 %v1143
    %v1296 = vunpack.c.h.s8.bf16 %v1144
    %v1297 = vunpack.c.h.s8.bf16 %v1145
    %v1298 = vunpack.c.h.s8.bf16 %v1146
    %v1299 = vunpack.c.h.s8.bf16 %v1147
    %v1300 = vunpack.c.h.s8.bf16 %v1148
    %v1301 = vunpack.c.l.s8.bf16 %v1149
    %v1302 = vunpack.c.l.s8.bf16 %v1150
    %v1303 = vunpack.c.l.s8.bf16 %v1151
    %v1304 = vunpack.c.l.s8.bf16 %v1152
    %v1305 = vunpack.c.l.s8.bf16 %v1153
    %v1306 = vunpack.c.l.s8.bf16 %v1154
    %v1307 = vunpack.c.l.s8.bf16 %v1155
    %v1308 = vunpack.c.l.s8.bf16 %v1156
    %v1309 = vunpack.c.h.s8.bf16 %v1149
    %v1310 = vunpack.c.h.s8.bf16 %v1150
    %v1311 = vunpack.c.h.s8.bf16 %v1151
    %v1312 = vunpack.c.h.s8.bf16 %v1152
    %v1313 = vunpack.c.h.s8.bf16 %v1153
    %v1314 = vunpack.c.h.s8.bf16 %v1154
    %v1315 = vunpack.c.h.s8.bf16 %v1155
    %v1316 = vunpack.c.h.s8.bf16 %v1156
    %v1317 = vunpack.c.l.s8.bf16 %v1157
    %v1318 = vunpack.c.l.s8.bf16 %v1158
    %v1319 = vunpack.c.l.s8.bf16 %v1159
    %v1320 = vunpack.c.l.s8.bf16 %v1160
    %v1321 = vunpack.c.l.s8.bf16 %v1161
    %v1322 = vunpack.c.l.s8.bf16 %v1162
    %v1323 = vunpack.c.l.s8.bf16 %v1163
    %v1324 = vunpack.c.l.s8.bf16 %v1164
    %v1325 = vunpack.c.h.s8.bf16 %v1157
    %v1326 = vunpack.c.h.s8.bf16 %v1158
    %v1327 = vunpack.c.h.s8.bf16 %v1159
    %v1328 = vunpack.c.h.s8.bf16 %v1160
    %v1329 = vunpack.c.h.s8.bf16 %v1161
    %v1330 = vunpack.c.h.s8.bf16 %v1162
    %v1331 = vunpack.c.h.s8.bf16 %v1163
    %v1332 = vunpack.c.h.s8.bf16 %v1164
    %v1333 = vunpack.c.l.s8.bf16 %v1165
    %v1334 = vunpack.c.l.s8.bf16 %v1166
    %v1335 = vunpack.c.l.s8.bf16 %v1167
    %v1336 = vunpack.c.l.s8.bf16 %v1168
    %v1337 = vunpack.c.l.s8.bf16 %v1169
    %v1338 = vunpack.c.l.s8.bf16 %v1170
    %v1339 = vunpack.c.l.s8.bf16 %v1171
    %v1340 = vunpack.c.l.s8.bf16 %v1172
    %v1341 = vunpack.c.h.s8.bf16 %v1165
    %v1342 = vunpack.c.h.s8.bf16 %v1166
    %v1343 = vunpack.c.h.s8.bf16 %v1167
    %v1344 = vunpack.c.h.s8.bf16 %v1168
    %v1345 = vunpack.c.h.s8.bf16 %v1169
    %v1346 = vunpack.c.h.s8.bf16 %v1170
    %v1347 = vunpack.c.h.s8.bf16 %v1171
    %v1348 = vunpack.c.h.s8.bf16 %v1172
    %v1349 = vunpack.c.l.s8.bf16 %v1173
    %v1350 = vunpack.c.l.s8.bf16 %v1174
    %v1351 = vunpack.c.l.s8.bf16 %v1175
    %v1352 = vunpack.c.l.s8.bf16 %v1176
    %v1353 = vunpack.c.l.s8.bf16 %v1177
    %v1354 = vunpack.c.l.s8.bf16 %v1178
    %v1355 = vunpack.c.l.s8.bf16 %v1179
    %v1356 = vunpack.c.l.s8.bf16 %v1180
    %v1357 = vunpack.c.h.s8.bf16 %v1173
    %v1358 = vunpack.c.h.s8.bf16 %v1174
    %v1359 = vunpack.c.h.s8.bf16 %v1175
    %v1360 = vunpack.c.h.s8.bf16 %v1176
    %v1361 = vunpack.c.h.s8.bf16 %v1177
    %v1362 = vunpack.c.h.s8.bf16 %v1178
    %v1363 = vunpack.c.h.s8.bf16 %v1179
    %v1364 = vunpack.c.h.s8.bf16 %v1180
    %v1365 = vunpack.c.l.s8.bf16 %v1181
    %v1366 = vunpack.c.l.s8.bf16 %v1182
    %v1367 = vunpack.c.l.s8.bf16 %v1183
    %v1368 = vunpack.c.l.s8.bf16 %v1184
    %v1369 = vunpack.c.l.s8.bf16 %v1185
    %v1370 = vunpack.c.l.s8.bf16 %v1186
    %v1371 = vunpack.c.l.s8.bf16 %v1187
    %v1372 = vunpack.c.l.s8.bf16 %v1188
    %v1373 = vunpack.c.h.s8.bf16 %v1181
    %v1374 = vunpack.c.h.s8.bf16 %v1182
    %v1375 = vunpack.c.h.s8.bf16 %v1183
    %v1376 = vunpack.c.h.s8.bf16 %v1184
    %v1377 = vunpack.c.h.s8.bf16 %v1185
    %v1378 = vunpack.c.h.s8.bf16 %v1186
    %v1379 = vunpack.c.h.s8.bf16 %v1187
    %v1380 = vunpack.c.h.s8.bf16 %v1188
    %v1381 = vunpack.c.l.s8.bf16 %v1189
    %v1382 = vunpack.c.l.s8.bf16 %v1190
    %v1383 = vunpack.c.l.s8.bf16 %v1191
    %v1384 = vunpack.c.l.s8.bf16 %v1192
    %v1385 = vunpack.c.l.s8.bf16 %v1193
    %v1386 = vunpack.c.l.s8.bf16 %v1194
    %v1387 = vunpack.c.l.s8.bf16 %v1195
    %v1388 = vunpack.c.l.s8.bf16 %v1196
    %v1389 = vunpack.c.h.s8.bf16 %v1189
    %v1390 = vunpack.c.h.s8.bf16 %v1190
    %v1391 = vunpack.c.h.s8.bf16 %v1191
    %v1392 = vunpack.c.h.s8.bf16 %v1192
    %v1393 = vunpack.c.h.s8.bf16 %v1193
    %v1394 = vunpack.c.h.s8.bf16 %v1194
    %v1395 = vunpack.c.h.s8.bf16 %v1195
    %v1396 = vunpack.c.h.s8.bf16 %v1196
    %v1397 = vunpack.c.l.s8.bf16 %v1197
    %v1398 = vunpack.c.l.s8.bf16 %v1198
    %v1399 = vunpack.c.l.s8.bf16 %v1199
    %v1400 = vunpack.c.l.s8.bf16 %v1200
    %v1401 = vunpack.c.l.s8.bf16 %v1201
    %v1402 = vunpack.c.l.s8.bf16 %v1202
    %v1403 = vunpack.c.l.s8.bf16 %v1203
    %v1404 = vunpack.c.l.s8.bf16 %v1204
    %v1405 = vunpack.c.h.s8.bf16 %v1197
    %v1406 = vunpack.c.h.s8.bf16 %v1198
    %v1407 = vunpack.c.h.s8.bf16 %v1199
    %v1408 = vunpack.c.h.s8.bf16 %v1200
    %v1409 = vunpack.c.h.s8.bf16 %v1201
    %v1410 = vunpack.c.h.s8.bf16 %v1202
    %v1411 = vunpack.c.h.s8.bf16 %v1203
    %v1412 = vunpack.c.h.s8.bf16 %v1204
    %v1413 = vunpack.c.l.s8.bf16 %v1205
    %v1414 = vunpack.c.l.s8.bf16 %v1206
    %v1415 = vunpack.c.l.s8.bf16 %v1207
    %v1416 = vunpack.c.l.s8.bf16 %v1208
    %v1417 = vunpack.c.l.s8.bf16 %v1209
    %v1418 = vunpack.c.l.s8.bf16 %v1210
    %v1419 = vunpack.c.l.s8.bf16 %v1211
    %v1420 = vunpack.c.l.s8.bf16 %v1212
    %v1421 = vunpack.c.h.s8.bf16 %v1205
    %v1422 = vunpack.c.h.s8.bf16 %v1206
    %v1423 = vunpack.c.h.s8.bf16 %v1207
    %v1424 = vunpack.c.h.s8.bf16 %v1208
    %v1425 = vunpack.c.h.s8.bf16 %v1209
    %v1426 = vunpack.c.h.s8.bf16 %v1210
    %v1427 = vunpack.c.h.s8.bf16 %v1211
    %v1428 = vunpack.c.h.s8.bf16 %v1212
    %v1429 = vunpack.c.l.s8.bf16 %v1213
    %v1430 = vunpack.c.l.s8.bf16 %v1214
    %v1431 = vunpack.c.l.s8.bf16 %v1215
    %v1432 = vunpack.c.l.s8.bf16 %v1216
    %v1433 = vunpack.c.l.s8.bf16 %v1217
    %v1434 = vunpack.c.l.s8.bf16 %v1218
    %v1435 = vunpack.c.l.s8.bf16 %v1219
    %v1436 = vunpack.c.l.s8.bf16 %v1220
    %v1437 = vunpack.c.h.s8.bf16 %v1213
    %v1438 = vunpack.c.h.s8.bf16 %v1214
    %v1439 = vunpack.c.h.s8.bf16 %v1215
    %v1440 = vunpack.c.h.s8.bf16 %v1216
    %v1441 = vunpack.c.h.s8.bf16 %v1217
    %v1442 = vunpack.c.h.s8.bf16 %v1218
    %v1443 = vunpack.c.h.s8.bf16 %v1219
    %v1444 = vunpack.c.h.s8.bf16 %v1220
    %v1445 = vunpack.c.l.s8.bf16 %v1221
    %v1446 = vunpack.c.l.s8.bf16 %v1222
    %v1447 = vunpack.c.l.s8.bf16 %v1223
    %v1448 = vunpack.c.l.s8.bf16 %v1224
    %v1449 = vunpack.c.l.s8.bf16 %v1225
    %v1450 = vunpack.c.l.s8.bf16 %v1226
    %v1451 = vunpack.c.l.s8.bf16 %v1227
    %v1452 = vunpack.c.l.s8.bf16 %v1228
    %v1453 = vunpack.c.h.s8.bf16 %v1221
    %v1454 = vunpack.c.h.s8.bf16 %v1222
    %v1455 = vunpack.c.h.s8.bf16 %v1223
    %v1456 = vunpack.c.h.s8.bf16 %v1224
    %v1457 = vunpack.c.h.s8.bf16 %v1225
    %v1458 = vunpack.c.h.s8.bf16 %v1226
    %v1459 = vunpack.c.h.s8.bf16 %v1227
    %v1460 = vunpack.c.h.s8.bf16 %v1228
    %v1461 = vunpack.c.l.s8.bf16 %v1229
    %v1462 = vunpack.c.l.s8.bf16 %v1230
    %v1463 = vunpack.c.l.s8.bf16 %v1231
    %v1464 = vunpack.c.l.s8.bf16 %v1232
    %v1465 = vunpack.c.l.s8.bf16 %v1233
    %v1466 = vunpack.c.l.s8.bf16 %v1234
    %v1467 = vunpack.c.l.s8.bf16 %v1235
    %v1468 = vunpack.c.l.s8.bf16 %v1236
    %v1469 = vunpack.c.h.s8.bf16 %v1229
    %v1470 = vunpack.c.h.s8.bf16 %v1230
    %v1471 = vunpack.c.h.s8.bf16 %v1231
    %v1472 = vunpack.c.h.s8.bf16 %v1232
    %v1473 = vunpack.c.h.s8.bf16 %v1233
    %v1474 = vunpack.c.h.s8.bf16 %v1234
    %v1475 = vunpack.c.h.s8.bf16 %v1235
    %v1476 = vunpack.c.h.s8.bf16 %v1236
    %v1477 = vunpack.c.l.s8.bf16 %v1237
    %v1478 = vunpack.c.l.s8.bf16 %v1238
    %v1479 = vunpack.c.l.s8.bf16 %v1239
    %v1480 = vunpack.c.l.s8.bf16 %v1240
    %v1481 = vunpack.c.l.s8.bf16 %v1241
    %v1482 = vunpack.c.l.s8.bf16 %v1242
    %v1483 = vunpack.c.l.s8.bf16 %v1243
    %v1484 = vunpack.c.l.s8.bf16 %v1244
    %v1485 = vunpack.c.h.s8.bf16 %v1237
    %v1486 = vunpack.c.h.s8.bf16 %v1238
    %v1487 = vunpack.c.h.s8.bf16 %v1239
    %v1488 = vunpack.c.h.s8.bf16 %v1240
    %v1489 = vunpack.c.h.s8.bf16 %v1241
    %v1490 = vunpack.c.h.s8.bf16 %v1242
    %v1491 = vunpack.c.h.s8.bf16 %v1243
    %v1492 = vunpack.c.h.s8.bf16 %v1244
    %v1493 = vunpack.c.l.s8.bf16 %v1245
    %v1494 = vunpack.c.l.s8.bf16 %v1246
    %v1495 = vunpack.c.l.s8.bf16 %v1247
    %v1496 = vunpack.c.l.s8.bf16 %v1248
    %v1497 = vunpack.c.l.s8.bf16 %v1249
    %v1498 = vunpack.c.l.s8.bf16 %v1250
    %v1499 = vunpack.c.l.s8.bf16 %v1251
    %v1500 = vunpack.c.l.s8.bf16 %v1252
    %v1501 = vunpack.c.h.s8.bf16 %v1245
    %v1502 = vunpack.c.h.s8.bf16 %v1246
    %v1503 = vunpack.c.h.s8.bf16 %v1247
    %v1504 = vunpack.c.h.s8.bf16 %v1248
    %v1505 = vunpack.c.h.s8.bf16 %v1249
    %v1506 = vunpack.c.h.s8.bf16 %v1250
    %v1507 = vunpack.c.h.s8.bf16 %v1251
    %v1508 = vunpack.c.h.s8.bf16 %v1252
    %1509 = vmatprep.subr.bf16.mxu0 %v1254
    %1510 = vmatpush1.bf16.msra.mxu0 %v1253
    %1511 = vmatprep.subr.bf16.mxu0 %v1262
    %1512 = vmatpush1.bf16.msra.mxu0 %v1261
    %1513 = vmatprep.subr.bf16.mxu0 %v1270
    %1514 = vmatpush1.bf16.msra.mxu0 %v1269
    %1515 = vmatprep.subr.bf16.mxu0 %v1278
    %1516 = vmatpush1.bf16.msra.mxu0 %v1277
    %1517 = vmatprep.subr.bf16.mxu0 %v1286
    %1518 = vmatpush1.bf16.msra.mxu0 %v1285
    %1519 = vmatprep.subr.bf16.mxu0 %v1294
    %1520 = vmatpush1.bf16.msra.mxu0 %v1293
    %1521 = vmatprep.subr.bf16.mxu0 %v1302
    %1522 = vmatpush1.bf16.msra.mxu0 %v1301
    %1523 = vmatprep.subr.bf16.mxu0 %v1310
    %1524 = vmatpush1.bf16.msra.mxu0 %v1309
    %1525 = vmatprep.subr.bf16.mxu0 %v1318
    %1526 = vmatpush1.bf16.msra.mxu0 %v1317
    %1527 = vmatprep.subr.bf16.mxu0 %v1326
    %1528 = vmatpush1.bf16.msra.mxu0 %v1325
    %1529 = vmatprep.subr.bf16.mxu0 %v1334
    %1530 = vmatpush1.bf16.msra.mxu0 %v1333
    %1531 = vmatprep.subr.bf16.mxu0 %v1342
    %1532 = vmatpush1.bf16.msra.mxu0 %v1341
    %1533 = vmatprep.subr.bf16.mxu0 %v1350
    %1534 = vmatpush1.bf16.msra.mxu0 %v1349
    %1535 = vmatprep.subr.bf16.mxu0 %v1358
    %1536 = vmatpush1.bf16.msra.mxu0 %v1357
    %1537 = vmatprep.subr.bf16.mxu0 %v1366
    %1538 = vmatpush1.bf16.msra.mxu0 %v1365
    %1539 = vmatprep.subr.bf16.mxu0 %v1374
    %1540 = vmatpush1.bf16.msra.mxu0 %v1373
    %1541 = vmatprep.mubr.bf16.mxu0 %v1122
    %1542 = vmatmul.mubr.bf16.gmra.mrb[0].mxu0 %v1121
    %v1543 = vpop.f32.mrb[0].mxu0
    %v1544 = vadd.f32 0.0, %v1543
    %v1545 = vpop.f32.mrb[0].mxu0
    %v1546 = vadd.f32 0.0, %v1545
    %v1547 = vpop.f32.mrb[0].mxu0
    %v1548 = vadd.f32 0.0, %v1547
    %v1549 = vpop.f32.mrb[0].mxu0
    %v1550 = vadd.f32 0.0, %v1549
    %1551 = vdwg.mxu0
    %1552 = vmatprep.subr.bf16.mxu0 %v1382
    %1553 = vmatpush1.bf16.msra.mxu0 %v1381
    %1554 = vmatprep.subr.bf16.mxu0 %v1390
    %1555 = vmatpush1.bf16.msra.mxu0 %v1389
    %1556 = vmatprep.subr.bf16.mxu0 %v1398
    %1557 = vmatpush1.bf16.msra.mxu0 %v1397
    %1558 = vmatprep.subr.bf16.mxu0 %v1406
    %1559 = vmatpush1.bf16.msra.mxu0 %v1405
    %1560 = vmatprep.subr.bf16.mxu0 %v1414
    %1561 = vmatpush1.bf16.msra.mxu0 %v1413
    %1562 = vmatprep.subr.bf16.mxu0 %v1422
    %1563 = vmatpush1.bf16.msra.mxu0 %v1421
    %1564 = vmatprep.subr.bf16.mxu0 %v1430
    %1565 = vmatpush1.bf16.msra.mxu0 %v1429
    %1566 = vmatprep.subr.bf16.mxu0 %v1438
    %1567 = vmatpush1.bf16.msra.mxu0 %v1437
    %1568 = vmatprep.subr.bf16.mxu0 %v1446
    %1569 = vmatpush1.bf16.msra.mxu0 %v1445
    %1570 = vmatprep.subr.bf16.mxu0 %v1454
    %1571 = vmatpush1.bf16.msra.mxu0 %v1453
    %1572 = vmatprep.subr.bf16.mxu0 %v1462
    %1573 = vmatpush1.bf16.msra.mxu0 %v1461
    %1574 = vmatprep.subr.bf16.mxu0 %v1470
    %1575 = vmatpush1.bf16.msra.mxu0 %v1469
    %1576 = vmatprep.subr.bf16.mxu0 %v1478
    %1577 = vmatpush1.bf16.msra.mxu0 %v1477
    %1578 = vmatprep.subr.bf16.mxu0 %v1486
    %1579 = vmatpush1.bf16.msra.mxu0 %v1485
    %1580 = vmatprep.subr.bf16.mxu0 %v1494
    %1581 = vmatpush1.bf16.msra.mxu0 %v1493
    %1582 = vmatprep.subr.bf16.mxu0 %v1502
    %1583 = vmatpush1.bf16.msra.mxu0 %v1501
    %1584 = vmatprep.mubr.bf16.mxu0 %v1124
    %1585 = vmatmul.mubr.bf16.gmra.mrb[0].mxu0 %v1123
    %v1586 = vpop.f32.mrb[0].mxu0
    %v1587 = vadd.f32 %v1544, %v1586
    %v1588 = vpop.f32.mrb[0].mxu0
    %v1589 = vadd.f32 %v1546, %v1588
    %v1590 = vpop.f32.mrb[0].mxu0
    %v1591 = vadd.f32 %v1548, %v1590
    %v1592 = vpop.f32.mrb[0].mxu0
    %v1593 = vadd.f32 %v1550, %v1592
    %1594 = vdwg.mxu0
    %1595 = vmatprep.subr.bf16.mxu0 %v1256
    %1596 = vmatpush1.bf16.msra.mxu0 %v1255
    %1597 = vmatprep.subr.bf16.mxu0 %v1264
    %1598 = vmatpush1.bf16.msra.mxu0 %v1263
    %1599 = vmatprep.subr.bf16.mxu0 %v1272
    %1600 = vmatpush1.bf16.msra.mxu0 %v1271
    %1601 = vmatprep.subr.bf16.mxu0 %v1280
    %1602 = vmatpush1.bf16.msra.mxu0 %v1279
    %1603 = vmatprep.subr.bf16.mxu0 %v1288
    %1604 = vmatpush1.bf16.msra.mxu0 %v1287
    %1605 = vmatprep.subr.bf16.mxu0 %v1296
    %1606 = vmatpush1.bf16.msra.mxu0 %v1295
    %1607 = vmatprep.subr.bf16.mxu0 %v1304
    %1608 = vmatpush1.bf16.msra.mxu0 %v1303
    %1609 = vmatprep.subr.bf16.mxu0 %v1312
    %1610 = vmatpush1.bf16.msra.mxu0 %v1311
    %1611 = vmatprep.subr.bf16.mxu0 %v1320
    %1612 = vmatpush1.bf16.msra.mxu0 %v1319
    %1613 = vmatprep.subr.bf16.mxu0 %v1328
    %1614 = vmatpush1.bf16.msra.mxu0 %v1327
    %1615 = vmatprep.subr.bf16.mxu0 %v1336
    %1616 = vmatpush1.bf16.msra.mxu0 %v1335
    %1617 = vmatprep.subr.bf16.mxu0 %v1344
    %1618 = vmatpush1.bf16.msra.mxu0 %v1343
    %1619 = vmatprep.subr.bf16.mxu0 %v1352
    %1620 = vmatpush1.bf16.msra.mxu0 %v1351
    %1621 = vmatprep.subr.bf16.mxu0 %v1360
    %1622 = vmatpush1.bf16.msra.mxu0 %v1359
    %1623 = vmatprep.subr.bf16.mxu0 %v1368
    %1624 = vmatpush1.bf16.msra.mxu0 %v1367
    %1625 = vmatprep.subr.bf16.mxu0 %v1376
    %1626 = vmatpush1.bf16.msra.mxu0 %v1375
    %1627 = vmatprep.mubr.bf16.mxu0 %v1122
    %1628 = vmatmul.mubr.bf16.gmra.mrb[0].mxu0 %v1121
    %v1629 = vpop.f32.mrb[0].mxu0
    %v1630 = vadd.f32 0.0, %v1629
    %v1631 = vpop.f32.mrb[0].mxu0
    %v1632 = vadd.f32 0.0, %v1631
    %v1633 = vpop.f32.mrb[0].mxu0
    %v1634 = vadd.f32 0.0, %v1633
    %v1635 = vpop.f32.mrb[0].mxu0
    %v1636 = vadd.f32 0.0, %v1635
    %1637 = vdwg.mxu0
    %1638 = vmatprep.subr.bf16.mxu0 %v1384
    %1639 = vmatpush1.bf16.msra.mxu0 %v1383
    %1640 = vmatprep.subr.bf16.mxu0 %v1392
    %1641 = vmatpush1.bf16.msra.mxu0 %v1391
    %1642 = vmatprep.subr.bf16.mxu0 %v1400
    %1643 = vmatpush1.bf16.msra.mxu0 %v1399
    %1644 = vmatprep.subr.bf16.mxu0 %v1408
    %1645 = vmatpush1.bf16.msra.mxu0 %v1407
    %1646 = vmatprep.subr.bf16.mxu0 %v1416
    %1647 = vmatpush1.bf16.msra.mxu0 %v1415
    %1648 = vmatprep.subr.bf16.mxu0 %v1424
    %1649 = vmatpush1.bf16.msra.mxu0 %v1423
    %1650 = vmatprep.subr.bf16.mxu0 %v1432
    %1651 = vmatpush1.bf16.msra.mxu0 %v1431
    %1652 = vmatprep.subr.bf16.mxu0 %v1440
    %1653 = vmatpush1.bf16.msra.mxu0 %v1439
    %1654 = vmatprep.subr.bf16.mxu0 %v1448
    %1655 = vmatpush1.bf16.msra.mxu0 %v1447
    %1656 = vmatprep.subr.bf16.mxu0 %v1456
    %1657 = vmatpush1.bf16.msra.mxu0 %v1455
    %1658 = vmatprep.subr.bf16.mxu0 %v1464
    %1659 = vmatpush1.bf16.msra.mxu0 %v1463
    %1660 = vmatprep.subr.bf16.mxu0 %v1472
    %1661 = vmatpush1.bf16.msra.mxu0 %v1471
    %1662 = vmatprep.subr.bf16.mxu0 %v1480
    %1663 = vmatpush1.bf16.msra.mxu0 %v1479
    %1664 = vmatprep.subr.bf16.mxu0 %v1488
    %1665 = vmatpush1.bf16.msra.mxu0 %v1487
    %1666 = vmatprep.subr.bf16.mxu0 %v1496
    %1667 = vmatpush1.bf16.msra.mxu0 %v1495
    %1668 = vmatprep.subr.bf16.mxu0 %v1504
    %1669 = vmatpush1.bf16.msra.mxu0 %v1503
    %1670 = vmatprep.mubr.bf16.mxu0 %v1124
    %1671 = vmatmul.mubr.bf16.gmra.mrb[0].mxu0 %v1123
    %v1672 = vpop.f32.mrb[0].mxu0
    %v1673 = vadd.f32 %v1630, %v1672
    %v1674 = vpop.f32.mrb[0].mxu0
    %v1675 = vadd.f32 %v1632, %v1674
    %v1676 = vpop.f32.mrb[0].mxu0
    %v1677 = vadd.f32 %v1634, %v1676
    %v1678 = vpop.f32.mrb[0].mxu0
    %v1679 = vadd.f32 %v1636, %v1678
    %1680 = vdwg.mxu0
    %1681 = vmatprep.subr.bf16.mxu0 %v1258
    %1682 = vmatpush1.bf16.msra.mxu0 %v1257
    %1683 = vmatprep.subr.bf16.mxu0 %v1266
    %1684 = vmatpush1.bf16.msra.mxu0 %v1265
    %1685 = vmatprep.subr.bf16.mxu0 %v1274
    %1686 = vmatpush1.bf16.msra.mxu0 %v1273
    %1687 = vmatprep.subr.bf16.mxu0 %v1282
    %1688 = vmatpush1.bf16.msra.mxu0 %v1281
    %1689 = vmatprep.subr.bf16.mxu0 %v1290
    %1690 = vmatpush1.bf16.msra.mxu0 %v1289
    %1691 = vmatprep.subr.bf16.mxu0 %v1298
    %1692 = vmatpush1.bf16.msra.mxu0 %v1297
    %1693 = vmatprep.subr.bf16.mxu0 %v1306
    %1694 = vmatpush1.bf16.msra.mxu0 %v1305
    %1695 = vmatprep.subr.bf16.mxu0 %v1314
    %1696 = vmatpush1.bf16.msra.mxu0 %v1313
    %1697 = vmatprep.subr.bf16.mxu0 %v1322
    %1698 = vmatpush1.bf16.msra.mxu0 %v1321
    %1699 = vmatprep.subr.bf16.mxu0 %v1330
    %1700 = vmatpush1.bf16.msra.mxu0 %v1329
    %1701 = vmatprep.subr.bf16.mxu0 %v1338
    %1702 = vmatpush1.bf16.msra.mxu0 %v1337
    %1703 = vmatprep.subr.bf16.mxu0 %v1346
    %1704 = vmatpush1.bf16.msra.mxu0 %v1345
    %1705 = vmatprep.subr.bf16.mxu0 %v1354
    %1706 = vmatpush1.bf16.msra.mxu0 %v1353
    %1707 = vmatprep.subr.bf16.mxu0 %v1362
    %1708 = vmatpush1.bf16.msra.mxu0 %v1361
    %1709 = vmatprep.subr.bf16.mxu0 %v1370
    %1710 = vmatpush1.bf16.msra.mxu0 %v1369
    %1711 = vmatprep.subr.bf16.mxu0 %v1378
    %1712 = vmatpush1.bf16.msra.mxu0 %v1377
    %1713 = vmatprep.mubr.bf16.mxu0 %v1122
    %1714 = vmatmul.mubr.bf16.gmra.mrb[0].mxu0 %v1121
    %v1715 = vpop.f32.mrb[0].mxu0
    %v1716 = vadd.f32 0.0, %v1715
    %v1717 = vpop.f32.mrb[0].mxu0
    %v1718 = vadd.f32 0.0, %v1717
    %v1719 = vpop.f32.mrb[0].mxu0
    %v1720 = vadd.f32 0.0, %v1719
    %v1721 = vpop.f32.mrb[0].mxu0
    %v1722 = vadd.f32 0.0, %v1721
    %1723 = vdwg.mxu0
    %1724 = vmatprep.subr.bf16.mxu0 %v1386
    %1725 = vmatpush1.bf16.msra.mxu0 %v1385
    %1726 = vmatprep.subr.bf16.mxu0 %v1394
    %1727 = vmatpush1.bf16.msra.mxu0 %v1393
    %1728 = vmatprep.subr.bf16.mxu0 %v1402
    %1729 = vmatpush1.bf16.msra.mxu0 %v1401
    %1730 = vmatprep.subr.bf16.mxu0 %v1410
    %1731 = vmatpush1.bf16.msra.mxu0 %v1409
    %1732 = vmatprep.subr.bf16.mxu0 %v1418
    %1733 = vmatpush1.bf16.msra.mxu0 %v1417
    %1734 = vmatprep.subr.bf16.mxu0 %v1426
    %1735 = vmatpush1.bf16.msra.mxu0 %v1425
    %1736 = vmatprep.subr.bf16.mxu0 %v1434
    %1737 = vmatpush1.bf16.msra.mxu0 %v1433
    %1738 = vmatprep.subr.bf16.mxu0 %v1442
    %1739 = vmatpush1.bf16.msra.mxu0 %v1441
    %1740 = vmatprep.subr.bf16.mxu0 %v1450
    %1741 = vmatpush1.bf16.msra.mxu0 %v1449
    %1742 = vmatprep.subr.bf16.mxu0 %v1458
    %1743 = vmatpush1.bf16.msra.mxu0 %v1457
    %1744 = vmatprep.subr.bf16.mxu0 %v1466
    %1745 = vmatpush1.bf16.msra.mxu0 %v1465
    %1746 = vmatprep.subr.bf16.mxu0 %v1474
    %1747 = vmatpush1.bf16.msra.mxu0 %v1473
    %1748 = vmatprep.subr.bf16.mxu0 %v1482
    %1749 = vmatpush1.bf16.msra.mxu0 %v1481
    %1750 = vmatprep.subr.bf16.mxu0 %v1490
    %1751 = vmatpush1.bf16.msra.mxu0 %v1489
    %1752 = vmatprep.subr.bf16.mxu0 %v1498
    %1753 = vmatpush1.bf16.msra.mxu0 %v1497
    %1754 = vmatprep.subr.bf16.mxu0 %v1506
    %1755 = vmatpush1.bf16.msra.mxu0 %v1505
    %1756 = vmatprep.mubr.bf16.mxu0 %v1124
    %1757 = vmatmul.mubr.bf16.gmra.mrb[0].mxu0 %v1123
    %v1758 = vpop.f32.mrb[0].mxu0
    %v1759 = vadd.f32 %v1716, %v1758
    %v1760 = vpop.f32.mrb[0].mxu0
    %v1761 = vadd.f32 %v1718, %v1760
    %v1762 = vpop.f32.mrb[0].mxu0
    %v1763 = vadd.f32 %v1720, %v1762
    %v1764 = vpop.f32.mrb[0].mxu0
    %v1765 = vadd.f32 %v1722, %v1764
    %1766 = vdwg.mxu0
    %1767 = vmatprep.subr.bf16.mxu0 %v1260
    %1768 = vmatpush1.bf16.msra.mxu0 %v1259
    %1769 = vmatprep.subr.bf16.mxu0 %v1268
    %1770 = vmatpush1.bf16.msra.mxu0 %v1267
    %1771 = vmatprep.subr.bf16.mxu0 %v1276
    %1772 = vmatpush1.bf16.msra.mxu0 %v1275
    %1773 = vmatprep.subr.bf16.mxu0 %v1284
    %1774 = vmatpush1.bf16.msra.mxu0 %v1283
    %1775 = vmatprep.subr.bf16.mxu0 %v1292
    %1776 = vmatpush1.bf16.msra.mxu0 %v1291
    %1777 = vmatprep.subr.bf16.mxu0 %v1300
    %1778 = vmatpush1.bf16.msra.mxu0 %v1299
    %1779 = vmatprep.subr.bf16.mxu0 %v1308
    %1780 = vmatpush1.bf16.msra.mxu0 %v1307
    %1781 = vmatprep.subr.bf16.mxu0 %v1316
    %1782 = vmatpush1.bf16.msra.mxu0 %v1315
    %1783 = vmatprep.subr.bf16.mxu0 %v1324
    %1784 = vmatpush1.bf16.msra.mxu0 %v1323
    %1785 = vmatprep.subr.bf16.mxu0 %v1332
    %1786 = vmatpush1.bf16.msra.mxu0 %v1331
    %1787 = vmatprep.subr.bf16.mxu0 %v1340
    %1788 = vmatpush1.bf16.msra.mxu0 %v1339
    %1789 = vmatprep.subr.bf16.mxu0 %v1348
    %1790 = vmatpush1.bf16.msra.mxu0 %v1347
    %1791 = vmatprep.subr.bf16.mxu0 %v1356
    %1792 = vmatpush1.bf16.msra.mxu0 %v1355
    %1793 = vmatprep.subr.bf16.mxu0 %v1364
    %1794 = vmatpush1.bf16.msra.mxu0 %v1363
    %1795 = vmatprep.subr.bf16.mxu0 %v1372
    %1796 = vmatpush1.bf16.msra.mxu0 %v1371
    %1797 = vmatprep.subr.bf16.mxu0 %v1380
    %1798 = vmatpush1.bf16.msra.mxu0 %v1379
    %1799 = vmatprep.mubr.bf16.mxu0 %v1122
    %1800 = vmatmul.mubr.bf16.gmra.mrb[0].mxu0 %v1121
    %v1801 = vpop.f32.mrb[0].mxu0
    %v1802 = vadd.f32 0.0, %v1801
    %v1803 = vpop.f32.mrb[0].mxu0
    %v1804 = vadd.f32 0.0, %v1803
    %v1805 = vpop.f32.mrb[0].mxu0
    %v1806 = vadd.f32 0.0, %v1805
    %v1807 = vpop.f32.mrb[0].mxu0
    %v1808 = vadd.f32 0.0, %v1807
    %1809 = vdwg.mxu0
    %1810 = vmatprep.subr.bf16.mxu0 %v1388
    %1811 = vmatpush1.bf16.msra.mxu0 %v1387
    %1812 = vmatprep.subr.bf16.mxu0 %v1396
    %1813 = vmatpush1.bf16.msra.mxu0 %v1395
    %1814 = vmatprep.subr.bf16.mxu0 %v1404
    %1815 = vmatpush1.bf16.msra.mxu0 %v1403
    %1816 = vmatprep.subr.bf16.mxu0 %v1412
    %1817 = vmatpush1.bf16.msra.mxu0 %v1411
    %1818 = vmatprep.subr.bf16.mxu0 %v1420
    %1819 = vmatpush1.bf16.msra.mxu0 %v1419
    %1820 = vmatprep.subr.bf16.mxu0 %v1428
    %1821 = vmatpush1.bf16.msra.mxu0 %v1427
    %1822 = vmatprep.subr.bf16.mxu0 %v1436
    %1823 = vmatpush1.bf16.msra.mxu0 %v1435
    %1824 = vmatprep.subr.bf16.mxu0 %v1444
    %1825 = vmatpush1.bf16.msra.mxu0 %v1443
    %1826 = vmatprep.subr.bf16.mxu0 %v1452
    %1827 = vmatpush1.bf16.msra.mxu0 %v1451
    %1828 = vmatprep.subr.bf16.mxu0 %v1460
    %1829 = vmatpush1.bf16.msra.mxu0 %v1459
    %1830 = vmatprep.subr.bf16.mxu0 %v1468
    %1831 = vmatpush1.bf16.msra.mxu0 %v1467
    %1832 = vmatprep.subr.bf16.mxu0 %v1476
    %1833 = vmatpush1.bf16.msra.mxu0 %v1475
    %1834 = vmatprep.subr.bf16.mxu0 %v1484
    %1835 = vmatpush1.bf16.msra.mxu0 %v1483
    %1836 = vmatprep.subr.bf16.mxu0 %v1492
    %1837 = vmatpush1.bf16.msra.mxu0 %v1491
    %1838 = vmatprep.subr.bf16.mxu0 %v1500
    %1839 = vmatpush1.bf16.msra.mxu0 %v1499
    %1840 = vmatprep.subr.bf16.mxu0 %v1508
    %1841 = vmatpush1.bf16.msra.mxu0 %v1507
    %1842 = vmatprep.mubr.bf16.mxu0 %v1124
    %1843 = vmatmul.mubr.bf16.gmra.mrb[0].mxu0 %v1123
    %v1844 = vpop.f32.mrb[0].mxu0
    %v1845 = vadd.f32 %v1802, %v1844
    %v1846 = vpop.f32.mrb[0].mxu0
    %v1847 = vadd.f32 %v1804, %v1846
    %v1848 = vpop.f32.mrb[0].mxu0
    %v1849 = vadd.f32 %v1806, %v1848
    %v1850 = vpop.f32.mrb[0].mxu0
    %v1851 = vadd.f32 %v1808, %v1850
    %1852 = vdwg.mxu0
    %v1853 = vadd.f32 %v1587, %v1591
    %v1854 = vrot.slane %v1853, 4
    %v1855 = vadd.f32 %v1853, %v1854
    %v1856 = vrot.slane %v1855, 2
    %v1857 = vadd.f32 %v1855, %v1856
    %v1858 = vrot.slane %v1857, 1
    %v1859 = vadd.f32 %v1857, %v1858
    %v1860 = vadd.f32 %v1589, %v1593
    %v1861 = vrot.slane %v1860, 4
    %v1862 = vadd.f32 %v1860, %v1861
    %v1863 = vrot.slane %v1862, 2
    %v1864 = vadd.f32 %v1862, %v1863
    %v1865 = vrot.slane %v1864, 1
    %v1866 = vadd.f32 %v1864, %v1865
    %v1867 = vadd.f32 %v1673, %v1677
    %v1868 = vrot.slane %v1867, 4
    %v1869 = vadd.f32 %v1867, %v1868
    %v1870 = vrot.slane %v1869, 2
    %v1871 = vadd.f32 %v1869, %v1870
    %v1872 = vrot.slane %v1871, 1
    %v1873 = vadd.f32 %v1871, %v1872
    %v1874 = vadd.f32 %v1675, %v1679
    %v1875 = vrot.slane %v1874, 4
    %v1876 = vadd.f32 %v1874, %v1875
    %v1877 = vrot.slane %v1876, 2
    %v1878 = vadd.f32 %v1876, %v1877
    %v1879 = vrot.slane %v1878, 1
    %v1880 = vadd.f32 %v1878, %v1879
    %v1881 = vadd.f32 %v1759, %v1763
    %v1882 = vrot.slane %v1881, 4
    %v1883 = vadd.f32 %v1881, %v1882
    %v1884 = vrot.slane %v1883, 2
    %v1885 = vadd.f32 %v1883, %v1884
    %v1886 = vrot.slane %v1885, 1
    %v1887 = vadd.f32 %v1885, %v1886
    %v1888 = vadd.f32 %v1761, %v1765
    %v1889 = vrot.slane %v1888, 4
    %v1890 = vadd.f32 %v1888, %v1889
    %v1891 = vrot.slane %v1890, 2
    %v1892 = vadd.f32 %v1890, %v1891
    %v1893 = vrot.slane %v1892, 1
    %v1894 = vadd.f32 %v1892, %v1893
    %v1895 = vadd.f32 %v1845, %v1849
    %v1896 = vrot.slane %v1895, 4
    %v1897 = vadd.f32 %v1895, %v1896
    %v1898 = vrot.slane %v1897, 2
    %v1899 = vadd.f32 %v1897, %v1898
    %v1900 = vrot.slane %v1899, 1
    %v1901 = vadd.f32 %v1899, %v1900
    %v1902 = vadd.f32 %v1847, %v1851
    %v1903 = vrot.slane %v1902, 4
    %v1904 = vadd.f32 %v1902, %v1903
    %v1905 = vrot.slane %v1904, 2
    %v1906 = vadd.f32 %v1904, %v1905
    %v1907 = vrot.slane %v1906, 1
    %v1908 = vadd.f32 %v1906, %v1907
    %v1909 = vmul.f32 %v1859, %v272
    %v1910 = vmul.f32 %v1866, %v272
    %v1911 = vmul.f32 %v1873, %v272
    %v1912 = vmul.f32 %v1880, %v272
    %v1913 = vmul.f32 %v1887, %v272
    %v1914 = vmul.f32 %v1894, %v272
    %v1915 = vmul.f32 %v1901, %v272
    %v1916 = vmul.f32 %v1908, %v272
    %v1917 = vmul.f32 %v1587, %v1587
    %v1918 = vmul.f32 %v1589, %v1589
    %v1919 = vmul.f32 %v1673, %v1673
    %v1920 = vmul.f32 %v1675, %v1675
    %v1921 = vmul.f32 %v1759, %v1759
    %v1922 = vmul.f32 %v1761, %v1761
    %v1923 = vmul.f32 %v1845, %v1845
    %v1924 = vmul.f32 %v1847, %v1847
    %v1925 = vmul.f32 %v1591, %v1591
    %v1926 = vmul.f32 %v1593, %v1593
    %v1927 = vmul.f32 %v1677, %v1677
    %v1928 = vmul.f32 %v1679, %v1679
    %v1929 = vmul.f32 %v1763, %v1763
    %v1930 = vmul.f32 %v1765, %v1765
    %v1931 = vmul.f32 %v1849, %v1849
    %v1932 = vmul.f32 %v1851, %v1851
    %v1933 = vadd.f32 %v1917, %v1925
    %v1934 = vrot.slane %v1933, 4
    %v1935 = vadd.f32 %v1933, %v1934
    %v1936 = vrot.slane %v1935, 2
    %v1937 = vadd.f32 %v1935, %v1936
    %v1938 = vrot.slane %v1937, 1
    %v1939 = vadd.f32 %v1937, %v1938
    %v1940 = vadd.f32 %v1918, %v1926
    %v1941 = vrot.slane %v1940, 4
    %v1942 = vadd.f32 %v1940, %v1941
    %v1943 = vrot.slane %v1942, 2
    %v1944 = vadd.f32 %v1942, %v1943
    %v1945 = vrot.slane %v1944, 1
    %v1946 = vadd.f32 %v1944, %v1945
    %v1947 = vadd.f32 %v1919, %v1927
    %v1948 = vrot.slane %v1947, 4
    %v1949 = vadd.f32 %v1947, %v1948
    %v1950 = vrot.slane %v1949, 2
    %v1951 = vadd.f32 %v1949, %v1950
    %v1952 = vrot.slane %v1951, 1
    %v1953 = vadd.f32 %v1951, %v1952
    %v1954 = vadd.f32 %v1920, %v1928
    %v1955 = vrot.slane %v1954, 4
    %v1956 = vadd.f32 %v1954, %v1955
    %v1957 = vrot.slane %v1956, 2
    %v1958 = vadd.f32 %v1956, %v1957
    %v1959 = vrot.slane %v1958, 1
    %v1960 = vadd.f32 %v1958, %v1959
    %v1961 = vadd.f32 %v1921, %v1929
    %v1962 = vrot.slane %v1961, 4
    %v1963 = vadd.f32 %v1961, %v1962
    %v1964 = vrot.slane %v1963, 2
    %v1965 = vadd.f32 %v1963, %v1964
    %v1966 = vrot.slane %v1965, 1
    %v1967 = vadd.f32 %v1965, %v1966
    %v1968 = vadd.f32 %v1922, %v1930
    %v1969 = vrot.slane %v1968, 4
    %v1970 = vadd.f32 %v1968, %v1969
    %v1971 = vrot.slane %v1970, 2
    %v1972 = vadd.f32 %v1970, %v1971
    %v1973 = vrot.slane %v1972, 1
    %v1974 = vadd.f32 %v1972, %v1973
    %v1975 = vadd.f32 %v1923, %v1931
    %v1976 = vrot.slane %v1975, 4
    %v1977 = vadd.f32 %v1975, %v1976
    %v1978 = vrot.slane %v1977, 2
    %v1979 = vadd.f32 %v1977, %v1978
    %v1980 = vrot.slane %v1979, 1
    %v1981 = vadd.f32 %v1979, %v1980
    %v1982 = vadd.f32 %v1924, %v1932
    %v1983 = vrot.slane %v1982, 4
    %v1984 = vadd.f32 %v1982, %v1983
    %v1985 = vrot.slane %v1984, 2
    %v1986 = vadd.f32 %v1984, %v1985
    %v1987 = vrot.slane %v1986, 1
    %v1988 = vadd.f32 %v1986, %v1987
    %v1989 = vmul.f32 %v1939, %v272
    %v1990 = vmul.f32 %v1946, %v272
    %v1991 = vmul.f32 %v1953, %v272
    %v1992 = vmul.f32 %v1960, %v272
    %v1993 = vmul.f32 %v1967, %v272
    %v1994 = vmul.f32 %v1974, %v272
    %v1995 = vmul.f32 %v1981, %v272
    %v1996 = vmul.f32 %v1988, %v272
    %v1997 = vmul.f32 %v1909, %v1909
    %v1998 = vmul.f32 %v1910, %v1910
    %v1999 = vmul.f32 %v1911, %v1911
    %v2000 = vmul.f32 %v1912, %v1912
    %v2001 = vmul.f32 %v1913, %v1913
    %v2002 = vmul.f32 %v1914, %v1914
    %v2003 = vmul.f32 %v1915, %v1915
    %v2004 = vmul.f32 %v1916, %v1916
    %v2005 = vsub.f32 %v1989, %v1997
    %v2006 = vsub.f32 %v1990, %v1998
    %v2007 = vsub.f32 %v1991, %v1999
    %v2008 = vsub.f32 %v1992, %v2000
    %v2009 = vsub.f32 %v1993, %v2001
    %v2010 = vsub.f32 %v1994, %v2002
    %v2011 = vsub.f32 %v1995, %v2003
    %v2012 = vsub.f32 %v1996, %v2004
    %v2013 = vmax.f32 %v2005, 0.0
    %v2014 = vmax.f32 %v2006, 0.0
    %v2015 = vmax.f32 %v2007, 0.0
    %v2016 = vmax.f32 %v2008, 0.0
    %v2017 = vmax.f32 %v2009, 0.0
    %v2018 = vmax.f32 %v2010, 0.0
    %v2019 = vmax.f32 %v2011, 0.0
    %v2020 = vmax.f32 %v2012, 0.0
    %v2021 = vld [vmem:[%s10] sm:$0xff]
    %v2022 = vld [vmem:[%s11] sm:$0xff]
    %v2023 = vmul.f32 %v2022, %v2021
    %v2024 = vmul.f32 %v2021, %v2021
    %v2026 = vlaneseq
    %v2027 = vshrl.u32 %v2026, 7
    %v2028 = vsub.s32 0, %v2027
    %v2029 = vrot.slane %v2024, %v2028
    %v2030 = vlaneseq
    %v2031 = vshrl.u32 %v2030, 7
    %v2032 = vsub.s32 1, %v2031
    %v2033 = vrot.slane %v2024, %v2032
    %v2034 = vlaneseq
    %v2035 = vshrl.u32 %v2034, 7
    %v2036 = vsub.s32 2, %v2035
    %v2037 = vrot.slane %v2024, %v2036
    %v2038 = vlaneseq
    %v2039 = vshrl.u32 %v2038, 7
    %v2040 = vsub.s32 3, %v2039
    %v2041 = vrot.slane %v2024, %v2040
    %v2042 = vlaneseq
    %v2043 = vshrl.u32 %v2042, 7
    %v2044 = vsub.s32 4, %v2043
    %v2045 = vrot.slane %v2024, %v2044
    %v2046 = vlaneseq
    %v2047 = vshrl.u32 %v2046, 7
    %v2048 = vsub.s32 5, %v2047
    %v2049 = vrot.slane %v2024, %v2048
    %v2050 = vlaneseq
    %v2051 = vshrl.u32 %v2050, 7
    %v2052 = vsub.s32 6, %v2051
    %v2053 = vrot.slane %v2024, %v2052
    %v2054 = vlaneseq
    %v2055 = vshrl.u32 %v2054, 7
    %v2056 = vsub.s32 7, %v2055
    %v2057 = vrot.slane %v2024, %v2056
    %v2066 = vmul.f32 %v2013, %v2029
    %v2067 = vmul.f32 %v2014, %v2033
    %v2068 = vmul.f32 %v2015, %v2037
    %v2069 = vmul.f32 %v2016, %v2041
    %v2070 = vmul.f32 %v2017, %v2045
    %v2071 = vmul.f32 %v2018, %v2049
    %v2072 = vmul.f32 %v2019, %v2053
    %v2073 = vmul.f32 %v2020, %v2057
    %v2074 = vadd.f32 %v2066, 1e-05
    %v2075 = vadd.f32 %v2067, 1e-05
    %v2076 = vadd.f32 %v2068, 1e-05
    %v2077 = vadd.f32 %v2069, 1e-05
    %v2078 = vadd.f32 %v2070, 1e-05
    %v2079 = vadd.f32 %v2071, 1e-05
    %v2080 = vadd.f32 %v2072, 1e-05
    %v2081 = vadd.f32 %v2073, 1e-05
    %v2082 = vrsqrt.pop %v2074
    %v2083 = vrsqrt.pop %v2075
    %v2084 = vrsqrt.pop %v2076
    %v2085 = vrsqrt.pop %v2077
    %v2086 = vrsqrt.pop %v2078
    %v2087 = vrsqrt.pop %v2079
    %v2088 = vrsqrt.pop %v2080
    %v2089 = vrsqrt.pop %v2081
    %v2098 = vcombine.low %v2082, %v2083
    %v2099 = vcombine.low %v2084, %v2085
    %v2100 = vcombine.low %v2086, %v2087
    %v2101 = vcombine.low %v2088, %v2089
    %v2103 = vunpack.c.l.s4 1966171168
    %v2104 = vunpack.c.0.s8 %v2103
    %v2105 = vlaneseq
    %v2106 = vshrl.u32 %v2105, 7
    %v2107 = vsub.s32 %v2104, %v2106
    %v2108 = vrot.slane %v2098, %v2107
    %v2110 = vunpack.c.l.s4 1966171168
    %v2111 = vunpack.c.0.s8 %v2110
    %v2112 = vlaneseq
    %v2113 = vshrl.u32 %v2112, 7
    %v2114 = vsub.s32 %v2111, %v2113
    %v2115 = vrot.slane %v2099, %v2114
    %v2117 = vunpack.c.l.s4 1966171168
    %v2118 = vunpack.c.0.s8 %v2117
    %v2119 = vlaneseq
    %v2120 = vshrl.u32 %v2119, 7
    %v2121 = vsub.s32 %v2118, %v2120
    %v2122 = vrot.slane %v2100, %v2121
    %v2124 = vunpack.c.l.s4 1966171168
    %v2125 = vunpack.c.0.s8 %v2124
    %v2126 = vlaneseq
    %v2127 = vshrl.u32 %v2126, 7
    %v2128 = vsub.s32 %v2125, %v2127
    %v2129 = vrot.slane %v2101, %v2128
    %v2130 = vcombine.low %v2108, %v2115
    %v2131 = vcombine.low %v2122, %v2129
    %v2133 = vunpack.c.l.s4 1966171168
    %v2134 = vunpack.c.0.s8 %v2133
    %v2135 = vlaneseq
    %v2136 = vshrl.u32 %v2135, 7
    %v2137 = vsub.s32 %v2134, %v2136
    %v2138 = vrot.slane %v2130, %v2137
    %v2140 = vunpack.c.l.s4 1966171168
    %v2141 = vunpack.c.0.s8 %v2140
    %v2142 = vlaneseq
    %v2143 = vshrl.u32 %v2142, 7
    %v2144 = vsub.s32 %v2141, %v2143
    %v2145 = vrot.slane %v2131, %v2144
    %v2146 = vcombine.low %v2138, %v2145
    %v2148 = vmul.f32 %v2023, %v2146
    %v2149 = vld [vmem:[%s12] sm:$0xff]
    %v2151 = vlaneseq
    %v2152 = vshrl.u32 %v2151, 7
    %v2153 = vsub.s32 0, %v2152
    %v2154 = vrot.slane %v2148, %v2153
    %v2155 = vlaneseq
    %v2156 = vshrl.u32 %v2155, 7
    %v2157 = vsub.s32 1, %v2156
    %v2158 = vrot.slane %v2148, %v2157
    %v2159 = vlaneseq
    %v2160 = vshrl.u32 %v2159, 7
    %v2161 = vsub.s32 2, %v2160
    %v2162 = vrot.slane %v2148, %v2161
    %v2163 = vlaneseq
    %v2164 = vshrl.u32 %v2163, 7
    %v2165 = vsub.s32 3, %v2164
    %v2166 = vrot.slane %v2148, %v2165
    %v2167 = vlaneseq
    %v2168 = vshrl.u32 %v2167, 7
    %v2169 = vsub.s32 4, %v2168
    %v2170 = vrot.slane %v2148, %v2169
    %v2171 = vlaneseq
    %v2172 = vshrl.u32 %v2171, 7
    %v2173 = vsub.s32 5, %v2172
    %v2174 = vrot.slane %v2148, %v2173
    %v2175 = vlaneseq
    %v2176 = vshrl.u32 %v2175, 7
    %v2177 = vsub.s32 6, %v2176
    %v2178 = vrot.slane %v2148, %v2177
    %v2179 = vlaneseq
    %v2180 = vshrl.u32 %v2179, 7
    %v2181 = vsub.s32 7, %v2180
    %v2182 = vrot.slane %v2148, %v2181
    %v2191 = vmul.f32 %v1909, %v2154
    %v2192 = vmul.f32 %v1910, %v2158
    %v2193 = vmul.f32 %v1911, %v2162
    %v2194 = vmul.f32 %v1912, %v2166
    %v2195 = vmul.f32 %v1913, %v2170
    %v2196 = vmul.f32 %v1914, %v2174
    %v2197 = vmul.f32 %v1915, %v2178
    %v2198 = vmul.f32 %v1916, %v2182
    %v2207 = vcombine.low %v2191, %v2192
    %v2208 = vcombine.low %v2193, %v2194
    %v2209 = vcombine.low %v2195, %v2196
    %v2210 = vcombine.low %v2197, %v2198
    %v2212 = vunpack.c.l.s4 1966171168
    %v2213 = vunpack.c.0.s8 %v2212
    %v2214 = vlaneseq
    %v2215 = vshrl.u32 %v2214, 7
    %v2216 = vsub.s32 %v2213, %v2215
    %v2217 = vrot.slane %v2207, %v2216
    %v2219 = vunpack.c.l.s4 1966171168
    %v2220 = vunpack.c.0.s8 %v2219
    %v2221 = vlaneseq
    %v2222 = vshrl.u32 %v2221, 7
    %v2223 = vsub.s32 %v2220, %v2222
    %v2224 = vrot.slane %v2208, %v2223
    %v2226 = vunpack.c.l.s4 1966171168
    %v2227 = vunpack.c.0.s8 %v2226
    %v2228 = vlaneseq
    %v2229 = vshrl.u32 %v2228, 7
    %v2230 = vsub.s32 %v2227, %v2229
    %v2231 = vrot.slane %v2209, %v2230
    %v2233 = vunpack.c.l.s4 1966171168
    %v2234 = vunpack.c.0.s8 %v2233
    %v2235 = vlaneseq
    %v2236 = vshrl.u32 %v2235, 7
    %v2237 = vsub.s32 %v2234, %v2236
    %v2238 = vrot.slane %v2210, %v2237
    %v2239 = vcombine.low %v2217, %v2224
    %v2240 = vcombine.low %v2231, %v2238
    %v2242 = vunpack.c.l.s4 1966171168
    %v2243 = vunpack.c.0.s8 %v2242
    %v2244 = vlaneseq
    %v2245 = vshrl.u32 %v2244, 7
    %v2246 = vsub.s32 %v2243, %v2245
    %v2247 = vrot.slane %v2239, %v2246
    %v2249 = vunpack.c.l.s4 1966171168
    %v2250 = vunpack.c.0.s8 %v2249
    %v2251 = vlaneseq
    %v2252 = vshrl.u32 %v2251, 7
    %v2253 = vsub.s32 %v2250, %v2252
    %v2254 = vrot.slane %v2240, %v2253
    %v2255 = vcombine.low %v2247, %v2254
    %v2257 = vsub.f32 %v2149, %v2255
    %v2258 = vmul.f32 %v1587, %v2154
    %v2259 = vmul.f32 %v1589, %v2158
    %v2260 = vmul.f32 %v1673, %v2162
    %v2261 = vmul.f32 %v1675, %v2166
    %v2262 = vmul.f32 %v1759, %v2170
    %v2263 = vmul.f32 %v1761, %v2174
    %v2264 = vmul.f32 %v1845, %v2178
    %v2265 = vmul.f32 %v1847, %v2182
    %v2266 = vmul.f32 %v1591, %v2154
    %v2267 = vmul.f32 %v1593, %v2158
    %v2268 = vmul.f32 %v1677, %v2162
    %v2269 = vmul.f32 %v1679, %v2166
    %v2270 = vmul.f32 %v1763, %v2170
    %v2271 = vmul.f32 %v1765, %v2174
    %v2272 = vmul.f32 %v1849, %v2178
    %v2273 = vmul.f32 %v1851, %v2182
    %v2275 = vlaneseq
    %v2276 = vshrl.u32 %v2275, 7
    %v2277 = vsub.s32 0, %v2276
    %v2278 = vrot.slane %v2257, %v2277
    %v2279 = vlaneseq
    %v2280 = vshrl.u32 %v2279, 7
    %v2281 = vsub.s32 1, %v2280
    %v2282 = vrot.slane %v2257, %v2281
    %v2283 = vlaneseq
    %v2284 = vshrl.u32 %v2283, 7
    %v2285 = vsub.s32 2, %v2284
    %v2286 = vrot.slane %v2257, %v2285
    %v2287 = vlaneseq
    %v2288 = vshrl.u32 %v2287, 7
    %v2289 = vsub.s32 3, %v2288
    %v2290 = vrot.slane %v2257, %v2289
    %v2291 = vlaneseq
    %v2292 = vshrl.u32 %v2291, 7
    %v2293 = vsub.s32 4, %v2292
    %v2294 = vrot.slane %v2257, %v2293
    %v2295 = vlaneseq
    %v2296 = vshrl.u32 %v2295, 7
    %v2297 = vsub.s32 5, %v2296
    %v2298 = vrot.slane %v2257, %v2297
    %v2299 = vlaneseq
    %v2300 = vshrl.u32 %v2299, 7
    %v2301 = vsub.s32 6, %v2300
    %v2302 = vrot.slane %v2257, %v2301
    %v2303 = vlaneseq
    %v2304 = vshrl.u32 %v2303, 7
    %v2305 = vsub.s32 7, %v2304
    %v2306 = vrot.slane %v2257, %v2305
    %v2315 = vadd.f32 %v2258, %v2278
    %v2316 = vadd.f32 %v2259, %v2282
    %v2317 = vadd.f32 %v2260, %v2286
    %v2318 = vadd.f32 %v2261, %v2290
    %v2319 = vadd.f32 %v2262, %v2294
    %v2320 = vadd.f32 %v2263, %v2298
    %v2321 = vadd.f32 %v2264, %v2302
    %v2322 = vadd.f32 %v2265, %v2306
    %v2323 = vadd.f32 %v2266, %v2278
    %v2324 = vadd.f32 %v2267, %v2282
    %v2325 = vadd.f32 %v2268, %v2286
    %v2326 = vadd.f32 %v2269, %v2290
    %v2327 = vadd.f32 %v2270, %v2294
    %v2328 = vadd.f32 %v2271, %v2298
    %v2329 = vadd.f32 %v2272, %v2302
    %v2330 = vadd.f32 %v2273, %v2306
    %v2331 = vmax.f32 %v2315, 0.0
    %v2332 = vmax.f32 %v2316, 0.0
    %v2333 = vmax.f32 %v2317, 0.0
    %v2334 = vmax.f32 %v2318, 0.0
    %v2335 = vmax.f32 %v2319, 0.0
    %v2336 = vmax.f32 %v2320, 0.0
    %v2337 = vmax.f32 %v2321, 0.0
    %v2338 = vmax.f32 %v2322, 0.0
    %v2339 = vmax.f32 %v2323, 0.0
    %v2340 = vmax.f32 %v2324, 0.0
    %v2341 = vmax.f32 %v2325, 0.0
    %v2342 = vmax.f32 %v2326, 0.0
    %v2343 = vmax.f32 %v2327, 0.0
    %v2344 = vmax.f32 %v2328, 0.0
    %v2345 = vmax.f32 %v2329, 0.0
    %v2346 = vmax.f32 %v2330, 0.0
    %s2347 = smul.u32 2, 128
    %s2348 = smul.u32 %s2347, 7
    %s2349 = sshll.u32 %s2348, 4
    %2350 = dma.done %s90, %s2349
    %v2351 = vpack.c.bf16 %v2339, %v2331
    %v2352 = vpack.c.bf16 %v2340, %v2332
    %v2353 = vpack.c.bf16 %v2341, %v2333
    %v2354 = vpack.c.bf16 %v2342, %v2334
    %v2355 = vpack.c.bf16 %v2343, %v2335
    %v2356 = vpack.c.bf16 %v2344, %v2336
    %v2357 = vpack.c.bf16 %v2345, %v2337
    %v2358 = vpack.c.bf16 %v2346, %v2338
    %v2359 = vld [vmem:[#allocation3] sm:$0xff]
    %v2360 = vld [vmem:[#allocation3 + $0x8] sm:$0xff]
    %v2361 = vld [vmem:[#allocation3 + $0x10] sm:$0xff]
    %v2362 = vld [vmem:[#allocation3 + $0x18] sm:$0xff]
    %v2363 = vld [vmem:[#allocation3 + $0x20] sm:$0xff]
    %v2364 = vld [vmem:[#allocation3 + $0x28] sm:$0xff]
    %v2365 = vld [vmem:[#allocation3 + $0x30] sm:$0xff]
    %v2366 = vld [vmem:[#allocation3 + $0x38] sm:$0xff]
    %v2367 = vld [vmem:[#allocation3 + $0x40] sm:$0xff]
    %v2368 = vld [vmem:[#allocation3 + $0x48] sm:$0xff]
    %v2369 = vld [vmem:[#allocation3 + $0x50] sm:$0xff]
    %v2370 = vld [vmem:[#allocation3 + $0x58] sm:$0xff]
    %v2371 = vld [vmem:[#allocation3 + $0x60] sm:$0xff]
    %v2372 = vld [vmem:[#allocation3 + $0x68] sm:$0xff]
    %v2373 = vld [vmem:[#allocation3 + $0x70] sm:$0xff]
    %v2374 = vld [vmem:[#allocation3 + $0x78] sm:$0xff]
    %v2375 = vld [vmem:[#allocation3 + $0x80] sm:$0xff]
    %v2376 = vld [vmem:[#allocation3 + $0x88] sm:$0xff]
    %v2377 = vld [vmem:[#allocation3 + $0x90] sm:$0xff]
    %v2378 = vld [vmem:[#allocation3 + $0x98] sm:$0xff]
    %v2379 = vld [vmem:[#allocation3 + $0xa0] sm:$0xff]
    %v2380 = vld [vmem:[#allocation3 + $0xa8] sm:$0xff]
    %v2381 = vld [vmem:[#allocation3 + $0xb0] sm:$0xff]
    %v2382 = vld [vmem:[#allocation3 + $0xb8] sm:$0xff]
    %v2383 = vld [vmem:[#allocation3 + $0xc0] sm:$0xff]
    %v2384 = vld [vmem:[#allocation3 + $0xc8] sm:$0xff]
    %v2385 = vld [vmem:[#allocation3 + $0xd0] sm:$0xff]
    %v2386 = vld [vmem:[#allocation3 + $0xd8] sm:$0xff]
    %v2387 = vld [vmem:[#allocation3 + $0xe0] sm:$0xff]
    %v2388 = vld [vmem:[#allocation3 + $0xe8] sm:$0xff]
    %v2389 = vld [vmem:[#allocation3 + $0xf0] sm:$0xff]
    %v2390 = vld [vmem:[#allocation3 + $0xf8] sm:$0xff]
    %v2391 = vld [vmem:[#allocation3 + $0x100] sm:$0xff]
    %v2392 = vld [vmem:[#allocation3 + $0x108] sm:$0xff]
    %v2393 = vld [vmem:[#allocation3 + $0x110] sm:$0xff]
    %v2394 = vld [vmem:[#allocation3 + $0x118] sm:$0xff]
    %v2395 = vld [vmem:[#allocation3 + $0x120] sm:$0xff]
    %v2396 = vld [vmem:[#allocation3 + $0x128] sm:$0xff]
    %v2397 = vld [vmem:[#allocation3 + $0x130] sm:$0xff]
    %v2398 = vld [vmem:[#allocation3 + $0x138] sm:$0xff]
    %v2399 = vld [vmem:[#allocation3 + $0x140] sm:$0xff]
    %v2400 = vld [vmem:[#allocation3 + $0x148] sm:$0xff]
    %v2401 = vld [vmem:[#allocation3 + $0x150] sm:$0xff]
    %v2402 = vld [vmem:[#allocation3 + $0x158] sm:$0xff]
    %v2403 = vld [vmem:[#allocation3 + $0x160] sm:$0xff]
    %v2404 = vld [vmem:[#allocation3 + $0x168] sm:$0xff]
    %v2405 = vld [vmem:[#allocation3 + $0x170] sm:$0xff]
    %v2406 = vld [vmem:[#allocation3 + $0x178] sm:$0xff]
    %v2407 = vld [vmem:[#allocation3 + $0x180] sm:$0xff]
    %v2408 = vld [vmem:[#allocation3 + $0x188] sm:$0xff]
    %v2409 = vld [vmem:[#allocation3 + $0x190] sm:$0xff]
    %v2410 = vld [vmem:[#allocation3 + $0x198] sm:$0xff]
    %v2411 = vld [vmem:[#allocation3 + $0x1a0] sm:$0xff]
    %v2412 = vld [vmem:[#allocation3 + $0x1a8] sm:$0xff]
    %v2413 = vld [vmem:[#allocation3 + $0x1b0] sm:$0xff]
    %v2414 = vld [vmem:[#allocation3 + $0x1b8] sm:$0xff]
    %v2415 = vld [vmem:[#allocation3 + $0x1c0] sm:$0xff]
    %v2416 = vld [vmem:[#allocation3 + $0x1c8] sm:$0xff]
    %v2417 = vld [vmem:[#allocation3 + $0x1d0] sm:$0xff]
    %v2418 = vld [vmem:[#allocation3 + $0x1d8] sm:$0xff]
    %v2419 = vld [vmem:[#allocation3 + $0x1e0] sm:$0xff]
    %v2420 = vld [vmem:[#allocation3 + $0x1e8] sm:$0xff]
    %v2421 = vld [vmem:[#allocation3 + $0x1f0] sm:$0xff]
    %v2422 = vld [vmem:[#allocation3 + $0x1f8] sm:$0xff]
    %v2423 = vld [vmem:[#allocation3 + $0x200] sm:$0xff]
    %v2424 = vld [vmem:[#allocation3 + $0x208] sm:$0xff]
    %v2425 = vld [vmem:[#allocation3 + $0x210] sm:$0xff]
    %v2426 = vld [vmem:[#allocation3 + $0x218] sm:$0xff]
    %v2427 = vld [vmem:[#allocation3 + $0x220] sm:$0xff]
    %v2428 = vld [vmem:[#allocation3 + $0x228] sm:$0xff]
    %v2429 = vld [vmem:[#allocation3 + $0x230] sm:$0xff]
    %v2430 = vld [vmem:[#allocation3 + $0x238] sm:$0xff]
    %v2431 = vld [vmem:[#allocation3 + $0x240] sm:$0xff]
    %v2432 = vld [vmem:[#allocation3 + $0x248] sm:$0xff]
    %v2433 = vld [vmem:[#allocation3 + $0x250] sm:$0xff]
    %v2434 = vld [vmem:[#allocation3 + $0x258] sm:$0xff]
    %v2435 = vld [vmem:[#allocation3 + $0x260] sm:$0xff]
    %v2436 = vld [vmem:[#allocation3 + $0x268] sm:$0xff]
    %v2437 = vld [vmem:[#allocation3 + $0x270] sm:$0xff]
    %v2438 = vld [vmem:[#allocation3 + $0x278] sm:$0xff]
    %v2439 = vld [vmem:[#allocation3 + $0x280] sm:$0xff]
    %v2440 = vld [vmem:[#allocation3 + $0x288] sm:$0xff]
    %v2441 = vld [vmem:[#allocation3 + $0x290] sm:$0xff]
    %v2442 = vld [vmem:[#allocation3 + $0x298] sm:$0xff]
    %v2443 = vld [vmem:[#allocation3 + $0x2a0] sm:$0xff]
    %v2444 = vld [vmem:[#allocation3 + $0x2a8] sm:$0xff]
    %v2445 = vld [vmem:[#allocation3 + $0x2b0] sm:$0xff]
    %v2446 = vld [vmem:[#allocation3 + $0x2b8] sm:$0xff]
    %v2447 = vld [vmem:[#allocation3 + $0x2c0] sm:$0xff]
    %v2448 = vld [vmem:[#allocation3 + $0x2c8] sm:$0xff]
    %v2449 = vld [vmem:[#allocation3 + $0x2d0] sm:$0xff]
    %v2450 = vld [vmem:[#allocation3 + $0x2d8] sm:$0xff]
    %v2451 = vld [vmem:[#allocation3 + $0x2e0] sm:$0xff]
    %v2452 = vld [vmem:[#allocation3 + $0x2e8] sm:$0xff]
    %v2453 = vld [vmem:[#allocation3 + $0x2f0] sm:$0xff]
    %v2454 = vld [vmem:[#allocation3 + $0x2f8] sm:$0xff]
    %v2455 = vld [vmem:[#allocation3 + $0x300] sm:$0xff]
    %v2456 = vld [vmem:[#allocation3 + $0x308] sm:$0xff]
    %v2457 = vld [vmem:[#allocation3 + $0x310] sm:$0xff]
    %v2458 = vld [vmem:[#allocation3 + $0x318] sm:$0xff]
    %v2459 = vld [vmem:[#allocation3 + $0x320] sm:$0xff]
    %v2460 = vld [vmem:[#allocation3 + $0x328] sm:$0xff]
    %v2461 = vld [vmem:[#allocation3 + $0x330] sm:$0xff]
    %v2462 = vld [vmem:[#allocation3 + $0x338] sm:$0xff]
    %v2463 = vld [vmem:[#allocation3 + $0x340] sm:$0xff]
    %v2464 = vld [vmem:[#allocation3 + $0x348] sm:$0xff]
    %v2465 = vld [vmem:[#allocation3 + $0x350] sm:$0xff]
    %v2466 = vld [vmem:[#allocation3 + $0x358] sm:$0xff]
    %v2467 = vld [vmem:[#allocation3 + $0x360] sm:$0xff]
    %v2468 = vld [vmem:[#allocation3 + $0x368] sm:$0xff]
    %v2469 = vld [vmem:[#allocation3 + $0x370] sm:$0xff]
    %v2470 = vld [vmem:[#allocation3 + $0x378] sm:$0xff]
    %v2471 = vld [vmem:[#allocation3 + $0x380] sm:$0xff]
    %v2472 = vld [vmem:[#allocation3 + $0x388] sm:$0xff]
    %v2473 = vld [vmem:[#allocation3 + $0x390] sm:$0xff]
    %v2474 = vld [vmem:[#allocation3 + $0x398] sm:$0xff]
    %v2475 = vld [vmem:[#allocation3 + $0x3a0] sm:$0xff]
    %v2476 = vld [vmem:[#allocation3 + $0x3a8] sm:$0xff]
    %v2477 = vld [vmem:[#allocation3 + $0x3b0] sm:$0xff]
    %v2478 = vld [vmem:[#allocation3 + $0x3b8] sm:$0xff]
    %v2479 = vld [vmem:[#allocation3 + $0x3c0] sm:$0xff]
    %v2480 = vld [vmem:[#allocation3 + $0x3c8] sm:$0xff]
    %v2481 = vld [vmem:[#allocation3 + $0x3d0] sm:$0xff]
    %v2482 = vld [vmem:[#allocation3 + $0x3d8] sm:$0xff]
    %v2483 = vld [vmem:[#allocation3 + $0x3e0] sm:$0xff]
    %v2484 = vld [vmem:[#allocation3 + $0x3e8] sm:$0xff]
    %v2485 = vld [vmem:[#allocation3 + $0x3f0] sm:$0xff]
    %v2486 = vld [vmem:[#allocation3 + $0x3f8] sm:$0xff]
    %v2487 = vld [vmem:[#allocation3 + $0x400] sm:$0xff]
    %v2488 = vld [vmem:[#allocation3 + $0x408] sm:$0xff]
    %v2489 = vld [vmem:[#allocation3 + $0x410] sm:$0xff]
    %v2490 = vld [vmem:[#allocation3 + $0x418] sm:$0xff]
    %v2491 = vld [vmem:[#allocation3 + $0x420] sm:$0xff]
    %v2492 = vld [vmem:[#allocation3 + $0x428] sm:$0xff]
    %v2493 = vld [vmem:[#allocation3 + $0x430] sm:$0xff]
    %v2494 = vld [vmem:[#allocation3 + $0x438] sm:$0xff]
    %v2495 = vld [vmem:[#allocation3 + $0x440] sm:$0xff]
    %v2496 = vld [vmem:[#allocation3 + $0x448] sm:$0xff]
    %v2497 = vld [vmem:[#allocation3 + $0x450] sm:$0xff]
    %v2498 = vld [vmem:[#allocation3 + $0x458] sm:$0xff]
    %v2499 = vld [vmem:[#allocation3 + $0x460] sm:$0xff]
    %v2500 = vld [vmem:[#allocation3 + $0x468] sm:$0xff]
    %v2501 = vld [vmem:[#allocation3 + $0x470] sm:$0xff]
    %v2502 = vld [vmem:[#allocation3 + $0x478] sm:$0xff]
    %v2503 = vld [vmem:[#allocation3 + $0x480] sm:$0xff]
    %v2504 = vld [vmem:[#allocation3 + $0x488] sm:$0xff]
    %v2505 = vld [vmem:[#allocation3 + $0x490] sm:$0xff]
    %v2506 = vld [vmem:[#allocation3 + $0x498] sm:$0xff]
    %v2507 = vld [vmem:[#allocation3 + $0x4a0] sm:$0xff]
    %v2508 = vld [vmem:[#allocation3 + $0x4a8] sm:$0xff]
    %v2509 = vld [vmem:[#allocation3 + $0x4b0] sm:$0xff]
    %v2510 = vld [vmem:[#allocation3 + $0x4b8] sm:$0xff]
    %v2511 = vld [vmem:[#allocation3 + $0x4c0] sm:$0xff]
    %v2512 = vld [vmem:[#allocation3 + $0x4c8] sm:$0xff]
    %v2513 = vld [vmem:[#allocation3 + $0x4d0] sm:$0xff]
    %v2514 = vld [vmem:[#allocation3 + $0x4d8] sm:$0xff]
    %v2515 = vld [vmem:[#allocation3 + $0x4e0] sm:$0xff]
    %v2516 = vld [vmem:[#allocation3 + $0x4e8] sm:$0xff]
    %v2517 = vld [vmem:[#allocation3 + $0x4f0] sm:$0xff]
    %v2518 = vld [vmem:[#allocation3 + $0x4f8] sm:$0xff]
    %v2519 = vld [vmem:[#allocation3 + $0x500] sm:$0xff]
    %v2520 = vld [vmem:[#allocation3 + $0x508] sm:$0xff]
    %v2521 = vld [vmem:[#allocation3 + $0x510] sm:$0xff]
    %v2522 = vld [vmem:[#allocation3 + $0x518] sm:$0xff]
    %v2523 = vld [vmem:[#allocation3 + $0x520] sm:$0xff]
    %v2524 = vld [vmem:[#allocation3 + $0x528] sm:$0xff]
    %v2525 = vld [vmem:[#allocation3 + $0x530] sm:$0xff]
    %v2526 = vld [vmem:[#allocation3 + $0x538] sm:$0xff]
    %v2527 = vld [vmem:[#allocation3 + $0x540] sm:$0xff]
    %v2528 = vld [vmem:[#allocation3 + $0x548] sm:$0xff]
    %v2529 = vld [vmem:[#allocation3 + $0x550] sm:$0xff]
    %v2530 = vld [vmem:[#allocation3 + $0x558] sm:$0xff]
    %v2531 = vld [vmem:[#allocation3 + $0x560] sm:$0xff]
    %v2532 = vld [vmem:[#allocation3 + $0x568] sm:$0xff]
    %v2533 = vld [vmem:[#allocation3 + $0x570] sm:$0xff]
    %v2534 = vld [vmem:[#allocation3 + $0x578] sm:$0xff]
    %v2535 = vld [vmem:[#allocation3 + $0x580] sm:$0xff]
    %v2536 = vld [vmem:[#allocation3 + $0x588] sm:$0xff]
    %v2537 = vld [vmem:[#allocation3 + $0x590] sm:$0xff]
    %v2538 = vld [vmem:[#allocation3 + $0x598] sm:$0xff]
    %v2539 = vld [vmem:[#allocation3 + $0x5a0] sm:$0xff]
    %v2540 = vld [vmem:[#allocation3 + $0x5a8] sm:$0xff]
    %v2541 = vld [vmem:[#allocation3 + $0x5b0] sm:$0xff]
    %v2542 = vld [vmem:[#allocation3 + $0x5b8] sm:$0xff]
    %v2543 = vld [vmem:[#allocation3 + $0x5c0] sm:$0xff]
    %v2544 = vld [vmem:[#allocation3 + $0x5c8] sm:$0xff]
    %v2545 = vld [vmem:[#allocation3 + $0x5d0] sm:$0xff]
    %v2546 = vld [vmem:[#allocation3 + $0x5d8] sm:$0xff]
    %v2547 = vld [vmem:[#allocation3 + $0x5e0] sm:$0xff]
    %v2548 = vld [vmem:[#allocation3 + $0x5e8] sm:$0xff]
    %v2549 = vld [vmem:[#allocation3 + $0x5f0] sm:$0xff]
    %v2550 = vld [vmem:[#allocation3 + $0x5f8] sm:$0xff]
    %v2551 = vld [vmem:[#allocation3 + $0x600] sm:$0xff]
    %v2552 = vld [vmem:[#allocation3 + $0x608] sm:$0xff]
    %v2553 = vld [vmem:[#allocation3 + $0x610] sm:$0xff]
    %v2554 = vld [vmem:[#allocation3 + $0x618] sm:$0xff]
    %v2555 = vld [vmem:[#allocation3 + $0x620] sm:$0xff]
    %v2556 = vld [vmem:[#allocation3 + $0x628] sm:$0xff]
    %v2557 = vld [vmem:[#allocation3 + $0x630] sm:$0xff]
    %v2558 = vld [vmem:[#allocation3 + $0x638] sm:$0xff]
    %v2559 = vld [vmem:[#allocation3 + $0x640] sm:$0xff]
    %v2560 = vld [vmem:[#allocation3 + $0x648] sm:$0xff]
    %v2561 = vld [vmem:[#allocation3 + $0x650] sm:$0xff]
    %v2562 = vld [vmem:[#allocation3 + $0x658] sm:$0xff]
    %v2563 = vld [vmem:[#allocation3 + $0x660] sm:$0xff]
    %v2564 = vld [vmem:[#allocation3 + $0x668] sm:$0xff]
    %v2565 = vld [vmem:[#allocation3 + $0x670] sm:$0xff]
    %v2566 = vld [vmem:[#allocation3 + $0x678] sm:$0xff]
    %v2567 = vld [vmem:[#allocation3 + $0x680] sm:$0xff]
    %v2568 = vld [vmem:[#allocation3 + $0x688] sm:$0xff]
    %v2569 = vld [vmem:[#allocation3 + $0x690] sm:$0xff]
    %v2570 = vld [vmem:[#allocation3 + $0x698] sm:$0xff]
    %v2571 = vld [vmem:[#allocation3 + $0x6a0] sm:$0xff]
    %v2572 = vld [vmem:[#allocation3 + $0x6a8] sm:$0xff]
    %v2573 = vld [vmem:[#allocation3 + $0x6b0] sm:$0xff]
    %v2574 = vld [vmem:[#allocation3 + $0x6b8] sm:$0xff]
    %v2575 = vld [vmem:[#allocation3 + $0x6c0] sm:$0xff]
    %v2576 = vld [vmem:[#allocation3 + $0x6c8] sm:$0xff]
    %v2577 = vld [vmem:[#allocation3 + $0x6d0] sm:$0xff]
    %v2578 = vld [vmem:[#allocation3 + $0x6d8] sm:$0xff]
    %v2579 = vld [vmem:[#allocation3 + $0x6e0] sm:$0xff]
    %v2580 = vld [vmem:[#allocation3 + $0x6e8] sm:$0xff]
    %v2581 = vld [vmem:[#allocation3 + $0x6f0] sm:$0xff]
    %v2582 = vld [vmem:[#allocation3 + $0x6f8] sm:$0xff]
    %v2583 = vunpack.c.l.s8.bf16 %v2359
    %v2584 = vunpack.c.l.s8.bf16 %v2360
    %v2585 = vunpack.c.l.s8.bf16 %v2361
    %v2586 = vunpack.c.l.s8.bf16 %v2362
    %v2587 = vunpack.c.l.s8.bf16 %v2363
    %v2588 = vunpack.c.l.s8.bf16 %v2364
    %v2589 = vunpack.c.l.s8.bf16 %v2365
    %v2590 = vunpack.c.h.s8.bf16 %v2359
    %v2591 = vunpack.c.h.s8.bf16 %v2360
    %v2592 = vunpack.c.h.s8.bf16 %v2361
    %v2593 = vunpack.c.h.s8.bf16 %v2362
    %v2594 = vunpack.c.h.s8.bf16 %v2363
    %v2595 = vunpack.c.h.s8.bf16 %v2364
    %v2596 = vunpack.c.h.s8.bf16 %v2365
    %v2597 = vunpack.c.l.s8.bf16 %v2366
    %v2598 = vunpack.c.l.s8.bf16 %v2367
    %v2599 = vunpack.c.l.s8.bf16 %v2368
    %v2600 = vunpack.c.l.s8.bf16 %v2369
    %v2601 = vunpack.c.l.s8.bf16 %v2370
    %v2602 = vunpack.c.l.s8.bf16 %v2371
    %v2603 = vunpack.c.l.s8.bf16 %v2372
    %v2604 = vunpack.c.h.s8.bf16 %v2366
    %v2605 = vunpack.c.h.s8.bf16 %v2367
    %v2606 = vunpack.c.h.s8.bf16 %v2368
    %v2607 = vunpack.c.h.s8.bf16 %v2369
    %v2608 = vunpack.c.h.s8.bf16 %v2370
    %v2609 = vunpack.c.h.s8.bf16 %v2371
    %v2610 = vunpack.c.h.s8.bf16 %v2372
    %v2611 = vunpack.c.l.s8.bf16 %v2373
    %v2612 = vunpack.c.l.s8.bf16 %v2374
    %v2613 = vunpack.c.l.s8.bf16 %v2375
    %v2614 = vunpack.c.l.s8.bf16 %v2376
    %v2615 = vunpack.c.l.s8.bf16 %v2377
    %v2616 = vunpack.c.l.s8.bf16 %v2378
    %v2617 = vunpack.c.l.s8.bf16 %v2379
    %v2618 = vunpack.c.h.s8.bf16 %v2373
    %v2619 = vunpack.c.h.s8.bf16 %v2374
    %v2620 = vunpack.c.h.s8.bf16 %v2375
    %v2621 = vunpack.c.h.s8.bf16 %v2376
    %v2622 = vunpack.c.h.s8.bf16 %v2377
    %v2623 = vunpack.c.h.s8.bf16 %v2378
    %v2624 = vunpack.c.h.s8.bf16 %v2379
    %v2625 = vunpack.c.l.s8.bf16 %v2380
    %v2626 = vunpack.c.l.s8.bf16 %v2381
    %v2627 = vunpack.c.l.s8.bf16 %v2382
    %v2628 = vunpack.c.l.s8.bf16 %v2383
    %v2629 = vunpack.c.l.s8.bf16 %v2384
    %v2630 = vunpack.c.l.s8.bf16 %v2385
    %v2631 = vunpack.c.l.s8.bf16 %v2386
    %v2632 = vunpack.c.h.s8.bf16 %v2380
    %v2633 = vunpack.c.h.s8.bf16 %v2381
    %v2634 = vunpack.c.h.s8.bf16 %v2382
    %v2635 = vunpack.c.h.s8.bf16 %v2383
    %v2636 = vunpack.c.h.s8.bf16 %v2384
    %v2637 = vunpack.c.h.s8.bf16 %v2385
    %v2638 = vunpack.c.h.s8.bf16 %v2386
    %v2639 = vunpack.c.l.s8.bf16 %v2387
    %v2640 = vunpack.c.l.s8.bf16 %v2388
    %v2641 = vunpack.c.l.s8.bf16 %v2389
    %v2642 = vunpack.c.l.s8.bf16 %v2390
    %v2643 = vunpack.c.l.s8.bf16 %v2391
    %v2644 = vunpack.c.l.s8.bf16 %v2392
    %v2645 = vunpack.c.l.s8.bf16 %v2393
    %v2646 = vunpack.c.h.s8.bf16 %v2387
    %v2647 = vunpack.c.h.s8.bf16 %v2388
    %v2648 = vunpack.c.h.s8.bf16 %v2389
    %v2649 = vunpack.c.h.s8.bf16 %v2390
    %v2650 = vunpack.c.h.s8.bf16 %v2391
    %v2651 = vunpack.c.h.s8.bf16 %v2392
    %v2652 = vunpack.c.h.s8.bf16 %v2393
    %v2653 = vunpack.c.l.s8.bf16 %v2394
    %v2654 = vunpack.c.l.s8.bf16 %v2395
    %v2655 = vunpack.c.l.s8.bf16 %v2396
    %v2656 = vunpack.c.l.s8.bf16 %v2397
    %v2657 = vunpack.c.l.s8.bf16 %v2398
    %v2658 = vunpack.c.l.s8.bf16 %v2399
    %v2659 = vunpack.c.l.s8.bf16 %v2400
    %v2660 = vunpack.c.h.s8.bf16 %v2394
    %v2661 = vunpack.c.h.s8.bf16 %v2395
    %v2662 = vunpack.c.h.s8.bf16 %v2396
    %v2663 = vunpack.c.h.s8.bf16 %v2397
    %v2664 = vunpack.c.h.s8.bf16 %v2398
    %v2665 = vunpack.c.h.s8.bf16 %v2399
    %v2666 = vunpack.c.h.s8.bf16 %v2400
    %v2667 = vunpack.c.l.s8.bf16 %v2401
    %v2668 = vunpack.c.l.s8.bf16 %v2402
    %v2669 = vunpack.c.l.s8.bf16 %v2403
    %v2670 = vunpack.c.l.s8.bf16 %v2404
    %v2671 = vunpack.c.l.s8.bf16 %v2405
    %v2672 = vunpack.c.l.s8.bf16 %v2406
    %v2673 = vunpack.c.l.s8.bf16 %v2407
    %v2674 = vunpack.c.h.s8.bf16 %v2401
    %v2675 = vunpack.c.h.s8.bf16 %v2402
    %v2676 = vunpack.c.h.s8.bf16 %v2403
    %v2677 = vunpack.c.h.s8.bf16 %v2404
    %v2678 = vunpack.c.h.s8.bf16 %v2405
    %v2679 = vunpack.c.h.s8.bf16 %v2406
    %v2680 = vunpack.c.h.s8.bf16 %v2407
    %v2681 = vunpack.c.l.s8.bf16 %v2408
    %v2682 = vunpack.c.l.s8.bf16 %v2409
    %v2683 = vunpack.c.l.s8.bf16 %v2410
    %v2684 = vunpack.c.l.s8.bf16 %v2411
    %v2685 = vunpack.c.l.s8.bf16 %v2412
    %v2686 = vunpack.c.l.s8.bf16 %v2413
    %v2687 = vunpack.c.l.s8.bf16 %v2414
    %v2688 = vunpack.c.h.s8.bf16 %v2408
    %v2689 = vunpack.c.h.s8.bf16 %v2409
    %v2690 = vunpack.c.h.s8.bf16 %v2410
    %v2691 = vunpack.c.h.s8.bf16 %v2411
    %v2692 = vunpack.c.h.s8.bf16 %v2412
    %v2693 = vunpack.c.h.s8.bf16 %v2413
    %v2694 = vunpack.c.h.s8.bf16 %v2414
    %v2695 = vunpack.c.l.s8.bf16 %v2415
    %v2696 = vunpack.c.l.s8.bf16 %v2416
    %v2697 = vunpack.c.l.s8.bf16 %v2417
    %v2698 = vunpack.c.l.s8.bf16 %v2418
    %v2699 = vunpack.c.l.s8.bf16 %v2419
    %v2700 = vunpack.c.l.s8.bf16 %v2420
    %v2701 = vunpack.c.l.s8.bf16 %v2421
    %v2702 = vunpack.c.h.s8.bf16 %v2415
    %v2703 = vunpack.c.h.s8.bf16 %v2416
    %v2704 = vunpack.c.h.s8.bf16 %v2417
    %v2705 = vunpack.c.h.s8.bf16 %v2418
    %v2706 = vunpack.c.h.s8.bf16 %v2419
    %v2707 = vunpack.c.h.s8.bf16 %v2420
    %v2708 = vunpack.c.h.s8.bf16 %v2421
    %v2709 = vunpack.c.l.s8.bf16 %v2422
    %v2710 = vunpack.c.l.s8.bf16 %v2423
    %v2711 = vunpack.c.l.s8.bf16 %v2424
    %v2712 = vunpack.c.l.s8.bf16 %v2425
    %v2713 = vunpack.c.l.s8.bf16 %v2426
    %v2714 = vunpack.c.l.s8.bf16 %v2427
    %v2715 = vunpack.c.l.s8.bf16 %v2428
    %v2716 = vunpack.c.h.s8.bf16 %v2422
    %v2717 = vunpack.c.h.s8.bf16 %v2423
    %v2718 = vunpack.c.h.s8.bf16 %v2424
    %v2719 = vunpack.c.h.s8.bf16 %v2425
    %v2720 = vunpack.c.h.s8.bf16 %v2426
    %v2721 = vunpack.c.h.s8.bf16 %v2427
    %v2722 = vunpack.c.h.s8.bf16 %v2428
    %v2723 = vunpack.c.l.s8.bf16 %v2429
    %v2724 = vunpack.c.l.s8.bf16 %v2430
    %v2725 = vunpack.c.l.s8.bf16 %v2431
    %v2726 = vunpack.c.l.s8.bf16 %v2432
    %v2727 = vunpack.c.l.s8.bf16 %v2433
    %v2728 = vunpack.c.l.s8.bf16 %v2434
    %v2729 = vunpack.c.l.s8.bf16 %v2435
    %v2730 = vunpack.c.h.s8.bf16 %v2429
    %v2731 = vunpack.c.h.s8.bf16 %v2430
    %v2732 = vunpack.c.h.s8.bf16 %v2431
    %v2733 = vunpack.c.h.s8.bf16 %v2432
    %v2734 = vunpack.c.h.s8.bf16 %v2433
    %v2735 = vunpack.c.h.s8.bf16 %v2434
    %v2736 = vunpack.c.h.s8.bf16 %v2435
    %v2737 = vunpack.c.l.s8.bf16 %v2436
    %v2738 = vunpack.c.l.s8.bf16 %v2437
    %v2739 = vunpack.c.l.s8.bf16 %v2438
    %v2740 = vunpack.c.l.s8.bf16 %v2439
    %v2741 = vunpack.c.l.s8.bf16 %v2440
    %v2742 = vunpack.c.l.s8.bf16 %v2441
    %v2743 = vunpack.c.l.s8.bf16 %v2442
    %v2744 = vunpack.c.h.s8.bf16 %v2436
    %v2745 = vunpack.c.h.s8.bf16 %v2437
    %v2746 = vunpack.c.h.s8.bf16 %v2438
    %v2747 = vunpack.c.h.s8.bf16 %v2439
    %v2748 = vunpack.c.h.s8.bf16 %v2440
    %v2749 = vunpack.c.h.s8.bf16 %v2441
    %v2750 = vunpack.c.h.s8.bf16 %v2442
    %v2751 = vunpack.c.l.s8.bf16 %v2443
    %v2752 = vunpack.c.l.s8.bf16 %v2444
    %v2753 = vunpack.c.l.s8.bf16 %v2445
    %v2754 = vunpack.c.l.s8.bf16 %v2446
    %v2755 = vunpack.c.l.s8.bf16 %v2447
    %v2756 = vunpack.c.l.s8.bf16 %v2448
    %v2757 = vunpack.c.l.s8.bf16 %v2449
    %v2758 = vunpack.c.h.s8.bf16 %v2443
    %v2759 = vunpack.c.h.s8.bf16 %v2444
    %v2760 = vunpack.c.h.s8.bf16 %v2445
    %v2761 = vunpack.c.h.s8.bf16 %v2446
    %v2762 = vunpack.c.h.s8.bf16 %v2447
    %v2763 = vunpack.c.h.s8.bf16 %v2448
    %v2764 = vunpack.c.h.s8.bf16 %v2449
    %v2765 = vunpack.c.l.s8.bf16 %v2450
    %v2766 = vunpack.c.l.s8.bf16 %v2451
    %v2767 = vunpack.c.l.s8.bf16 %v2452
    %v2768 = vunpack.c.l.s8.bf16 %v2453
    %v2769 = vunpack.c.l.s8.bf16 %v2454
    %v2770 = vunpack.c.l.s8.bf16 %v2455
    %v2771 = vunpack.c.l.s8.bf16 %v2456
    %v2772 = vunpack.c.h.s8.bf16 %v2450
    %v2773 = vunpack.c.h.s8.bf16 %v2451
    %v2774 = vunpack.c.h.s8.bf16 %v2452
    %v2775 = vunpack.c.h.s8.bf16 %v2453
    %v2776 = vunpack.c.h.s8.bf16 %v2454
    %v2777 = vunpack.c.h.s8.bf16 %v2455
    %v2778 = vunpack.c.h.s8.bf16 %v2456
    %v2779 = vunpack.c.l.s8.bf16 %v2457
    %v2780 = vunpack.c.l.s8.bf16 %v2458
    %v2781 = vunpack.c.l.s8.bf16 %v2459
    %v2782 = vunpack.c.l.s8.bf16 %v2460
    %v2783 = vunpack.c.l.s8.bf16 %v2461
    %v2784 = vunpack.c.l.s8.bf16 %v2462
    %v2785 = vunpack.c.l.s8.bf16 %v2463
    %v2786 = vunpack.c.h.s8.bf16 %v2457
    %v2787 = vunpack.c.h.s8.bf16 %v2458
    %v2788 = vunpack.c.h.s8.bf16 %v2459
    %v2789 = vunpack.c.h.s8.bf16 %v2460
    %v2790 = vunpack.c.h.s8.bf16 %v2461
    %v2791 = vunpack.c.h.s8.bf16 %v2462
    %v2792 = vunpack.c.h.s8.bf16 %v2463
    %v2793 = vunpack.c.l.s8.bf16 %v2464
    %v2794 = vunpack.c.l.s8.bf16 %v2465
    %v2795 = vunpack.c.l.s8.bf16 %v2466
    %v2796 = vunpack.c.l.s8.bf16 %v2467
    %v2797 = vunpack.c.l.s8.bf16 %v2468
    %v2798 = vunpack.c.l.s8.bf16 %v2469
    %v2799 = vunpack.c.l.s8.bf16 %v2470
    %v2800 = vunpack.c.h.s8.bf16 %v2464
    %v2801 = vunpack.c.h.s8.bf16 %v2465
    %v2802 = vunpack.c.h.s8.bf16 %v2466
    %v2803 = vunpack.c.h.s8.bf16 %v2467
    %v2804 = vunpack.c.h.s8.bf16 %v2468
    %v2805 = vunpack.c.h.s8.bf16 %v2469
    %v2806 = vunpack.c.h.s8.bf16 %v2470
    %v2807 = vunpack.c.l.s8.bf16 %v2471
    %v2808 = vunpack.c.l.s8.bf16 %v2472
    %v2809 = vunpack.c.l.s8.bf16 %v2473
    %v2810 = vunpack.c.l.s8.bf16 %v2474
    %v2811 = vunpack.c.l.s8.bf16 %v2475
    %v2812 = vunpack.c.l.s8.bf16 %v2476
    %v2813 = vunpack.c.l.s8.bf16 %v2477
    %v2814 = vunpack.c.h.s8.bf16 %v2471
    %v2815 = vunpack.c.h.s8.bf16 %v2472
    %v2816 = vunpack.c.h.s8.bf16 %v2473
    %v2817 = vunpack.c.h.s8.bf16 %v2474
    %v2818 = vunpack.c.h.s8.bf16 %v2475
    %v2819 = vunpack.c.h.s8.bf16 %v2476
    %v2820 = vunpack.c.h.s8.bf16 %v2477
    %v2821 = vunpack.c.l.s8.bf16 %v2478
    %v2822 = vunpack.c.l.s8.bf16 %v2479
    %v2823 = vunpack.c.l.s8.bf16 %v2480
    %v2824 = vunpack.c.l.s8.bf16 %v2481
    %v2825 = vunpack.c.l.s8.bf16 %v2482
    %v2826 = vunpack.c.l.s8.bf16 %v2483
    %v2827 = vunpack.c.l.s8.bf16 %v2484
    %v2828 = vunpack.c.h.s8.bf16 %v2478
    %v2829 = vunpack.c.h.s8.bf16 %v2479
    %v2830 = vunpack.c.h.s8.bf16 %v2480
    %v2831 = vunpack.c.h.s8.bf16 %v2481
    %v2832 = vunpack.c.h.s8.bf16 %v2482
    %v2833 = vunpack.c.h.s8.bf16 %v2483
    %v2834 = vunpack.c.h.s8.bf16 %v2484
    %v2835 = vunpack.c.l.s8.bf16 %v2485
    %v2836 = vunpack.c.l.s8.bf16 %v2486
    %v2837 = vunpack.c.l.s8.bf16 %v2487
    %v2838 = vunpack.c.l.s8.bf16 %v2488
    %v2839 = vunpack.c.l.s8.bf16 %v2489
    %v2840 = vunpack.c.l.s8.bf16 %v2490
    %v2841 = vunpack.c.l.s8.bf16 %v2491
    %v2842 = vunpack.c.h.s8.bf16 %v2485
    %v2843 = vunpack.c.h.s8.bf16 %v2486
    %v2844 = vunpack.c.h.s8.bf16 %v2487
    %v2845 = vunpack.c.h.s8.bf16 %v2488
    %v2846 = vunpack.c.h.s8.bf16 %v2489
    %v2847 = vunpack.c.h.s8.bf16 %v2490
    %v2848 = vunpack.c.h.s8.bf16 %v2491
    %v2849 = vunpack.c.l.s8.bf16 %v2492
    %v2850 = vunpack.c.l.s8.bf16 %v2493
    %v2851 = vunpack.c.l.s8.bf16 %v2494
    %v2852 = vunpack.c.l.s8.bf16 %v2495
    %v2853 = vunpack.c.l.s8.bf16 %v2496
    %v2854 = vunpack.c.l.s8.bf16 %v2497
    %v2855 = vunpack.c.l.s8.bf16 %v2498
    %v2856 = vunpack.c.h.s8.bf16 %v2492
    %v2857 = vunpack.c.h.s8.bf16 %v2493
    %v2858 = vunpack.c.h.s8.bf16 %v2494
    %v2859 = vunpack.c.h.s8.bf16 %v2495
    %v2860 = vunpack.c.h.s8.bf16 %v2496
    %v2861 = vunpack.c.h.s8.bf16 %v2497
    %v2862 = vunpack.c.h.s8.bf16 %v2498
    %v2863 = vunpack.c.l.s8.bf16 %v2499
    %v2864 = vunpack.c.l.s8.bf16 %v2500
    %v2865 = vunpack.c.l.s8.bf16 %v2501
    %v2866 = vunpack.c.l.s8.bf16 %v2502
    %v2867 = vunpack.c.l.s8.bf16 %v2503
    %v2868 = vunpack.c.l.s8.bf16 %v2504
    %v2869 = vunpack.c.l.s8.bf16 %v2505
    %v2870 = vunpack.c.h.s8.bf16 %v2499
    %v2871 = vunpack.c.h.s8.bf16 %v2500
    %v2872 = vunpack.c.h.s8.bf16 %v2501
    %v2873 = vunpack.c.h.s8.bf16 %v2502
    %v2874 = vunpack.c.h.s8.bf16 %v2503
    %v2875 = vunpack.c.h.s8.bf16 %v2504
    %v2876 = vunpack.c.h.s8.bf16 %v2505
    %v2877 = vunpack.c.l.s8.bf16 %v2506
    %v2878 = vunpack.c.l.s8.bf16 %v2507
    %v2879 = vunpack.c.l.s8.bf16 %v2508
    %v2880 = vunpack.c.l.s8.bf16 %v2509
    %v2881 = vunpack.c.l.s8.bf16 %v2510
    %v2882 = vunpack.c.l.s8.bf16 %v2511
    %v2883 = vunpack.c.l.s8.bf16 %v2512
    %v2884 = vunpack.c.h.s8.bf16 %v2506
    %v2885 = vunpack.c.h.s8.bf16 %v2507
    %v2886 = vunpack.c.h.s8.bf16 %v2508
    %v2887 = vunpack.c.h.s8.bf16 %v2509
    %v2888 = vunpack.c.h.s8.bf16 %v2510
    %v2889 = vunpack.c.h.s8.bf16 %v2511
    %v2890 = vunpack.c.h.s8.bf16 %v2512
    %v2891 = vunpack.c.l.s8.bf16 %v2513
    %v2892 = vunpack.c.l.s8.bf16 %v2514
    %v2893 = vunpack.c.l.s8.bf16 %v2515
    %v2894 = vunpack.c.l.s8.bf16 %v2516
    %v2895 = vunpack.c.l.s8.bf16 %v2517
    %v2896 = vunpack.c.l.s8.bf16 %v2518
    %v2897 = vunpack.c.l.s8.bf16 %v2519
    %v2898 = vunpack.c.h.s8.bf16 %v2513
    %v2899 = vunpack.c.h.s8.bf16 %v2514
    %v2900 = vunpack.c.h.s8.bf16 %v2515
    %v2901 = vunpack.c.h.s8.bf16 %v2516
    %v2902 = vunpack.c.h.s8.bf16 %v2517
    %v2903 = vunpack.c.h.s8.bf16 %v2518
    %v2904 = vunpack.c.h.s8.bf16 %v2519
    %v2905 = vunpack.c.l.s8.bf16 %v2520
    %v2906 = vunpack.c.l.s8.bf16 %v2521
    %v2907 = vunpack.c.l.s8.bf16 %v2522
    %v2908 = vunpack.c.l.s8.bf16 %v2523
    %v2909 = vunpack.c.l.s8.bf16 %v2524
    %v2910 = vunpack.c.l.s8.bf16 %v2525
    %v2911 = vunpack.c.l.s8.bf16 %v2526
    %v2912 = vunpack.c.h.s8.bf16 %v2520
    %v2913 = vunpack.c.h.s8.bf16 %v2521
    %v2914 = vunpack.c.h.s8.bf16 %v2522
    %v2915 = vunpack.c.h.s8.bf16 %v2523
    %v2916 = vunpack.c.h.s8.bf16 %v2524
    %v2917 = vunpack.c.h.s8.bf16 %v2525
    %v2918 = vunpack.c.h.s8.bf16 %v2526
    %v2919 = vunpack.c.l.s8.bf16 %v2527
    %v2920 = vunpack.c.l.s8.bf16 %v2528
    %v2921 = vunpack.c.l.s8.bf16 %v2529
    %v2922 = vunpack.c.l.s8.bf16 %v2530
    %v2923 = vunpack.c.l.s8.bf16 %v2531
    %v2924 = vunpack.c.l.s8.bf16 %v2532
    %v2925 = vunpack.c.l.s8.bf16 %v2533
    %v2926 = vunpack.c.h.s8.bf16 %v2527
    %v2927 = vunpack.c.h.s8.bf16 %v2528
    %v2928 = vunpack.c.h.s8.bf16 %v2529
    %v2929 = vunpack.c.h.s8.bf16 %v2530
    %v2930 = vunpack.c.h.s8.bf16 %v2531
    %v2931 = vunpack.c.h.s8.bf16 %v2532
    %v2932 = vunpack.c.h.s8.bf16 %v2533
    %v2933 = vunpack.c.l.s8.bf16 %v2534
    %v2934 = vunpack.c.l.s8.bf16 %v2535
    %v2935 = vunpack.c.l.s8.bf16 %v2536
    %v2936 = vunpack.c.l.s8.bf16 %v2537
    %v2937 = vunpack.c.l.s8.bf16 %v2538
    %v2938 = vunpack.c.l.s8.bf16 %v2539
    %v2939 = vunpack.c.l.s8.bf16 %v2540
    %v2940 = vunpack.c.h.s8.bf16 %v2534
    %v2941 = vunpack.c.h.s8.bf16 %v2535
    %v2942 = vunpack.c.h.s8.bf16 %v2536
    %v2943 = vunpack.c.h.s8.bf16 %v2537
    %v2944 = vunpack.c.h.s8.bf16 %v2538
    %v2945 = vunpack.c.h.s8.bf16 %v2539
    %v2946 = vunpack.c.h.s8.bf16 %v2540
    %v2947 = vunpack.c.l.s8.bf16 %v2541
    %v2948 = vunpack.c.l.s8.bf16 %v2542
    %v2949 = vunpack.c.l.s8.bf16 %v2543
    %v2950 = vunpack.c.l.s8.bf16 %v2544
    %v2951 = vunpack.c.l.s8.bf16 %v2545
    %v2952 = vunpack.c.l.s8.bf16 %v2546
    %v2953 = vunpack.c.l.s8.bf16 %v2547
    %v2954 = vunpack.c.h.s8.bf16 %v2541
    %v2955 = vunpack.c.h.s8.bf16 %v2542
    %v2956 = vunpack.c.h.s8.bf16 %v2543
    %v2957 = vunpack.c.h.s8.bf16 %v2544
    %v2958 = vunpack.c.h.s8.bf16 %v2545
    %v2959 = vunpack.c.h.s8.bf16 %v2546
    %v2960 = vunpack.c.h.s8.bf16 %v2547
    %v2961 = vunpack.c.l.s8.bf16 %v2548
    %v2962 = vunpack.c.l.s8.bf16 %v2549
    %v2963 = vunpack.c.l.s8.bf16 %v2550
    %v2964 = vunpack.c.l.s8.bf16 %v2551
    %v2965 = vunpack.c.l.s8.bf16 %v2552
    %v2966 = vunpack.c.l.s8.bf16 %v2553
    %v2967 = vunpack.c.l.s8.bf16 %v2554
    %v2968 = vunpack.c.h.s8.bf16 %v2548
    %v2969 = vunpack.c.h.s8.bf16 %v2549
    %v2970 = vunpack.c.h.s8.bf16 %v2550
    %v2971 = vunpack.c.h.s8.bf16 %v2551
    %v2972 = vunpack.c.h.s8.bf16 %v2552
    %v2973 = vunpack.c.h.s8.bf16 %v2553
    %v2974 = vunpack.c.h.s8.bf16 %v2554
    %v2975 = vunpack.c.l.s8.bf16 %v2555
    %v2976 = vunpack.c.l.s8.bf16 %v2556
    %v2977 = vunpack.c.l.s8.bf16 %v2557
    %v2978 = vunpack.c.l.s8.bf16 %v2558
    %v2979 = vunpack.c.l.s8.bf16 %v2559
    %v2980 = vunpack.c.l.s8.bf16 %v2560
    %v2981 = vunpack.c.l.s8.bf16 %v2561
    %v2982 = vunpack.c.h.s8.bf16 %v2555
    %v2983 = vunpack.c.h.s8.bf16 %v2556
    %v2984 = vunpack.c.h.s8.bf16 %v2557
    %v2985 = vunpack.c.h.s8.bf16 %v2558
    %v2986 = vunpack.c.h.s8.bf16 %v2559
    %v2987 = vunpack.c.h.s8.bf16 %v2560
    %v2988 = vunpack.c.h.s8.bf16 %v2561
    %v2989 = vunpack.c.l.s8.bf16 %v2562
    %v2990 = vunpack.c.l.s8.bf16 %v2563
    %v2991 = vunpack.c.l.s8.bf16 %v2564
    %v2992 = vunpack.c.l.s8.bf16 %v2565
    %v2993 = vunpack.c.l.s8.bf16 %v2566
    %v2994 = vunpack.c.l.s8.bf16 %v2567
    %v2995 = vunpack.c.l.s8.bf16 %v2568
    %v2996 = vunpack.c.h.s8.bf16 %v2562
    %v2997 = vunpack.c.h.s8.bf16 %v2563
    %v2998 = vunpack.c.h.s8.bf16 %v2564
    %v2999 = vunpack.c.h.s8.bf16 %v2565
    %v3000 = vunpack.c.h.s8.bf16 %v2566
    %v3001 = vunpack.c.h.s8.bf16 %v2567
    %v3002 = vunpack.c.h.s8.bf16 %v2568
    %v3003 = vunpack.c.l.s8.bf16 %v2569
    %v3004 = vunpack.c.l.s8.bf16 %v2570
    %v3005 = vunpack.c.l.s8.bf16 %v2571
    %v3006 = vunpack.c.l.s8.bf16 %v2572
    %v3007 = vunpack.c.l.s8.bf16 %v2573
    %v3008 = vunpack.c.l.s8.bf16 %v2574
    %v3009 = vunpack.c.l.s8.bf16 %v2575
    %v3010 = vunpack.c.h.s8.bf16 %v2569
    %v3011 = vunpack.c.h.s8.bf16 %v2570
    %v3012 = vunpack.c.h.s8.bf16 %v2571
    %v3013 = vunpack.c.h.s8.bf16 %v2572
    %v3014 = vunpack.c.h.s8.bf16 %v2573
    %v3015 = vunpack.c.h.s8.bf16 %v2574
    %v3016 = vunpack.c.h.s8.bf16 %v2575
    %v3017 = vunpack.c.l.s8.bf16 %v2576
    %v3018 = vunpack.c.l.s8.bf16 %v2577
    %v3019 = vunpack.c.l.s8.bf16 %v2578
    %v3020 = vunpack.c.l.s8.bf16 %v2579
    %v3021 = vunpack.c.l.s8.bf16 %v2580
    %v3022 = vunpack.c.l.s8.bf16 %v2581
    %v3023 = vunpack.c.l.s8.bf16 %v2582
    %v3024 = vunpack.c.h.s8.bf16 %v2576
    %v3025 = vunpack.c.h.s8.bf16 %v2577
    %v3026 = vunpack.c.h.s8.bf16 %v2578
    %v3027 = vunpack.c.h.s8.bf16 %v2579
    %v3028 = vunpack.c.h.s8.bf16 %v2580
    %v3029 = vunpack.c.h.s8.bf16 %v2581
    %v3030 = vunpack.c.h.s8.bf16 %v2582
    %3031 = vmatprep.subr.bf16.mxu0 %v2584
    %3032 = vmatpush1.bf16.msra.mxu0 %v2583
    %3033 = vmatprep.subr.bf16.mxu0 %v2591
    %3034 = vmatpush1.bf16.msra.mxu0 %v2590
    %3035 = vmatprep.subr.bf16.mxu0 %v2598
    %3036 = vmatpush1.bf16.msra.mxu0 %v2597
    %3037 = vmatprep.subr.bf16.mxu0 %v2605
    %3038 = vmatpush1.bf16.msra.mxu0 %v2604
    %3039 = vmatprep.subr.bf16.mxu0 %v2612
    %3040 = vmatpush1.bf16.msra.mxu0 %v2611
    %3041 = vmatprep.subr.bf16.mxu0 %v2619
    %3042 = vmatpush1.bf16.msra.mxu0 %v2618
    %3043 = vmatprep.subr.bf16.mxu0 %v2626
    %3044 = vmatpush1.bf16.msra.mxu0 %v2625
    %3045 = vmatprep.subr.bf16.mxu0 %v2633
    %3046 = vmatpush1.bf16.msra.mxu0 %v2632
    %3047 = vmatprep.subr.bf16.mxu0 %v2640
    %3048 = vmatpush1.bf16.msra.mxu0 %v2639
    %3049 = vmatprep.subr.bf16.mxu0 %v2647
    %3050 = vmatpush1.bf16.msra.mxu0 %v2646
    %3051 = vmatprep.subr.bf16.mxu0 %v2654
    %3052 = vmatpush1.bf16.msra.mxu0 %v2653
    %3053 = vmatprep.subr.bf16.mxu0 %v2661
    %3054 = vmatpush1.bf16.msra.mxu0 %v2660
    %3055 = vmatprep.subr.bf16.mxu0 %v2668
    %3056 = vmatpush1.bf16.msra.mxu0 %v2667
    %3057 = vmatprep.subr.bf16.mxu0 %v2675
    %3058 = vmatpush1.bf16.msra.mxu0 %v2674
    %3059 = vmatprep.subr.bf16.mxu0 %v2682
    %3060 = vmatpush1.bf16.msra.mxu0 %v2681
    %3061 = vmatprep.subr.bf16.mxu0 %v2689
    %3062 = vmatpush1.bf16.msra.mxu0 %v2688
    %3063 = vmatprep.mubr.bf16.mxu0 %v2352
    %3064 = vmatmul.mubr.bf16.gmra.mrb[0].mxu0 %v2351
    %v3065 = vpop.f32.mrb[0].mxu0
    %v3066 = vadd.f32 0.0, %v3065
    %v3067 = vpop.f32.mrb[0].mxu0
    %v3068 = vadd.f32 0.0, %v3067
    %v3069 = vpop.f32.mrb[0].mxu0
    %v3070 = vadd.f32 0.0, %v3069
    %v3071 = vpop.f32.mrb[0].mxu0
    %v3072 = vadd.f32 0.0, %v3071
    %3073 = vdwg.mxu0
    %3074 = vmatprep.subr.bf16.mxu0 %v2696
    %3075 = vmatpush1.bf16.msra.mxu0 %v2695
    %3076 = vmatprep.subr.bf16.mxu0 %v2703
    %3077 = vmatpush1.bf16.msra.mxu0 %v2702
    %3078 = vmatprep.subr.bf16.mxu0 %v2710
    %3079 = vmatpush1.bf16.msra.mxu0 %v2709
    %3080 = vmatprep.subr.bf16.mxu0 %v2717
    %3081 = vmatpush1.bf16.msra.mxu0 %v2716
    %3082 = vmatprep.subr.bf16.mxu0 %v2724
    %3083 = vmatpush1.bf16.msra.mxu0 %v2723
    %3084 = vmatprep.subr.bf16.mxu0 %v2731
    %3085 = vmatpush1.bf16.msra.mxu0 %v2730
    %3086 = vmatprep.subr.bf16.mxu0 %v2738
    %3087 = vmatpush1.bf16.msra.mxu0 %v2737
    %3088 = vmatprep.subr.bf16.mxu0 %v2745
    %3089 = vmatpush1.bf16.msra.mxu0 %v2744
    %3090 = vmatprep.subr.bf16.mxu0 %v2752
    %3091 = vmatpush1.bf16.msra.mxu0 %v2751
    %3092 = vmatprep.subr.bf16.mxu0 %v2759
    %3093 = vmatpush1.bf16.msra.mxu0 %v2758
    %3094 = vmatprep.subr.bf16.mxu0 %v2766
    %3095 = vmatpush1.bf16.msra.mxu0 %v2765
    %3096 = vmatprep.subr.bf16.mxu0 %v2773
    %3097 = vmatpush1.bf16.msra.mxu0 %v2772
    %3098 = vmatprep.subr.bf16.mxu0 %v2780
    %3099 = vmatpush1.bf16.msra.mxu0 %v2779
    %3100 = vmatprep.subr.bf16.mxu0 %v2787
    %3101 = vmatpush1.bf16.msra.mxu0 %v2786
    %3102 = vmatprep.subr.bf16.mxu0 %v2794
    %3103 = vmatpush1.bf16.msra.mxu0 %v2793
    %3104 = vmatprep.subr.bf16.mxu0 %v2801
    %3105 = vmatpush1.bf16.msra.mxu0 %v2800
    %3106 = vmatprep.mubr.bf16.mxu0 %v2354
    %3107 = vmatmul.mubr.bf16.gmra.mrb[0].mxu0 %v2353
    %v3108 = vpop.f32.mrb[0].mxu0
    %v3109 = vadd.f32 %v3066, %v3108
    %v3110 = vpop.f32.mrb[0].mxu0
    %v3111 = vadd.f32 %v3068, %v3110
    %v3112 = vpop.f32.mrb[0].mxu0
    %v3113 = vadd.f32 %v3070, %v3112
    %v3114 = vpop.f32.mrb[0].mxu0
    %v3115 = vadd.f32 %v3072, %v3114
    %3116 = vdwg.mxu0
    %3117 = vmatprep.subr.bf16.mxu0 %v2808
    %3118 = vmatpush1.bf16.msra.mxu0 %v2807
    %3119 = vmatprep.subr.bf16.mxu0 %v2815
    %3120 = vmatpush1.bf16.msra.mxu0 %v2814
    %3121 = vmatprep.subr.bf16.mxu0 %v2822
    %3122 = vmatpush1.bf16.msra.mxu0 %v2821
    %3123 = vmatprep.subr.bf16.mxu0 %v2829
    %3124 = vmatpush1.bf16.msra.mxu0 %v2828
    %3125 = vmatprep.subr.bf16.mxu0 %v2836
    %3126 = vmatpush1.bf16.msra.mxu0 %v2835
    %3127 = vmatprep.subr.bf16.mxu0 %v2843
    %3128 = vmatpush1.bf16.msra.mxu0 %v2842
    %3129 = vmatprep.subr.bf16.mxu0 %v2850
    %3130 = vmatpush1.bf16.msra.mxu0 %v2849
    %3131 = vmatprep.subr.bf16.mxu0 %v2857
    %3132 = vmatpush1.bf16.msra.mxu0 %v2856
    %3133 = vmatprep.subr.bf16.mxu0 %v2864
    %3134 = vmatpush1.bf16.msra.mxu0 %v2863
    %3135 = vmatprep.subr.bf16.mxu0 %v2871
    %3136 = vmatpush1.bf16.msra.mxu0 %v2870
    %3137 = vmatprep.subr.bf16.mxu0 %v2878
    %3138 = vmatpush1.bf16.msra.mxu0 %v2877
    %3139 = vmatprep.subr.bf16.mxu0 %v2885
    %3140 = vmatpush1.bf16.msra.mxu0 %v2884
    %3141 = vmatprep.subr.bf16.mxu0 %v2892
    %3142 = vmatpush1.bf16.msra.mxu0 %v2891
    %3143 = vmatprep.subr.bf16.mxu0 %v2899
    %3144 = vmatpush1.bf16.msra.mxu0 %v2898
    %3145 = vmatprep.subr.bf16.mxu0 %v2906
    %3146 = vmatpush1.bf16.msra.mxu0 %v2905
    %3147 = vmatprep.subr.bf16.mxu0 %v2913
    %3148 = vmatpush1.bf16.msra.mxu0 %v2912
    %3149 = vmatprep.mubr.bf16.mxu0 %v2356
    %3150 = vmatmul.mubr.bf16.gmra.mrb[0].mxu0 %v2355
    %v3151 = vpop.f32.mrb[0].mxu0
    %v3152 = vadd.f32 %v3109, %v3151
    %v3153 = vpop.f32.mrb[0].mxu0
    %v3154 = vadd.f32 %v3111, %v3153
    %v3155 = vpop.f32.mrb[0].mxu0
    %v3156 = vadd.f32 %v3113, %v3155
    %v3157 = vpop.f32.mrb[0].mxu0
    %v3158 = vadd.f32 %v3115, %v3157
    %3159 = vdwg.mxu0
    %3160 = vmatprep.subr.bf16.mxu0 %v2920
    %3161 = vmatpush1.bf16.msra.mxu0 %v2919
    %3162 = vmatprep.subr.bf16.mxu0 %v2927
    %3163 = vmatpush1.bf16.msra.mxu0 %v2926
    %3164 = vmatprep.subr.bf16.mxu0 %v2934
    %3165 = vmatpush1.bf16.msra.mxu0 %v2933
    %3166 = vmatprep.subr.bf16.mxu0 %v2941
    %3167 = vmatpush1.bf16.msra.mxu0 %v2940
    %3168 = vmatprep.subr.bf16.mxu0 %v2948
    %3169 = vmatpush1.bf16.msra.mxu0 %v2947
    %3170 = vmatprep.subr.bf16.mxu0 %v2955
    %3171 = vmatpush1.bf16.msra.mxu0 %v2954
    %3172 = vmatprep.subr.bf16.mxu0 %v2962
    %3173 = vmatpush1.bf16.msra.mxu0 %v2961
    %3174 = vmatprep.subr.bf16.mxu0 %v2969
    %3175 = vmatpush1.bf16.msra.mxu0 %v2968
    %3176 = vmatprep.subr.bf16.mxu0 %v2976
    %3177 = vmatpush1.bf16.msra.mxu0 %v2975
    %3178 = vmatprep.subr.bf16.mxu0 %v2983
    %3179 = vmatpush1.bf16.msra.mxu0 %v2982
    %3180 = vmatprep.subr.bf16.mxu0 %v2990
    %3181 = vmatpush1.bf16.msra.mxu0 %v2989
    %3182 = vmatprep.subr.bf16.mxu0 %v2997
    %3183 = vmatpush1.bf16.msra.mxu0 %v2996
    %3184 = vmatprep.subr.bf16.mxu0 %v3004
    %3185 = vmatpush1.bf16.msra.mxu0 %v3003
    %3186 = vmatprep.subr.bf16.mxu0 %v3011
    %3187 = vmatpush1.bf16.msra.mxu0 %v3010
    %3188 = vmatprep.subr.bf16.mxu0 %v3018
    %3189 = vmatpush1.bf16.msra.mxu0 %v3017
    %3190 = vmatprep.subr.bf16.mxu0 %v3025
    %3191 = vmatpush1.bf16.msra.mxu0 %v3024
    %3192 = vmatprep.mubr.bf16.mxu0 %v2358
    %3193 = vmatmul.mubr.bf16.gmra.mrb[0].mxu0 %v2357
    %v3194 = vpop.f32.mrb[0].mxu0
    %v3195 = vadd.f32 %v3152, %v3194
    %v3196 = vpop.f32.mrb[0].mxu0
    %v3197 = vadd.f32 %v3154, %v3196
    %v3198 = vpop.f32.mrb[0].mxu0
    %v3199 = vadd.f32 %v3156, %v3198
    %v3200 = vpop.f32.mrb[0].mxu0
    %v3201 = vadd.f32 %v3158, %v3200
    %3202 = vdwg.mxu0
    %3203 = vmatprep.subr.bf16.mxu0 %v2586
    %3204 = vmatpush1.bf16.msra.mxu0 %v2585
    %3205 = vmatprep.subr.bf16.mxu0 %v2593
    %3206 = vmatpush1.bf16.msra.mxu0 %v2592
    %3207 = vmatprep.subr.bf16.mxu0 %v2600
    %3208 = vmatpush1.bf16.msra.mxu0 %v2599
    %3209 = vmatprep.subr.bf16.mxu0 %v2607
    %3210 = vmatpush1.bf16.msra.mxu0 %v2606
    %3211 = vmatprep.subr.bf16.mxu0 %v2614
    %3212 = vmatpush1.bf16.msra.mxu0 %v2613
    %3213 = vmatprep.subr.bf16.mxu0 %v2621
    %3214 = vmatpush1.bf16.msra.mxu0 %v2620
    %3215 = vmatprep.subr.bf16.mxu0 %v2628
    %3216 = vmatpush1.bf16.msra.mxu0 %v2627
    %3217 = vmatprep.subr.bf16.mxu0 %v2635
    %3218 = vmatpush1.bf16.msra.mxu0 %v2634
    %3219 = vmatprep.subr.bf16.mxu0 %v2642
    %3220 = vmatpush1.bf16.msra.mxu0 %v2641
    %3221 = vmatprep.subr.bf16.mxu0 %v2649
    %3222 = vmatpush1.bf16.msra.mxu0 %v2648
    %3223 = vmatprep.subr.bf16.mxu0 %v2656
    %3224 = vmatpush1.bf16.msra.mxu0 %v2655
    %3225 = vmatprep.subr.bf16.mxu0 %v2663
    %3226 = vmatpush1.bf16.msra.mxu0 %v2662
    %3227 = vmatprep.subr.bf16.mxu0 %v2670
    %3228 = vmatpush1.bf16.msra.mxu0 %v2669
    %3229 = vmatprep.subr.bf16.mxu0 %v2677
    %3230 = vmatpush1.bf16.msra.mxu0 %v2676
    %3231 = vmatprep.subr.bf16.mxu0 %v2684
    %3232 = vmatpush1.bf16.msra.mxu0 %v2683
    %3233 = vmatprep.subr.bf16.mxu0 %v2691
    %3234 = vmatpush1.bf16.msra.mxu0 %v2690
    %3235 = vmatprep.mubr.bf16.mxu0 %v2352
    %3236 = vmatmul.mubr.bf16.gmra.mrb[0].mxu0 %v2351
    %v3237 = vpop.f32.mrb[0].mxu0
    %v3238 = vadd.f32 0.0, %v3237
    %v3239 = vpop.f32.mrb[0].mxu0
    %v3240 = vadd.f32 0.0, %v3239
    %v3241 = vpop.f32.mrb[0].mxu0
    %v3242 = vadd.f32 0.0, %v3241
    %v3243 = vpop.f32.mrb[0].mxu0
    %v3244 = vadd.f32 0.0, %v3243
    %3245 = vdwg.mxu0
    %3246 = vmatprep.subr.bf16.mxu0 %v2698
    %3247 = vmatpush1.bf16.msra.mxu0 %v2697
    %3248 = vmatprep.subr.bf16.mxu0 %v2705
    %3249 = vmatpush1.bf16.msra.mxu0 %v2704
    %3250 = vmatprep.subr.bf16.mxu0 %v2712
    %3251 = vmatpush1.bf16.msra.mxu0 %v2711
    %3252 = vmatprep.subr.bf16.mxu0 %v2719
    %3253 = vmatpush1.bf16.msra.mxu0 %v2718
    %3254 = vmatprep.subr.bf16.mxu0 %v2726
    %3255 = vmatpush1.bf16.msra.mxu0 %v2725
    %3256 = vmatprep.subr.bf16.mxu0 %v2733
    %3257 = vmatpush1.bf16.msra.mxu0 %v2732
    %3258 = vmatprep.subr.bf16.mxu0 %v2740
    %3259 = vmatpush1.bf16.msra.mxu0 %v2739
    %3260 = vmatprep.subr.bf16.mxu0 %v2747
    %3261 = vmatpush1.bf16.msra.mxu0 %v2746
    %3262 = vmatprep.subr.bf16.mxu0 %v2754
    %3263 = vmatpush1.bf16.msra.mxu0 %v2753
    %3264 = vmatprep.subr.bf16.mxu0 %v2761
    %3265 = vmatpush1.bf16.msra.mxu0 %v2760
    %3266 = vmatprep.subr.bf16.mxu0 %v2768
    %3267 = vmatpush1.bf16.msra.mxu0 %v2767
    %3268 = vmatprep.subr.bf16.mxu0 %v2775
    %3269 = vmatpush1.bf16.msra.mxu0 %v2774
    %3270 = vmatprep.subr.bf16.mxu0 %v2782
    %3271 = vmatpush1.bf16.msra.mxu0 %v2781
    %3272 = vmatprep.subr.bf16.mxu0 %v2789
    %3273 = vmatpush1.bf16.msra.mxu0 %v2788
    %3274 = vmatprep.subr.bf16.mxu0 %v2796
    %3275 = vmatpush1.bf16.msra.mxu0 %v2795
    %3276 = vmatprep.subr.bf16.mxu0 %v2803
    %3277 = vmatpush1.bf16.msra.mxu0 %v2802
    %3278 = vmatprep.mubr.bf16.mxu0 %v2354
    %3279 = vmatmul.mubr.bf16.gmra.mrb[0].mxu0 %v2353
    %v3280 = vpop.f32.mrb[0].mxu0
    %v3281 = vadd.f32 %v3238, %v3280
    %v3282 = vpop.f32.mrb[0].mxu0
    %v3283 = vadd.f32 %v3240, %v3282
    %v3284 = vpop.f32.mrb[0].mxu0
    %v3285 = vadd.f32 %v3242, %v3284
    %v3286 = vpop.f32.mrb[0].mxu0
    %v3287 = vadd.f32 %v3244, %v3286
    %3288 = vdwg.mxu0
    %3289 = vmatprep.subr.bf16.mxu0 %v2810
    %3290 = vmatpush1.bf16.msra.mxu0 %v2809
    %3291 = vmatprep.subr.bf16.mxu0 %v2817
    %3292 = vmatpush1.bf16.msra.mxu0 %v2816
    %3293 = vmatprep.subr.bf16.mxu0 %v2824
    %3294 = vmatpush1.bf16.msra.mxu0 %v2823
    %3295 = vmatprep.subr.bf16.mxu0 %v2831
    %3296 = vmatpush1.bf16.msra.mxu0 %v2830
    %3297 = vmatprep.subr.bf16.mxu0 %v2838
    %3298 = vmatpush1.bf16.msra.mxu0 %v2837
    %3299 = vmatprep.subr.bf16.mxu0 %v2845
    %3300 = vmatpush1.bf16.msra.mxu0 %v2844
    %3301 = vmatprep.subr.bf16.mxu0 %v2852
    %3302 = vmatpush1.bf16.msra.mxu0 %v2851
    %3303 = vmatprep.subr.bf16.mxu0 %v2859
    %3304 = vmatpush1.bf16.msra.mxu0 %v2858
    %3305 = vmatprep.subr.bf16.mxu0 %v2866
    %3306 = vmatpush1.bf16.msra.mxu0 %v2865
    %3307 = vmatprep.subr.bf16.mxu0 %v2873
    %3308 = vmatpush1.bf16.msra.mxu0 %v2872
    %3309 = vmatprep.subr.bf16.mxu0 %v2880
    %3310 = vmatpush1.bf16.msra.mxu0 %v2879
    %3311 = vmatprep.subr.bf16.mxu0 %v2887
    %3312 = vmatpush1.bf16.msra.mxu0 %v2886
    %3313 = vmatprep.subr.bf16.mxu0 %v2894
    %3314 = vmatpush1.bf16.msra.mxu0 %v2893
    %3315 = vmatprep.subr.bf16.mxu0 %v2901
    %3316 = vmatpush1.bf16.msra.mxu0 %v2900
    %3317 = vmatprep.subr.bf16.mxu0 %v2908
    %3318 = vmatpush1.bf16.msra.mxu0 %v2907
    %3319 = vmatprep.subr.bf16.mxu0 %v2915
    %3320 = vmatpush1.bf16.msra.mxu0 %v2914
    %3321 = vmatprep.mubr.bf16.mxu0 %v2356
    %3322 = vmatmul.mubr.bf16.gmra.mrb[0].mxu0 %v2355
    %v3323 = vpop.f32.mrb[0].mxu0
    %v3324 = vadd.f32 %v3281, %v3323
    %v3325 = vpop.f32.mrb[0].mxu0
    %v3326 = vadd.f32 %v3283, %v3325
    %v3327 = vpop.f32.mrb[0].mxu0
    %v3328 = vadd.f32 %v3285, %v3327
    %v3329 = vpop.f32.mrb[0].mxu0
    %v3330 = vadd.f32 %v3287, %v3329
    %3331 = vdwg.mxu0
    %3332 = vmatprep.subr.bf16.mxu0 %v2922
    %3333 = vmatpush1.bf16.msra.mxu0 %v2921
    %3334 = vmatprep.subr.bf16.mxu0 %v2929
    %3335 = vmatpush1.bf16.msra.mxu0 %v2928
    %3336 = vmatprep.subr.bf16.mxu0 %v2936
    %3337 = vmatpush1.bf16.msra.mxu0 %v2935
    %3338 = vmatprep.subr.bf16.mxu0 %v2943
    %3339 = vmatpush1.bf16.msra.mxu0 %v2942
    %3340 = vmatprep.subr.bf16.mxu0 %v2950
    %3341 = vmatpush1.bf16.msra.mxu0 %v2949
    %3342 = vmatprep.subr.bf16.mxu0 %v2957
    %3343 = vmatpush1.bf16.msra.mxu0 %v2956
    %3344 = vmatprep.subr.bf16.mxu0 %v2964
    %3345 = vmatpush1.bf16.msra.mxu0 %v2963
    %3346 = vmatprep.subr.bf16.mxu0 %v2971
    %3347 = vmatpush1.bf16.msra.mxu0 %v2970
    %3348 = vmatprep.subr.bf16.mxu0 %v2978
    %3349 = vmatpush1.bf16.msra.mxu0 %v2977
    %3350 = vmatprep.subr.bf16.mxu0 %v2985
    %3351 = vmatpush1.bf16.msra.mxu0 %v2984
    %3352 = vmatprep.subr.bf16.mxu0 %v2992
    %3353 = vmatpush1.bf16.msra.mxu0 %v2991
    %3354 = vmatprep.subr.bf16.mxu0 %v2999
    %3355 = vmatpush1.bf16.msra.mxu0 %v2998
    %3356 = vmatprep.subr.bf16.mxu0 %v3006
    %3357 = vmatpush1.bf16.msra.mxu0 %v3005
    %3358 = vmatprep.subr.bf16.mxu0 %v3013
    %3359 = vmatpush1.bf16.msra.mxu0 %v3012
    %3360 = vmatprep.subr.bf16.mxu0 %v3020
    %3361 = vmatpush1.bf16.msra.mxu0 %v3019
    %3362 = vmatprep.subr.bf16.mxu0 %v3027
    %3363 = vmatpush1.bf16.msra.mxu0 %v3026
    %3364 = vmatprep.mubr.bf16.mxu0 %v2358
    %3365 = vmatmul.mubr.bf16.gmra.mrb[0].mxu0 %v2357
    %v3366 = vpop.f32.mrb[0].mxu0
    %v3367 = vadd.f32 %v3324, %v3366
    %v3368 = vpop.f32.mrb[0].mxu0
    %v3369 = vadd.f32 %v3326, %v3368
    %v3370 = vpop.f32.mrb[0].mxu0
    %v3371 = vadd.f32 %v3328, %v3370
    %v3372 = vpop.f32.mrb[0].mxu0
    %v3373 = vadd.f32 %v3330, %v3372
    %3374 = vdwg.mxu0
    %3375 = vmatprep.subr.bf16.mxu0 %v2588
    %3376 = vmatpush1.bf16.msra.mxu0 %v2587
    %3377 = vmatprep.subr.bf16.mxu0 %v2595
    %3378 = vmatpush1.bf16.msra.mxu0 %v2594
    %3379 = vmatprep.subr.bf16.mxu0 %v2602
    %3380 = vmatpush1.bf16.msra.mxu0 %v2601
    %3381 = vmatprep.subr.bf16.mxu0 %v2609
    %3382 = vmatpush1.bf16.msra.mxu0 %v2608
    %3383 = vmatprep.subr.bf16.mxu0 %v2616
    %3384 = vmatpush1.bf16.msra.mxu0 %v2615
    %3385 = vmatprep.subr.bf16.mxu0 %v2623
    %3386 = vmatpush1.bf16.msra.mxu0 %v2622
    %3387 = vmatprep.subr.bf16.mxu0 %v2630
    %3388 = vmatpush1.bf16.msra.mxu0 %v2629
    %3389 = vmatprep.subr.bf16.mxu0 %v2637
    %3390 = vmatpush1.bf16.msra.mxu0 %v2636
    %3391 = vmatprep.subr.bf16.mxu0 %v2644
    %3392 = vmatpush1.bf16.msra.mxu0 %v2643
    %3393 = vmatprep.subr.bf16.mxu0 %v2651
    %3394 = vmatpush1.bf16.msra.mxu0 %v2650
    %3395 = vmatprep.subr.bf16.mxu0 %v2658
    %3396 = vmatpush1.bf16.msra.mxu0 %v2657
    %3397 = vmatprep.subr.bf16.mxu0 %v2665
    %3398 = vmatpush1.bf16.msra.mxu0 %v2664
    %3399 = vmatprep.subr.bf16.mxu0 %v2672
    %3400 = vmatpush1.bf16.msra.mxu0 %v2671
    %3401 = vmatprep.subr.bf16.mxu0 %v2679
    %3402 = vmatpush1.bf16.msra.mxu0 %v2678
    %3403 = vmatprep.subr.bf16.mxu0 %v2686
    %3404 = vmatpush1.bf16.msra.mxu0 %v2685
    %3405 = vmatprep.subr.bf16.mxu0 %v2693
    %3406 = vmatpush1.bf16.msra.mxu0 %v2692
    %3407 = vmatprep.mubr.bf16.mxu0 %v2352
    %3408 = vmatmul.mubr.bf16.gmra.mrb[0].mxu0 %v2351
    %v3409 = vpop.f32.mrb[0].mxu0
    %v3410 = vadd.f32 0.0, %v3409
    %v3411 = vpop.f32.mrb[0].mxu0
    %v3412 = vadd.f32 0.0, %v3411
    %v3413 = vpop.f32.mrb[0].mxu0
    %v3414 = vadd.f32 0.0, %v3413
    %v3415 = vpop.f32.mrb[0].mxu0
    %v3416 = vadd.f32 0.0, %v3415
    %3417 = vdwg.mxu0
    %3418 = vmatprep.subr.bf16.mxu0 %v2700
    %3419 = vmatpush1.bf16.msra.mxu0 %v2699
    %3420 = vmatprep.subr.bf16.mxu0 %v2707
    %3421 = vmatpush1.bf16.msra.mxu0 %v2706
    %3422 = vmatprep.subr.bf16.mxu0 %v2714
    %3423 = vmatpush1.bf16.msra.mxu0 %v2713
    %3424 = vmatprep.subr.bf16.mxu0 %v2721
    %3425 = vmatpush1.bf16.msra.mxu0 %v2720
    %3426 = vmatprep.subr.bf16.mxu0 %v2728
    %3427 = vmatpush1.bf16.msra.mxu0 %v2727
    %3428 = vmatprep.subr.bf16.mxu0 %v2735
    %3429 = vmatpush1.bf16.msra.mxu0 %v2734
    %3430 = vmatprep.subr.bf16.mxu0 %v2742
    %3431 = vmatpush1.bf16.msra.mxu0 %v2741
    %3432 = vmatprep.subr.bf16.mxu0 %v2749
    %3433 = vmatpush1.bf16.msra.mxu0 %v2748
    %3434 = vmatprep.subr.bf16.mxu0 %v2756
    %3435 = vmatpush1.bf16.msra.mxu0 %v2755
    %3436 = vmatprep.subr.bf16.mxu0 %v2763
    %3437 = vmatpush1.bf16.msra.mxu0 %v2762
    %3438 = vmatprep.subr.bf16.mxu0 %v2770
    %3439 = vmatpush1.bf16.msra.mxu0 %v2769
    %3440 = vmatprep.subr.bf16.mxu0 %v2777
    %3441 = vmatpush1.bf16.msra.mxu0 %v2776
    %3442 = vmatprep.subr.bf16.mxu0 %v2784
    %3443 = vmatpush1.bf16.msra.mxu0 %v2783
    %3444 = vmatprep.subr.bf16.mxu0 %v2791
    %3445 = vmatpush1.bf16.msra.mxu0 %v2790
    %3446 = vmatprep.subr.bf16.mxu0 %v2798
    %3447 = vmatpush1.bf16.msra.mxu0 %v2797
    %3448 = vmatprep.subr.bf16.mxu0 %v2805
    %3449 = vmatpush1.bf16.msra.mxu0 %v2804
    %3450 = vmatprep.mubr.bf16.mxu0 %v2354
    %3451 = vmatmul.mubr.bf16.gmra.mrb[0].mxu0 %v2353
    %v3452 = vpop.f32.mrb[0].mxu0
    %v3453 = vadd.f32 %v3410, %v3452
    %v3454 = vpop.f32.mrb[0].mxu0
    %v3455 = vadd.f32 %v3412, %v3454
    %v3456 = vpop.f32.mrb[0].mxu0
    %v3457 = vadd.f32 %v3414, %v3456
    %v3458 = vpop.f32.mrb[0].mxu0
    %v3459 = vadd.f32 %v3416, %v3458
    %3460 = vdwg.mxu0
    %3461 = vmatprep.subr.bf16.mxu0 %v2812
    %3462 = vmatpush1.bf16.msra.mxu0 %v2811
    %3463 = vmatprep.subr.bf16.mxu0 %v2819
    %3464 = vmatpush1.bf16.msra.mxu0 %v2818
    %3465 = vmatprep.subr.bf16.mxu0 %v2826
    %3466 = vmatpush1.bf16.msra.mxu0 %v2825
    %3467 = vmatprep.subr.bf16.mxu0 %v2833
    %3468 = vmatpush1.bf16.msra.mxu0 %v2832
    %3469 = vmatprep.subr.bf16.mxu0 %v2840
    %3470 = vmatpush1.bf16.msra.mxu0 %v2839
    %3471 = vmatprep.subr.bf16.mxu0 %v2847
    %3472 = vmatpush1.bf16.msra.mxu0 %v2846
    %3473 = vmatprep.subr.bf16.mxu0 %v2854
    %3474 = vmatpush1.bf16.msra.mxu0 %v2853
    %3475 = vmatprep.subr.bf16.mxu0 %v2861
    %3476 = vmatpush1.bf16.msra.mxu0 %v2860
    %3477 = vmatprep.subr.bf16.mxu0 %v2868
    %3478 = vmatpush1.bf16.msra.mxu0 %v2867
    %3479 = vmatprep.subr.bf16.mxu0 %v2875
    %3480 = vmatpush1.bf16.msra.mxu0 %v2874
    %3481 = vmatprep.subr.bf16.mxu0 %v2882
    %3482 = vmatpush1.bf16.msra.mxu0 %v2881
    %3483 = vmatprep.subr.bf16.mxu0 %v2889
    %3484 = vmatpush1.bf16.msra.mxu0 %v2888
    %3485 = vmatprep.subr.bf16.mxu0 %v2896
    %3486 = vmatpush1.bf16.msra.mxu0 %v2895
    %3487 = vmatprep.subr.bf16.mxu0 %v2903
    %3488 = vmatpush1.bf16.msra.mxu0 %v2902
    %3489 = vmatprep.subr.bf16.mxu0 %v2910
    %3490 = vmatpush1.bf16.msra.mxu0 %v2909
    %3491 = vmatprep.subr.bf16.mxu0 %v2917
    %3492 = vmatpush1.bf16.msra.mxu0 %v2916
    %3493 = vmatprep.mubr.bf16.mxu0 %v2356
    %3494 = vmatmul.mubr.bf16.gmra.mrb[0].mxu0 %v2355
    %v3495 = vpop.f32.mrb[0].mxu0
    %v3496 = vadd.f32 %v3453, %v3495
    %v3497 = vpop.f32.mrb[0].mxu0
    %v3498 = vadd.f32 %v3455, %v3497
    %v3499 = vpop.f32.mrb[0].mxu0
    %v3500 = vadd.f32 %v3457, %v3499
    %v3501 = vpop.f32.mrb[0].mxu0
    %v3502 = vadd.f32 %v3459, %v3501
    %3503 = vdwg.mxu0
    %3504 = vmatprep.subr.bf16.mxu0 %v2924
    %3505 = vmatpush1.bf16.msra.mxu0 %v2923
    %3506 = vmatprep.subr.bf16.mxu0 %v2931
    %3507 = vmatpush1.bf16.msra.mxu0 %v2930
    %3508 = vmatprep.subr.bf16.mxu0 %v2938
    %3509 = vmatpush1.bf16.msra.mxu0 %v2937
    %3510 = vmatprep.subr.bf16.mxu0 %v2945
    %3511 = vmatpush1.bf16.msra.mxu0 %v2944
    %3512 = vmatprep.subr.bf16.mxu0 %v2952
    %3513 = vmatpush1.bf16.msra.mxu0 %v2951
    %3514 = vmatprep.subr.bf16.mxu0 %v2959
    %3515 = vmatpush1.bf16.msra.mxu0 %v2958
    %3516 = vmatprep.subr.bf16.mxu0 %v2966
    %3517 = vmatpush1.bf16.msra.mxu0 %v2965
    %3518 = vmatprep.subr.bf16.mxu0 %v2973
    %3519 = vmatpush1.bf16.msra.mxu0 %v2972
    %3520 = vmatprep.subr.bf16.mxu0 %v2980
    %3521 = vmatpush1.bf16.msra.mxu0 %v2979
    %3522 = vmatprep.subr.bf16.mxu0 %v2987
    %3523 = vmatpush1.bf16.msra.mxu0 %v2986
    %3524 = vmatprep.subr.bf16.mxu0 %v2994
    %3525 = vmatpush1.bf16.msra.mxu0 %v2993
    %3526 = vmatprep.subr.bf16.mxu0 %v3001
    %3527 = vmatpush1.bf16.msra.mxu0 %v3000
    %3528 = vmatprep.subr.bf16.mxu0 %v3008
    %3529 = vmatpush1.bf16.msra.mxu0 %v3007
    %3530 = vmatprep.subr.bf16.mxu0 %v3015
    %3531 = vmatpush1.bf16.msra.mxu0 %v3014
    %3532 = vmatprep.subr.bf16.mxu0 %v3022
    %3533 = vmatpush1.bf16.msra.mxu0 %v3021
    %3534 = vmatprep.subr.bf16.mxu0 %v3029
    %3535 = vmatpush1.bf16.msra.mxu0 %v3028
    %3536 = vmatprep.mubr.bf16.mxu0 %v2358
    %3537 = vmatmul.mubr.bf16.gmra.mrb[0].mxu0 %v2357
    %v3538 = vpop.f32.mrb[0].mxu0
    %v3539 = vadd.f32 %v3496, %v3538
    %v3540 = vpop.f32.mrb[0].mxu0
    %v3541 = vadd.f32 %v3498, %v3540
    %v3542 = vpop.f32.mrb[0].mxu0
    %v3543 = vadd.f32 %v3500, %v3542
    %v3544 = vpop.f32.mrb[0].mxu0
    %v3545 = vadd.f32 %v3502, %v3544
    %3546 = vdwg.mxu0
    %3547 = vmatprep.subr.bf16.mxu0 0
    %3548 = vmatpush1.bf16.msra.mxu0 %v2589
    %3549 = vmatprep.subr.bf16.mxu0 0
    %3550 = vmatpush1.bf16.msra.mxu0 %v2596
    %3551 = vmatprep.subr.bf16.mxu0 0
    %3552 = vmatpush1.bf16.msra.mxu0 %v2603
    %3553 = vmatprep.subr.bf16.mxu0 0
    %3554 = vmatpush1.bf16.msra.mxu0 %v2610
    %3555 = vmatprep.subr.bf16.mxu0 0
    %3556 = vmatpush1.bf16.msra.mxu0 %v2617
    %3557 = vmatprep.subr.bf16.mxu0 0
    %3558 = vmatpush1.bf16.msra.mxu0 %v2624
    %3559 = vmatprep.subr.bf16.mxu0 0
    %3560 = vmatpush1.bf16.msra.mxu0 %v2631
    %3561 = vmatprep.subr.bf16.mxu0 0
    %3562 = vmatpush1.bf16.msra.mxu0 %v2638
    %3563 = vmatprep.subr.bf16.mxu0 0
    %3564 = vmatpush1.bf16.msra.mxu0 %v2645
    %3565 = vmatprep.subr.bf16.mxu0 0
    %3566 = vmatpush1.bf16.msra.mxu0 %v2652
    %3567 = vmatprep.subr.bf16.mxu0 0
    %3568 = vmatpush1.bf16.msra.mxu0 %v2659
    %3569 = vmatprep.subr.bf16.mxu0 0
    %3570 = vmatpush1.bf16.msra.mxu0 %v2666
    %3571 = vmatprep.subr.bf16.mxu0 0
    %3572 = vmatpush1.bf16.msra.mxu0 %v2673
    %3573 = vmatprep.subr.bf16.mxu0 0
    %3574 = vmatpush1.bf16.msra.mxu0 %v2680
    %3575 = vmatprep.subr.bf16.mxu0 0
    %3576 = vmatpush1.bf16.msra.mxu0 %v2687
    %3577 = vmatprep.subr.bf16.mxu0 0
    %3578 = vmatpush1.bf16.msra.mxu0 %v2694
    %3579 = vmatprep.mubr.bf16.mxu0 %v2352
    %3580 = vmatmul.mubr.bf16.gmra.mrb[0].mxu0 %v2351
    %v3581 = vpop.f32.mrb[0].mxu0
    %v3582 = vadd.f32 0.0, %v3581
    %v3583 = vpop.f32.mrb[0].mxu0
    %v3584 = vpop.f32.mrb[0].mxu0
    %v3585 = vadd.f32 0.0, %v3584
    %v3586 = vpop.f32.mrb[0].mxu0
    %3587 = vdwg.mxu0
    %3588 = vmatprep.subr.bf16.mxu0 0
    %3589 = vmatpush1.bf16.msra.mxu0 %v2701
    %3590 = vmatprep.subr.bf16.mxu0 0
    %3591 = vmatpush1.bf16.msra.mxu0 %v2708
    %3592 = vmatprep.subr.bf16.mxu0 0
    %3593 = vmatpush1.bf16.msra.mxu0 %v2715
    %3594 = vmatprep.subr.bf16.mxu0 0
    %3595 = vmatpush1.bf16.msra.mxu0 %v2722
    %3596 = vmatprep.subr.bf16.mxu0 0
    %3597 = vmatpush1.bf16.msra.mxu0 %v2729
    %3598 = vmatprep.subr.bf16.mxu0 0
    %3599 = vmatpush1.bf16.msra.mxu0 %v2736
    %3600 = vmatprep.subr.bf16.mxu0 0
    %3601 = vmatpush1.bf16.msra.mxu0 %v2743
    %3602 = vmatprep.subr.bf16.mxu0 0
    %3603 = vmatpush1.bf16.msra.mxu0 %v2750
    %3604 = vmatprep.subr.bf16.mxu0 0
    %3605 = vmatpush1.bf16.msra.mxu0 %v2757
    %3606 = vmatprep.subr.bf16.mxu0 0
    %3607 = vmatpush1.bf16.msra.mxu0 %v2764
    %3608 = vmatprep.subr.bf16.mxu0 0
    %3609 = vmatpush1.bf16.msra.mxu0 %v2771
    %3610 = vmatprep.subr.bf16.mxu0 0
    %3611 = vmatpush1.bf16.msra.mxu0 %v2778
    %3612 = vmatprep.subr.bf16.mxu0 0
    %3613 = vmatpush1.bf16.msra.mxu0 %v2785
    %3614 = vmatprep.subr.bf16.mxu0 0
    %3615 = vmatpush1.bf16.msra.mxu0 %v2792
    %3616 = vmatprep.subr.bf16.mxu0 0
    %3617 = vmatpush1.bf16.msra.mxu0 %v2799
    %3618 = vmatprep.subr.bf16.mxu0 0
    %3619 = vmatpush1.bf16.msra.mxu0 %v2806
    %3620 = vmatprep.mubr.bf16.mxu0 %v2354
    %3621 = vmatmul.mubr.bf16.gmra.mrb[0].mxu0 %v2353
    %v3622 = vpop.f32.mrb[0].mxu0
    %v3623 = vadd.f32 %v3582, %v3622
    %v3624 = vpop.f32.mrb[0].mxu0
    %v3625 = vpop.f32.mrb[0].mxu0
    %v3626 = vadd.f32 %v3585, %v3625
    %v3627 = vpop.f32.mrb[0].mxu0
    %3628 = vdwg.mxu0
    %3629 = vmatprep.subr.bf16.mxu0 0
    %3630 = vmatpush1.bf16.msra.mxu0 %v2813
    %3631 = vmatprep.subr.bf16.mxu0 0
    %3632 = vmatpush1.bf16.msra.mxu0 %v2820
    %3633 = vmatprep.subr.bf16.mxu0 0
    %3634 = vmatpush1.bf16.msra.mxu0 %v2827
    %3635 = vmatprep.subr.bf16.mxu0 0
    %3636 = vmatpush1.bf16.msra.mxu0 %v2834
    %3637 = vmatprep.subr.bf16.mxu0 0
    %3638 = vmatpush1.bf16.msra.mxu0 %v2841
    %3639 = vmatprep.subr.bf16.mxu0 0
    %3640 = vmatpush1.bf16.msra.mxu0 %v2848
    %3641 = vmatprep.subr.bf16.mxu0 0
    %3642 = vmatpush1.bf16.msra.mxu0 %v2855
    %3643 = vmatprep.subr.bf16.mxu0 0
    %3644 = vmatpush1.bf16.msra.mxu0 %v2862
    %3645 = vmatprep.subr.bf16.mxu0 0
    %3646 = vmatpush1.bf16.msra.mxu0 %v2869
    %3647 = vmatprep.subr.bf16.mxu0 0
    %3648 = vmatpush1.bf16.msra.mxu0 %v2876
    %3649 = vmatprep.subr.bf16.mxu0 0
    %3650 = vmatpush1.bf16.msra.mxu0 %v2883
    %3651 = vmatprep.subr.bf16.mxu0 0
    %3652 = vmatpush1.bf16.msra.mxu0 %v2890
    %3653 = vmatprep.subr.bf16.mxu0 0
    %3654 = vmatpush1.bf16.msra.mxu0 %v2897
    %3655 = vmatprep.subr.bf16.mxu0 0
    %3656 = vmatpush1.bf16.msra.mxu0 %v2904
    %3657 = vmatprep.subr.bf16.mxu0 0
    %3658 = vmatpush1.bf16.msra.mxu0 %v2911
    %3659 = vmatprep.subr.bf16.mxu0 0
    %3660 = vmatpush1.bf16.msra.mxu0 %v2918
    %3661 = vmatprep.mubr.bf16.mxu0 %v2356
    %3662 = vmatmul.mubr.bf16.gmra.mrb[0].mxu0 %v2355
    %v3663 = vpop.f32.mrb[0].mxu0
    %v3664 = vadd.f32 %v3623, %v3663
    %v3665 = vpop.f32.mrb[0].mxu0
    %v3666 = vpop.f32.mrb[0].mxu0
    %v3667 = vadd.f32 %v3626, %v3666
    %v3668 = vpop.f32.mrb[0].mxu0
    %3669 = vdwg.mxu0
    %3670 = vmatprep.subr.bf16.mxu0 0
    %3671 = vmatpush1.bf16.msra.mxu0 %v2925
    %3672 = vmatprep.subr.bf16.mxu0 0
    %3673 = vmatpush1.bf16.msra.mxu0 %v2932
    %3674 = vmatprep.subr.bf16.mxu0 0
    %3675 = vmatpush1.bf16.msra.mxu0 %v2939
    %3676 = vmatprep.subr.bf16.mxu0 0
    %3677 = vmatpush1.bf16.msra.mxu0 %v2946
    %3678 = vmatprep.subr.bf16.mxu0 0
    %3679 = vmatpush1.bf16.msra.mxu0 %v2953
    %3680 = vmatprep.subr.bf16.mxu0 0
    %3681 = vmatpush1.bf16.msra.mxu0 %v2960
    %3682 = vmatprep.subr.bf16.mxu0 0
    %3683 = vmatpush1.bf16.msra.mxu0 %v2967
    %3684 = vmatprep.subr.bf16.mxu0 0
    %3685 = vmatpush1.bf16.msra.mxu0 %v2974
    %3686 = vmatprep.subr.bf16.mxu0 0
    %3687 = vmatpush1.bf16.msra.mxu0 %v2981
    %3688 = vmatprep.subr.bf16.mxu0 0
    %3689 = vmatpush1.bf16.msra.mxu0 %v2988
    %3690 = vmatprep.subr.bf16.mxu0 0
    %3691 = vmatpush1.bf16.msra.mxu0 %v2995
    %3692 = vmatprep.subr.bf16.mxu0 0
    %3693 = vmatpush1.bf16.msra.mxu0 %v3002
    %3694 = vmatprep.subr.bf16.mxu0 0
    %3695 = vmatpush1.bf16.msra.mxu0 %v3009
    %3696 = vmatprep.subr.bf16.mxu0 0
    %3697 = vmatpush1.bf16.msra.mxu0 %v3016
    %3698 = vmatprep.subr.bf16.mxu0 0
    %3699 = vmatpush1.bf16.msra.mxu0 %v3023
    %3700 = vmatprep.subr.bf16.mxu0 0
    %3701 = vmatpush1.bf16.msra.mxu0 %v3030
    %3702 = vmatprep.mubr.bf16.mxu0 %v2358
    %3703 = vmatmul.mubr.bf16.gmra.mrb[0].mxu0 %v2357
    %v3704 = vpop.f32.mrb[0].mxu0
    %v3705 = vadd.f32 %v3664, %v3704
    %v3706 = vpop.f32.mrb[0].mxu0
    %v3707 = vpop.f32.mrb[0].mxu0
    %v3708 = vadd.f32 %v3667, %v3707
    %v3709 = vpop.f32.mrb[0].mxu0
    %3710 = vdwg.mxu0
    %v3711 = vld [vmem:[%s14] sm:$0xff]
    %v3713 = vlaneseq
    %v3714 = vshrl.u32 %v3713, 7
    %v3715 = vsub.s32 0, %v3714
    %v3716 = vrot.slane %v3711, %v3715
    %v3717 = vlaneseq
    %v3718 = vshrl.u32 %v3717, 7
    %v3719 = vsub.s32 1, %v3718
    %v3720 = vrot.slane %v3711, %v3719
    %v3721 = vlaneseq
    %v3722 = vshrl.u32 %v3721, 7
    %v3723 = vsub.s32 2, %v3722
    %v3724 = vrot.slane %v3711, %v3723
    %v3725 = vlaneseq
    %v3726 = vshrl.u32 %v3725, 7
    %v3727 = vsub.s32 3, %v3726
    %v3728 = vrot.slane %v3711, %v3727
    %v3729 = vlaneseq
    %v3730 = vshrl.u32 %v3729, 7
    %v3731 = vsub.s32 4, %v3730
    %v3732 = vrot.slane %v3711, %v3731
    %v3733 = vlaneseq
    %v3734 = vshrl.u32 %v3733, 7
    %v3735 = vsub.s32 5, %v3734
    %v3736 = vrot.slane %v3711, %v3735
    %v3737 = vlaneseq
    %v3738 = vshrl.u32 %v3737, 7
    %v3739 = vsub.s32 6, %v3738
    %v3740 = vrot.slane %v3711, %v3739
    %v3748 = vmul.f32 %v3195, %v3716
    %v3749 = vmul.f32 %v3197, %v3720
    %v3750 = vmul.f32 %v3367, %v3724
    %v3751 = vmul.f32 %v3369, %v3728
    %v3752 = vmul.f32 %v3539, %v3732
    %v3753 = vmul.f32 %v3541, %v3736
    %v3754 = vmul.f32 %v3705, %v3740
    %v3755 = vmul.f32 %v3199, %v3716
    %v3756 = vmul.f32 %v3201, %v3720
    %v3757 = vmul.f32 %v3371, %v3724
    %v3758 = vmul.f32 %v3373, %v3728
    %v3759 = vmul.f32 %v3543, %v3732
    %v3760 = vmul.f32 %v3545, %v3736
    %v3761 = vmul.f32 %v3708, %v3740
    %v3762 = vld [vmem:[%s15] sm:$0xff]
    %v3764 = vlaneseq
    %v3765 = vshrl.u32 %v3764, 7
    %v3766 = vsub.s32 0, %v3765
    %v3767 = vrot.slane %v3762, %v3766
    %v3768 = vlaneseq
    %v3769 = vshrl.u32 %v3768, 7
    %v3770 = vsub.s32 1, %v3769
    %v3771 = vrot.slane %v3762, %v3770
    %v3772 = vlaneseq
    %v3773 = vshrl.u32 %v3772, 7
    %v3774 = vsub.s32 2, %v3773
    %v3775 = vrot.slane %v3762, %v3774
    %v3776 = vlaneseq
    %v3777 = vshrl.u32 %v3776, 7
    %v3778 = vsub.s32 3, %v3777
    %v3779 = vrot.slane %v3762, %v3778
    %v3780 = vlaneseq
    %v3781 = vshrl.u32 %v3780, 7
    %v3782 = vsub.s32 4, %v3781
    %v3783 = vrot.slane %v3762, %v3782
    %v3784 = vlaneseq
    %v3785 = vshrl.u32 %v3784, 7
    %v3786 = vsub.s32 5, %v3785
    %v3787 = vrot.slane %v3762, %v3786
    %v3788 = vlaneseq
    %v3789 = vshrl.u32 %v3788, 7
    %v3790 = vsub.s32 6, %v3789
    %v3791 = vrot.slane %v3762, %v3790
    %v3799 = vadd.f32 %v3748, %v3767
    %v3800 = vadd.f32 %v3749, %v3771
    %v3801 = vadd.f32 %v3750, %v3775
    %v3802 = vadd.f32 %v3751, %v3779
    %v3803 = vadd.f32 %v3752, %v3783
    %v3804 = vadd.f32 %v3753, %v3787
    %v3805 = vadd.f32 %v3754, %v3791
    %v3806 = vadd.f32 %v3755, %v3767
    %v3807 = vadd.f32 %v3756, %v3771
    %v3808 = vadd.f32 %v3757, %v3775
    %v3809 = vadd.f32 %v3758, %v3779
    %v3810 = vadd.f32 %v3759, %v3783
    %v3811 = vadd.f32 %v3760, %v3787
    %v3812 = vadd.f32 %v3761, %v3791
    %v3813 = vtanh.pop %v3799
    %v3814 = vtanh.pop %v3800
    %v3815 = vtanh.pop %v3801
    %v3816 = vtanh.pop %v3802
    %v3817 = vtanh.pop %v3803
    %v3818 = vtanh.pop %v3804
    %v3819 = vtanh.pop %v3805
    %v3820 = vtanh.pop %v3806
    %v3821 = vtanh.pop %v3807
    %v3822 = vtanh.pop %v3808
    %v3823 = vtanh.pop %v3809
    %v3824 = vtanh.pop %v3810
    %v3825 = vtanh.pop %v3811
    %v3826 = vtanh.pop %v3812
    %v3827 = vpack.c.bf16 %v3820, %v3813
    %v3828 = vpack.c.bf16 %v3821, %v3814
    %v3829 = vpack.c.bf16 %v3822, %v3815
    %v3830 = vpack.c.bf16 %v3823, %v3816
    %v3831 = vpack.c.bf16 %v3824, %v3817
    %v3832 = vpack.c.bf16 %v3825, %v3818
    %v3833 = vpack.c.bf16 %v3826, %v3819
    %v3841 = vunpack.c.l.b16 %v3827
    %v3842 = vunpack.c.l.b16 %v3828
    %v3843 = vunpack.c.l.b16 %v3829
    %v3844 = vunpack.c.l.b16 %v3830
    %v3845 = vunpack.c.l.b16 %v3831
    %v3846 = vunpack.c.l.b16 %v3832
    %v3847 = vunpack.c.l.b16 %v3833
    %v3848 = vunpack.c.h.b16 %v3827
    %v3849 = vunpack.c.h.b16 %v3828
    %v3850 = vunpack.c.h.b16 %v3829
    %v3851 = vunpack.c.h.b16 %v3830
    %v3852 = vunpack.c.h.b16 %v3831
    %v3853 = vunpack.c.h.b16 %v3832
    %v3854 = vunpack.c.h.b16 %v3833
    %v3855 = vpack.c.b16 %v3842, %v3841
    %v3856 = vpack.c.b16 %v3844, %v3843
    %v3857 = vpack.c.b16 %v3846, %v3845
    %v3858 = vpack.c.b16 %v3847, %v3847
    %v3859 = vpack.c.b16 %v3849, %v3848
    %v3860 = vpack.c.b16 %v3851, %v3850
    %v3861 = vpack.c.b16 %v3853, %v3852
    %v3862 = vpack.c.b16 %v3854, %v3854
    %3871 = vst [vmem:[#allocation10] sm:$0xff] %v3855
    %3872 = vst [vmem:[#allocation10 + $0x8] sm:$0xff] %v3856
    %3873 = vst [vmem:[#allocation10 + $0x10] sm:$0xff] %v3857
    %3874 = vst [vmem:[#allocation10 + $0x18] sm:$0xf] %v3858
    %3875 = vst [vmem:[#allocation10 + $0x1c] sm:$0xff] %v3859
    %3876 = vst [vmem:[#allocation10 + $0x24] sm:$0xff] %v3860
    %3877 = vst [vmem:[#allocation10 + $0x2c] sm:$0xff] %v3861
    %3878 = vst [vmem:[#allocation10 + $0x34] sm:$0xf] %v3862
    // Predicated region
    $region74: #{generator_forward.1} parent=1 // pred_check
      _
    $region75: #{generator_forward.1} parent=1 // pred_check_branch
      %3880 = sbr.rel (0) target = $region77
    $region76: #{generator_forward.1} parent=1 // pred_region
      %s3882 = ssub.s32 896, 896
      %3883 = vsyncadd [#allocation7], %s3882
      %s3884 = sshll.u32 [#allocation10], 4
      %s3885 = int_to_ptr.vmem [resolvable:$true] %s3884
      %3890 = dma.vmem_to_hbm [thread:$0]  %s3885, 896, %s16, [#allocation7], 448, 448, 28
    $region77: #{generator_forward.1} parent=1 // pred_fallthru
      _
    // Predicated region
    $region78: #{generator_forward.1} parent=1 // pred_check
      _
    $region79: #{generator_forward.1} parent=1 // pred_check_branch
      %3892 = sbr.rel (0) target = $region81
    $region80: #{generator_forward.1} parent=1 // pred_region
      %3893 = dma.done [#allocation7], 896
    $region81: #{generator_forward.1} parent=1 // pred_fallthru
      _
    %3894 = vsyncpa [#allocation6], 1
    %3895 = vsyncpa [#allocation9], 1
    %3896 = vsyncpa [#allocation7], 1
  %3897 = vsyncmov [#allocation4]
  %s3898 = vpop.sfrf %3897
  %p3899 = scmp.eq.s32.totalorder %s3898, 0
  %p3900 = pneg %p3899
  %3902 = shalt.err (%p3900)
  %s3903 = scalar_lea.sflag [#allocation4], 1
  %3904 = vsyncmov %s3903
  %s3905 = vpop.sfrf %3904
  %p3906 = scmp.eq.s32.totalorder %s3905, 0
  %p3907 = pneg %p3906
  %3909 = shalt.err (%p3907)

</llo_original>
